<compile_context>
chip_gen: v7x
topology: tpu7x:2x2x1
jax: 0.10.0
libtpu: 0.0.40
codegen_flags: <defaults>
</compile_context>

<pallas_src>
import math
import jax
import jax.numpy as jnp
from jax import lax
from jax.experimental import pallas as pl
from jax.experimental.pallas import tpu as pltpu

# ---------------- configuration (matches the PyTorch module at small scale) ----------------
BATCH = 2
MAX_SENSORS = 4        # model_max_sensors
SEQ_LEN = 16           # seq_len
SENSOR_INPUT_DIM = 1
TCN_PROJ_DIM = 8       # sensor_tcn_proj_dim
TCN_OUT_DIM = 16       # sensor_tcn_out_dim
TCN_LEVELS = 2
TCN_KERNEL = 3
D_MODEL = 32           # transformer_d_model
NHEAD = 4
NLAYERS = 2
HEAD_DIM = D_MODEL // NHEAD
DFF = D_MODEL * 2      # dim_feedforward = embed_dim * 2
LN_EPS = 1e-5

N_STREAMS = BATCH * MAX_SENSORS      # 8  fused (batch, sensor) rows
NT = N_STREAMS * SEQ_LEN             # 128 stacked time rows for the TCN part
NH_ROWS = NHEAD * N_STREAMS          # 32  head-major attention rows
NEG_INF = -1e30                      # finite masking value (no NaN from exp)

# ---------------- slab layouts (all sub-blocks 8-row aligned) ----------------
# TCN slab, width = TCN_OUT_DIM (16)
T_B0C1 = 0                                       # (3*8, 16)
T_B0C2 = T_B0C1 + TCN_KERNEL * TCN_PROJ_DIM      # 24  (3*16, 16)
T_B1C1 = T_B0C2 + TCN_KERNEL * TCN_OUT_DIM       # 72
T_B1C2 = T_B1C1 + TCN_KERNEL * TCN_OUT_DIM       # 120
T_DS = T_B1C2 + TCN_KERNEL * TCN_OUT_DIM         # 168 (8, 16)
T_MISC = T_DS + TCN_PROJ_DIM                     # 176 (8, 16) misc rows
TCN_ROWS = T_MISC + 8                            # 184

# Transformer slab, width = 3*D_MODEL (96)
L_QKV = 0                                        # (32, 96)
L_WO = D_MODEL                                   # 32  (32, 32)
L_W1 = 2 * D_MODEL                               # 64  (32, 64)
L_W2 = 3 * D_MODEL                               # 96  (64, 32)
L_MISC = 3 * D_MODEL + DFF                       # 160 (8, 96) misc rows
LAYER_ROWS = L_MISC + 8                          # 168
X_PROJ = NLAYERS * LAYER_ROWS                    # 336 (16, 32) pooled->d_model proj
X_POS = X_PROJ + TCN_OUT_DIM                     # 352 (8, 32) pos_inter tiled + proj_b
X_TAIL = X_POS + N_STREAMS                       # 360 (8, 96) output norm / pred head
XF_ROWS = X_TAIL + 8                             # 368

# const slab, width = NT (128): rows 0:128 pe+input_proj_bias (cols 0:8), 128:144 pool matrix
CONST_ROWS = NT + 2 * N_STREAMS                  # 144

DYN_ROWS = NH_ROWS + N_STREAMS                   # 40: rows 0:32 attn bias, 32:40 [mask,lastval]


# ---------------- in-kernel helpers ----------------
def _layernorm(x, g, b, eps=LN_EPS):
    mu = jnp.mean(x, axis=-1, keepdims=True)
    var = jnp.mean((x - mu) ** 2, axis=-1, keepdims=True)
    return (x - mu) * lax.rsqrt(var + eps) * g + b


def _shift_down_streams(h, shift):
    # Causal time shift on the B*S stacked streams (row = stream*SEQ_LEN + t):
    # result[s*T + t] = h[s*T + t - shift] for t >= shift, 0 otherwise (no cross-stream leak).
    if shift == 0:
        return h
    rolled = pltpu.roll(h, shift=shift, axis=0)
    t_in_stream = lax.broadcasted_iota(jnp.int32, h.shape, 0) % SEQ_LEN
    return jnp.where(t_in_stream < shift, 0.0, rolled)


def _causal_conv_cat(h, w_cat, b_row, dilation):
    # Fused-tap causal conv: lane-concat the 3 shifted copies -> one (NT, 3*Cin)@(3*Cin, Cout).
    parts = [_shift_down_streams(h, (TCN_KERNEL - 1 - j) * dilation)
             for j in range(TCN_KERNEL)]
    h_cat = jnp.concatenate(parts, axis=-1)
    return jnp.dot(h_cat, w_cat, preferred_element_type=jnp.float32) + b_row


# ---------------- the single fused forward kernel ----------------
def fused_forward_kernel(x_ref, dyn_ref, const_ref, tcn_ref, xf_ref, out_ref):
    # ---- small dynamic block: attention bias + per-stream mask / last value ----
    bias32 = dyn_ref[0:NH_ROWS, :]                                   # (32, 32)
    msl = dyn_ref[NH_ROWS:NH_ROWS + N_STREAMS, 0:2]                  # (8, 2)
    m = msl[:, 0:1]                                                  # (8, 1) sensor validity
    lastval = msl[:, 1:2]                                            # (8, 1)

    # ---- TCN weights (static slices of the packed slab) ----
    w_b0c1 = tcn_ref[T_B0C1:T_B0C1 + TCN_KERNEL * TCN_PROJ_DIM, :]
    w_b0c2 = tcn_ref[T_B0C2:T_B0C2 + TCN_KERNEL * TCN_OUT_DIM, :]
    w_b1c1 = tcn_ref[T_B1C1:T_B1C1 + TCN_KERNEL * TCN_OUT_DIM, :]
    w_b1c2 = tcn_ref[T_B1C2:T_B1C2 + TCN_KERNEL * TCN_OUT_DIM, :]
    w_ds = tcn_ref[T_DS:T_DS + TCN_PROJ_DIM, :]
    tmisc = tcn_ref[T_MISC:T_MISC + 8, :]                            # one aligned (8,16) load
    b_b0c1, b_b0c2 = tmisc[0:1, :], tmisc[1:2, :]
    b_b1c1, b_b1c2 = tmisc[2:3, :], tmisc[3:4, :]
    b_ds = tmisc[4:5, :]
    lng, lnb = tmisc[5:6, :], tmisc[6:7, :]
    wp = tmisc[7:8, 0:TCN_PROJ_DIM]                                  # (1, 8) input_proj weight

    pe_bp = const_ref[0:NT, 0:TCN_PROJ_DIM]                          # (128, 8) PE + input_proj bias
    pool = const_ref[NT:NT + 2 * N_STREAMS, :]                       # (16, 128) mean/last selector

    # ---- PerSensorEncoderTCN over all B*S encoder rows at once ----
    h = x_ref[...] * wp + pe_bp                                      # (128, 8)

    # TemporalBlock 0: dilation 1, 1x1-conv downsample residual
    out = jnp.maximum(_causal_conv_cat(h, w_b0c1, b_b0c1, 1), 0.0)
    out = jnp.maximum(_causal_conv_cat(out, w_b0c2, b_b0c2, 1), 0.0)
    res = jnp.dot(h, w_ds, preferred_element_type=jnp.float32) + b_ds
    h = jnp.maximum(out + res, 0.0)

    # TemporalBlock 1: dilation 2, identity residual
    out = jnp.maximum(_causal_conv_cat(h, w_b1c1, b_b1c1, 2), 0.0)
    out = jnp.maximum(_causal_conv_cat(out, w_b1c2, b_b1c2, 2), 0.0)
    h = jnp.maximum(out + h, 0.0)

    h = _layernorm(h, lng, lnb)                                      # final_norm, (128, 16)

    # temporal mean pooling + last-step extraction: one (16,128)@(128,16) selection matmul
    pl16 = jnp.dot(pool, h, preferred_element_type=jnp.float32)      # (16, 16)
    pooled = pl16[0:N_STREAMS, :] * m                                # (8, 16)
    tcn_last = pl16[N_STREAMS:2 * N_STREAMS, :] * m                  # (8, 16)

    # ---- pooled -> d_model projection (+ proj bias + inter-sensor pos, pre-folded) ----
    proj_w = xf_ref[X_PROJ:X_PROJ + TCN_OUT_DIM, 0:D_MODEL]          # (16, 32)
    pos_c = xf_ref[X_POS:X_POS + N_STREAMS, 0:D_MODEL]               # (8, 32)
    z = jnp.dot(pooled, proj_w, preferred_element_type=jnp.float32) + pos_c

    # ---- InterSensorTransformer: NLAYERS pre-norm encoder layers (unrolled) ----
    for l in range(NLAYERS):
        base = l * LAYER_ROWS
        qkv_w = xf_ref[base + L_QKV:base + L_QKV + D_MODEL, :]       # (32, 96), q cols pre-scaled
        wo = xf_ref[base + L_WO:base + L_WO + D_MODEL, 0:D_MODEL]    # (32, 32)
        w1 = xf_ref[base + L_W1:base + L_W1 + D_MODEL, 0:DFF]        # (32, 64)
        w2 = xf_ref[base + L_W2:base + L_W2 + DFF, 0:D_MODEL]        # (64, 32)
        lmisc = xf_ref[base + L_MISC:base + L_MISC + 8, :]           # (8, 96)
        qkv_b = lmisc[0:1, :]
        bo = lmisc[1:2, 0:D_MODEL]
        b1 = lmisc[2:3, 0:DFF]
        b2 = lmisc[3:4, 0:D_MODEL]
        ln1g, ln1b = lmisc[4:5, 0:D_MODEL], lmisc[5:6, 0:D_MODEL]
        ln2g, ln2b = lmisc[6:7, 0:D_MODEL], lmisc[7:8, 0:D_MODEL]

        # fused QKV projection
        hn = _layernorm(z, ln1g, ln1b)
        qkv = jnp.dot(hn, qkv_w, preferred_element_type=jnp.float32) + qkv_b   # (8, 96)

        # head-major stacking: rows = head*N_STREAMS + token (sublane concat, no reshape)
        def head_major(col0):
            return jnp.concatenate(
                [qkv[:, col0 + hh * HEAD_DIM:col0 + (hh + 1) * HEAD_DIM]
                 for hh in range(NHEAD)], axis=0)                    # (32, 8)

        qh = head_major(0)
        kh = head_major(D_MODEL)
        vh = head_major(2 * D_MODEL)

        # fused block-diagonal attention: one scores matmul, one softmax, one ctx matmul
        scores = lax.dot_general(qh, kh, (((1,), (1,)), ((), ())),
                                 preferred_element_type=jnp.float32) + bias32  # (32, 32)
        smax = jnp.max(scores, axis=-1, keepdims=True)
        e = jnp.exp(scores - smax)
        attn = e * pl.reciprocal(jnp.sum(e, axis=-1, keepdims=True), approx=True)
        ctx = jnp.dot(attn, vh, preferred_element_type=jnp.float32)             # (32, 8)
        ctx_tok = jnp.concatenate(
            [ctx[hh * N_STREAMS:(hh + 1) * N_STREAMS, :] for hh in range(NHEAD)],
            axis=1)                                                             # (8, 32)
        z = z + jnp.dot(ctx_tok, wo, preferred_element_type=jnp.float32) + bo

        # feed-forward
        hn2 = _layernorm(z, ln2g, ln2b)
        ff = jnp.maximum(jnp.dot(hn2, w1, preferred_element_type=jnp.float32) + b1, 0.0)
        z = z + jnp.dot(ff, w2, preferred_element_type=jnp.float32) + b2

    # ---- output_norm + masking + pred_head (split concat halves) + delta reconstruction ----
    tail = xf_ref[X_TAIL:X_TAIL + 8, :]                              # (8, 96)
    out_ln_g = tail[0:1, 0:D_MODEL]
    out_ln_b = tail[1:2, 0:D_MODEL]
    w_ctx = tail[2:3, 0:D_MODEL]                                     # pred_head ctx half (row)
    w_tcn = tail[3:4, 0:TCN_OUT_DIM]                                 # pred_head tcn half (row)
    head_b = tail[4:5, 0:1]                                          # (1, 1)

    c = _layernorm(z, out_ln_g, out_ln_b) * m
    delta = (jnp.sum(tcn_last * w_tcn, axis=-1, keepdims=True)
             + jnp.sum(c * w_ctx, axis=-1, keepdims=True) + head_b)  # (8, 1)
    final = (lastval + delta) * m                                    # (8, 1)

    # lane-dense store: unmasked (8,128) vst; wrapper slices column 0
    out_ref[...] = jnp.broadcast_to(final, (N_STREAMS, 128))


# ---------------- pallas_call wrapper ----------------
def _fspec(a):
    return pl.BlockSpec(a.shape, lambda i, nd=a.ndim: (0,) * nd)


def run_fused_forward(prepared, x_col, dyn):
    inputs = [x_col, dyn, prepared["const"], prepared["tcn"], prepared["xf"]]
    return pl.pallas_call(
        fused_forward_kernel,
        grid=(1,),
        in_specs=[_fspec(a) for a in inputs],
        out_specs=pl.BlockSpec((N_STREAMS, 128), lambda i: (0, 0)),
        out_shape=jax.ShapeDtypeStruct((N_STREAMS, 128), jnp.float32),
        compiler_params=pltpu.CompilerParams(dimension_semantics=("arbitrary",)),
    )(*inputs)


# ---------------- parameters (deterministic, synthetic) ----------------
def positional_encoding(max_len, d_model):
    position = jnp.arange(max_len, dtype=jnp.float32)[:, None]
    div_term = jnp.exp(jnp.arange(0, d_model, 2, dtype=jnp.float32)
                       * (-math.log(10000.0) / d_model))
    pe = jnp.zeros((max_len, d_model), jnp.float32)
    pe = pe.at[:, 0::2].set(jnp.sin(position * div_term))
    pe = pe.at[:, 1::2].set(jnp.cos(position * div_term))
    return pe


def init_params(key):
    ks = iter(jax.random.split(key, 64))

    def nrm(shape, scale=0.1):
        return (scale * jax.random.normal(next(ks), shape)).astype(jnp.float32)

    p = {}
    p["tcn_wp"] = nrm((1, TCN_PROJ_DIM))            # Linear(1, P) stored transposed
    p["tcn_bp"] = nrm((1, TCN_PROJ_DIM))
    p["pe"] = positional_encoding(SEQ_LEN, TCN_PROJ_DIM)
    p["b0_c1w"] = nrm((TCN_KERNEL, TCN_PROJ_DIM, TCN_OUT_DIM))   # conv stored (k, Cin, Cout)
    p["b0_c1b"] = nrm((1, TCN_OUT_DIM))
    p["b0_c2w"] = nrm((TCN_KERNEL, TCN_OUT_DIM, TCN_OUT_DIM))
    p["b0_c2b"] = nrm((1, TCN_OUT_DIM))
    p["b0_dsw"] = nrm((TCN_PROJ_DIM, TCN_OUT_DIM))               # 1x1 downsample (Cin, Cout)
    p["b0_dsb"] = nrm((1, TCN_OUT_DIM))
    p["b1_c1w"] = nrm((TCN_KERNEL, TCN_OUT_DIM, TCN_OUT_DIM))
    p["b1_c1b"] = nrm((1, TCN_OUT_DIM))
    p["b1_c2w"] = nrm((TCN_KERNEL, TCN_OUT_DIM, TCN_OUT_DIM))
    p["b1_c2b"] = nrm((1, TCN_OUT_DIM))
    p["tcn_ln_g"] = jnp.ones((1, TCN_OUT_DIM), jnp.float32)
    p["tcn_ln_b"] = jnp.zeros((1, TCN_OUT_DIM), jnp.float32)
    p["proj_w"] = nrm((TCN_OUT_DIM, D_MODEL))
    p["proj_b"] = nrm((1, D_MODEL))
    p["pos_inter"] = nrm((MAX_SENSORS, D_MODEL), 0.02)
    p["layers"] = []
    for _ in range(NLAYERS):
        p["layers"].append({
            "ln1_g": jnp.ones((1, D_MODEL), jnp.float32),
            "ln1_b": jnp.zeros((1, D_MODEL), jnp.float32),
            "wq": nrm((D_MODEL, D_MODEL)), "bq": nrm((1, D_MODEL)),
            "wk": nrm((D_MODEL, D_MODEL)), "bk": nrm((1, D_MODEL)),
            "wv": nrm((D_MODEL, D_MODEL)), "bv": nrm((1, D_MODEL)),
            "wo": nrm((D_MODEL, D_MODEL)), "bo": nrm((1, D_MODEL)),
            "ln2_g": jnp.ones((1, D_MODEL), jnp.float32),
            "ln2_b": jnp.zeros((1, D_MODEL), jnp.float32),
            "w1": nrm((D_MODEL, DFF)), "b1": nrm((1, DFF)),
            "w2": nrm((DFF, D_MODEL)), "b2": nrm((1, D_MODEL)),
        })
    p["out_ln_g"] = jnp.ones((1, D_MODEL), jnp.float32)
    p["out_ln_b"] = jnp.zeros((1, D_MODEL), jnp.float32)
    p["head_w_tcn"] = nrm((TCN_OUT_DIM, 1))
    p["head_w_ctx"] = nrm((D_MODEL, 1))
    p["head_b"] = nrm((1, 1))
    return p


# ---------------- one-time packing: slabs + static constants (hoisted out of forward) ----------
def prepare_params(p):
    f32 = jnp.float32
    scale = 1.0 / math.sqrt(HEAD_DIM)

    # const slab: sinusoidal PE (+ input_proj bias) pre-tiled per stream, and pooling matrix
    pe_bp = jnp.tile(p["pe"], (N_STREAMS, 1)) + p["tcn_bp"]                  # (128, 8)
    eye_s = jnp.eye(N_STREAMS, dtype=f32)
    mean_row = jnp.full((1, SEQ_LEN), 1.0 / SEQ_LEN, f32)
    last_row = jnp.zeros((1, SEQ_LEN), f32).at[0, SEQ_LEN - 1].set(1.0)
    pool_mat = jnp.concatenate([jnp.kron(eye_s, mean_row),
                                jnp.kron(eye_s, last_row)], axis=0)          # (16, 128)
    const_slab = jnp.zeros((CONST_ROWS, NT), f32)
    const_slab = const_slab.at[0:NT, 0:TCN_PROJ_DIM].set(pe_bp)
    const_slab = const_slab.at[NT:NT + 2 * N_STREAMS, :].set(pool_mat)

    # TCN slab (fused-tap conv weights: (k, Cin, Cout) -> (k*Cin, Cout))
    def cat3(w):
        return w.reshape(-1, w.shape[-1])

    tcn = jnp.zeros((TCN_ROWS, TCN_OUT_DIM), f32)
    tcn = tcn.at[T_B0C1:T_B0C1 + TCN_KERNEL * TCN_PROJ_DIM, :].set(cat3(p["b0_c1w"]))
    tcn = tcn.at[T_B0C2:T_B0C2 + TCN_KERNEL * TCN_OUT_DIM, :].set(cat3(p["b0_c2w"]))
    tcn = tcn.at[T_B1C1:T_B1C1 + TCN_KERNEL * TCN_OUT_DIM, :].set(cat3(p["b1_c1w"]))
    tcn = tcn.at[T_B1C2:T_B1C2 + TCN_KERNEL * TCN_OUT_DIM, :].set(cat3(p["b1_c2w"]))
    tcn = tcn.at[T_DS:T_DS + TCN_PROJ_DIM, :].set(p["b0_dsw"])
    tmisc = jnp.zeros((8, TCN_OUT_DIM), f32)
    tmisc = tmisc.at[0:1, :].set(p["b0_c1b"])
    tmisc = tmisc.at[1:2, :].set(p["b0_c2b"])
    tmisc = tmisc.at[2:3, :].set(p["b1_c1b"])
    tmisc = tmisc.at[3:4, :].set(p["b1_c2b"])
    tmisc = tmisc.at[4:5, :].set(p["b0_dsb"])
    tmisc = tmisc.at[5:6, :].set(p["tcn_ln_g"])
    tmisc = tmisc.at[6:7, :].set(p["tcn_ln_b"])
    tmisc = tmisc.at[7:8, 0:TCN_PROJ_DIM].set(p["tcn_wp"])
    tcn = tcn.at[T_MISC:T_MISC + 8, :].set(tmisc)

    # transformer slab: fused QKV (q-scale folded in), per-layer blocks, proj / pos / head tail
    xf = jnp.zeros((XF_ROWS, 3 * D_MODEL), f32)
    for l, lp in enumerate(p["layers"]):
        base = l * LAYER_ROWS
        qkv_w = jnp.concatenate([lp["wq"] * scale, lp["wk"], lp["wv"]], axis=1)  # (32, 96)
        qkv_b = jnp.concatenate([lp["bq"] * scale, lp["bk"], lp["bv"]], axis=1)  # (1, 96)
        xf = xf.at[base + L_QKV:base + L_QKV + D_MODEL, :].set(qkv_w)
        xf = xf.at[base + L_WO:base + L_WO + D_MODEL, 0:D_MODEL].set(lp["wo"])
        xf = xf.at[base + L_W1:base + L_W1 + D_MODEL, 0:DFF].set(lp["w1"])
        xf = xf.at[base + L_W2:base + L_W2 + DFF, 0:D_MODEL].set(lp["w2"])
        lm = jnp.zeros((8, 3 * D_MODEL), f32)
        lm = lm.at[0:1, :].set(qkv_b)
        lm = lm.at[1:2, 0:D_MODEL].set(lp["bo"])
        lm = lm.at[2:3, 0:DFF].set(lp["b1"])
        lm = lm.at[3:4, 0:D_MODEL].set(lp["b2"])
        lm = lm.at[4:5, 0:D_MODEL].set(lp["ln1_g"])
        lm = lm.at[5:6, 0:D_MODEL].set(lp["ln1_b"])
        lm = lm.at[6:7, 0:D_MODEL].set(lp["ln2_g"])
        lm = lm.at[7:8, 0:D_MODEL].set(lp["ln2_b"])
        xf = xf.at[base + L_MISC:base + L_MISC + 8, :].set(lm)
    xf = xf.at[X_PROJ:X_PROJ + TCN_OUT_DIM, 0:D_MODEL].set(p["proj_w"])
    pos_c = jnp.tile(p["pos_inter"], (BATCH, 1)) + p["proj_b"]                   # (8, 32)
    xf = xf.at[X_POS:X_POS + N_STREAMS, 0:D_MODEL].set(pos_c)
    tail = jnp.zeros((8, 3 * D_MODEL), f32)
    tail = tail.at[0:1, 0:D_MODEL].set(p["out_ln_g"])
    tail = tail.at[1:2, 0:D_MODEL].set(p["out_ln_b"])
    tail = tail.at[2:3, 0:D_MODEL].set(p["head_w_ctx"].T)
    tail = tail.at[3:4, 0:TCN_OUT_DIM].set(p["head_w_tcn"].T)
    tail = tail.at[4:5, 0:1].set(p["head_b"])
    xf = xf.at[X_TAIL:X_TAIL + 8, :].set(tail)

    # static attention validity: same head block AND same batch (key padding added per call)
    r = jnp.arange(NH_ROWS)
    h_of = r // N_STREAMS
    n_of = r % N_STREAMS
    same_head = h_of[:, None] == h_of[None, :]
    same_batch = (n_of[:, None] // MAX_SENSORS) == (n_of[None, :] // MAX_SENSORS)
    attn_ok = same_head & same_batch                                             # (32, 32) bool

    return {"const": const_slab, "tcn": tcn, "xf": xf, "attn_ok": attn_ok}


# ---------------- full forward (tiny per-call glue, all compute in ONE Pallas kernel) ----------
@jax.jit
def forward(prepared, x, sensor_mask):
    B, T, S = x.shape
    xm = jnp.transpose(x, (0, 2, 1)) * sensor_mask[:, :, None]       # (B, S, T), masked
    lastval_col = xm[:, :, -1].reshape(B * S, 1)                     # last_val_for_delta_recon
    # Faithful to the PyTorch reference: (B, T, S) reshaped row-major to (B*S, T, 1).
    x_col = jnp.transpose(xm, (0, 2, 1)).reshape(B * S * T, SENSOR_INPUT_DIM)
    mask_col = sensor_mask.reshape(B * S, 1)

    # per-call, mask-dependent (32,32) attention bias (head-block/batch part is static)
    key_ok = jnp.tile(sensor_mask.reshape(-1) > 0.5, NHEAD)[None, :]            # (1, 32)
    bias32 = jnp.where(prepared["attn_ok"] & key_ok, 0.0, NEG_INF).astype(jnp.float32)
    sm = jnp.concatenate([mask_col, lastval_col], axis=1)                       # (8, 2)
    dyn = jnp.concatenate(
        [bias32, jnp.pad(sm, ((0, 0), (0, NH_ROWS - 2)))], axis=0)              # (40, 32)

    out = run_fused_forward(prepared, x_col, dyn)                               # (8, 128)
    return out[:, 0:1].reshape(B, S, 1)


if __name__ == "__main__":
    key = jax.random.PRNGKey(0)
    k_x, k_p = jax.random.split(key)
    params = init_params(k_p)
    prepared = prepare_params(params)

    x = jax.random.normal(k_x, (BATCH, SEQ_LEN, MAX_SENSORS), dtype=jnp.float32)
    sensor_mask = jnp.array([[1.0, 1.0, 1.0, 0.0],
                             [1.0, 1.0, 0.0, 0.0]], dtype=jnp.float32)

    out = forward(prepared, x, sensor_mask)
    out = jax.block_until_ready(out)
    assert out.shape == (BATCH, MAX_SENSORS, 1)
    assert bool(jnp.all(jnp.isfinite(out)))
    print("KERNEL_OK")
</pallas_src>

<mosaic_0001>
module attributes {stable_mosaic.version = 11 : i64} {
  func.func @fused_forward_kernel(%arg0: i32, %arg1: memref<128x1xf32, #tpu.memory_space<vmem>>, %arg2: memref<40x32xf32, #tpu.memory_space<vmem>>, %arg3: memref<144x128xf32, #tpu.memory_space<vmem>>, %arg4: memref<184x16xf32, #tpu.memory_space<vmem>>, %arg5: memref<368x96xf32, #tpu.memory_space<vmem>>, %arg6: memref<8x128xf32, #tpu.memory_space<vmem>>) attributes {dimension_semantics = [#tpu.dimension_semantics<arbitrary>], iteration_bounds = array<i64: 1>, scalar_prefetch = 0 : i64, scratch_operands = 0 : i64, tpu.core_type = #tpu.core_type<tc>, window_params = [{pipeline_mode = #tpu.pipeline_mode<synchronous>, transform_indices = @transform_0, window_bounds = array<i64: 128, 1>}, {pipeline_mode = #tpu.pipeline_mode<synchronous>, transform_indices = @transform_1, window_bounds = array<i64: 40, 32>}, {pipeline_mode = #tpu.pipeline_mode<synchronous>, transform_indices = @transform_2, window_bounds = array<i64: 144, 128>}, {pipeline_mode = #tpu.pipeline_mode<synchronous>, transform_indices = @transform_3, window_bounds = array<i64: 184, 16>}, {pipeline_mode = #tpu.pipeline_mode<synchronous>, transform_indices = @transform_4, window_bounds = array<i64: 368, 96>}, {pipeline_mode = #tpu.pipeline_mode<synchronous>, transform_indices = @transform_5, window_bounds = array<i64: 8, 128>}]} {
    %c0 = arith.constant 0 : index
    %c0_0 = arith.constant 0 : index
    %0 = vector.load %arg2[%c0, %c0_0] : memref<40x32xf32, #tpu.memory_space<vmem>>, vector<32x32xf32>
    %c32 = arith.constant 32 : index
    %c0_1 = arith.constant 0 : index
    %1 = vector.load %arg2[%c32, %c0_1] : memref<40x32xf32, #tpu.memory_space<vmem>>, vector<8x2xf32>
    %2 = vector.extract_strided_slice %1 {offsets = [0, 0], sizes = [8, 1], strides = [1, 1]} : vector<8x2xf32> to vector<8x1xf32>
    %3 = vector.extract_strided_slice %1 {offsets = [0, 1], sizes = [8, 1], strides = [1, 1]} : vector<8x2xf32> to vector<8x1xf32>
    %c0_2 = arith.constant 0 : index
    %c0_3 = arith.constant 0 : index
    %4 = vector.load %arg4[%c0_2, %c0_3] : memref<184x16xf32, #tpu.memory_space<vmem>>, vector<24x16xf32>
    %c24 = arith.constant 24 : index
    %c0_4 = arith.constant 0 : index
    %5 = vector.load %arg4[%c24, %c0_4] : memref<184x16xf32, #tpu.memory_space<vmem>>, vector<48x16xf32>
    %c72 = arith.constant 72 : index
    %c0_5 = arith.constant 0 : index
    %6 = vector.load %arg4[%c72, %c0_5] : memref<184x16xf32, #tpu.memory_space<vmem>>, vector<48x16xf32>
    %c120 = arith.constant 120 : index
    %c0_6 = arith.constant 0 : index
    %7 = vector.load %arg4[%c120, %c0_6] : memref<184x16xf32, #tpu.memory_space<vmem>>, vector<48x16xf32>
    %c168 = arith.constant 168 : index
    %c0_7 = arith.constant 0 : index
    %8 = vector.load %arg4[%c168, %c0_7] : memref<184x16xf32, #tpu.memory_space<vmem>>, vector<8x16xf32>
    %c176 = arith.constant 176 : index
    %c0_8 = arith.constant 0 : index
    %9 = vector.load %arg4[%c176, %c0_8] : memref<184x16xf32, #tpu.memory_space<vmem>>, vector<8x16xf32>
    %10 = vector.extract_strided_slice %9 {offsets = [0, 0], sizes = [1, 16], strides = [1, 1]} : vector<8x16xf32> to vector<1x16xf32>
    %11 = vector.extract_strided_slice %9 {offsets = [1, 0], sizes = [1, 16], strides = [1, 1]} : vector<8x16xf32> to vector<1x16xf32>
    %12 = vector.extract_strided_slice %9 {offsets = [2, 0], sizes = [1, 16], strides = [1, 1]} : vector<8x16xf32> to vector<1x16xf32>
    %13 = vector.extract_strided_slice %9 {offsets = [3, 0], sizes = [1, 16], strides = [1, 1]} : vector<8x16xf32> to vector<1x16xf32>
    %14 = vector.extract_strided_slice %9 {offsets = [4, 0], sizes = [1, 16], strides = [1, 1]} : vector<8x16xf32> to vector<1x16xf32>
    %15 = vector.extract_strided_slice %9 {offsets = [5, 0], sizes = [1, 16], strides = [1, 1]} : vector<8x16xf32> to vector<1x16xf32>
    %16 = vector.extract_strided_slice %9 {offsets = [6, 0], sizes = [1, 16], strides = [1, 1]} : vector<8x16xf32> to vector<1x16xf32>
    %17 = vector.extract_strided_slice %9 {offsets = [7, 0], sizes = [1, 8], strides = [1, 1]} : vector<8x16xf32> to vector<1x8xf32>
    %c0_9 = arith.constant 0 : index
    %c0_10 = arith.constant 0 : index
    %18 = vector.load %arg3[%c0_9, %c0_10] : memref<144x128xf32, #tpu.memory_space<vmem>>, vector<128x8xf32>
    %c128 = arith.constant 128 : index
    %c0_11 = arith.constant 0 : index
    %19 = vector.load %arg3[%c128, %c0_11] : memref<144x128xf32, #tpu.memory_space<vmem>>, vector<16x128xf32>
    %c0_12 = arith.constant 0 : index
    %c0_13 = arith.constant 0 : index
    %20 = vector.load %arg1[%c0_12, %c0_13] : memref<128x1xf32, #tpu.memory_space<vmem>>, vector<128x1xf32>
    %21 = vector.broadcast %20 : vector<128x1xf32> to vector<128x8xf32>
    %22 = vector.broadcast %17 : vector<1x8xf32> to vector<128x8xf32>
    %23 = arith.mulf %21, %22 : vector<128x8xf32>
    %24 = arith.addf %23, %18 : vector<128x8xf32>
    %c2_i32 = arith.constant 2 : i32
    %25 = tpu.dynamic_rotate %24 by %c2_i32 dim 0 : vector<128x8xf32>, i32 -> vector<128x8xf32>
    %26 = tpu.iota {dimensions = array<i32: 0>} : vector<128x8xi32>
    %c16_i32 = arith.constant 16 : i32
    %c0_i32 = arith.constant 0 : i32
    %27 = arith.cmpi eq, %c16_i32, %c0_i32 : i32
    %c1_i32 = arith.constant 1 : i32
    %28 = arith.select %27, %c1_i32, %c16_i32 : i32
    %29 = vector.broadcast %28 : i32 to vector<128x8xi32>
    %30 = arith.remsi %26, %29 : vector<128x8xi32>
    %c0_i32_14 = arith.constant 0 : i32
    %31 = vector.broadcast %c0_i32_14 : i32 to vector<128x8xi32>
    %32 = arith.cmpi ne, %30, %31 : vector<128x8xi32>
    %c0_i32_15 = arith.constant 0 : i32
    %33 = vector.broadcast %c0_i32_15 : i32 to vector<128x8xi32>
    %34 = arith.cmpi slt, %30, %33 : vector<128x8xi32>
    %c0_i32_16 = arith.constant 0 : i32
    %35 = arith.cmpi slt, %28, %c0_i32_16 : i32
    %36 = vector.broadcast %35 : i1 to vector<128x8xi1>
    %37 = vector.broadcast %36 : vector<128x8xi1> to vector<128x8xi1>
    %38 = arith.xori %34, %37 : vector<128x8xi1>
    %39 = arith.andi %38, %32 : vector<128x8xi1>
    %40 = vector.broadcast %28 : i32 to vector<128x8xi32>
    %41 = arith.addi %30, %40 : vector<128x8xi32>
    %42 = arith.select %39, %41, %30 : vector<128x8xi1>, vector<128x8xi32>
    %c2_i32_17 = arith.constant 2 : i32
    %43 = vector.broadcast %c2_i32_17 : i32 to vector<128x8xi32>
    %44 = arith.cmpi slt, %42, %43 : vector<128x8xi32>
    %cst = arith.constant 0.000000e+00 : f32
    %45 = vector.broadcast %cst : f32 to vector<128x8xf32>
    %46 = arith.select %44, %45, %25 : vector<128x8xi1>, vector<128x8xf32>
    %c1_i32_18 = arith.constant 1 : i32
    %47 = tpu.dynamic_rotate %24 by %c1_i32_18 dim 0 : vector<128x8xf32>, i32 -> vector<128x8xf32>
    %48 = tpu.iota {dimensions = array<i32: 0>} : vector<128x8xi32>
    %c16_i32_19 = arith.constant 16 : i32
    %c0_i32_20 = arith.constant 0 : i32
    %49 = arith.cmpi eq, %c16_i32_19, %c0_i32_20 : i32
    %c1_i32_21 = arith.constant 1 : i32
    %50 = arith.select %49, %c1_i32_21, %c16_i32_19 : i32
    %51 = vector.broadcast %50 : i32 to vector<128x8xi32>
    %52 = arith.remsi %48, %51 : vector<128x8xi32>
    %c0_i32_22 = arith.constant 0 : i32
    %53 = vector.broadcast %c0_i32_22 : i32 to vector<128x8xi32>
    %54 = arith.cmpi ne, %52, %53 : vector<128x8xi32>
    %c0_i32_23 = arith.constant 0 : i32
    %55 = vector.broadcast %c0_i32_23 : i32 to vector<128x8xi32>
    %56 = arith.cmpi slt, %52, %55 : vector<128x8xi32>
    %c0_i32_24 = arith.constant 0 : i32
    %57 = arith.cmpi slt, %50, %c0_i32_24 : i32
    %58 = vector.broadcast %57 : i1 to vector<128x8xi1>
    %59 = vector.broadcast %58 : vector<128x8xi1> to vector<128x8xi1>
    %60 = arith.xori %56, %59 : vector<128x8xi1>
    %61 = arith.andi %60, %54 : vector<128x8xi1>
    %62 = vector.broadcast %50 : i32 to vector<128x8xi32>
    %63 = arith.addi %52, %62 : vector<128x8xi32>
    %64 = arith.select %61, %63, %52 : vector<128x8xi1>, vector<128x8xi32>
    %c1_i32_25 = arith.constant 1 : i32
    %65 = vector.broadcast %c1_i32_25 : i32 to vector<128x8xi32>
    %66 = arith.cmpi slt, %64, %65 : vector<128x8xi32>
    %cst_26 = arith.constant 0.000000e+00 : f32
    %67 = vector.broadcast %cst_26 : f32 to vector<128x8xf32>
    %68 = arith.select %66, %67, %47 : vector<128x8xi1>, vector<128x8xf32>
    %69 = tpu.concatenate %46, %68, %24 in 1 : vector<128x8xf32>, vector<128x8xf32>, vector<128x8xf32> -> vector<128x24xf32>
    %cst_27 = arith.constant dense<0.000000e+00> : vector<128x16xf32>
    %70 = tpu.matmul %69, %4, %cst_27 {dimension_numbers = #tpu.dot_dimension_numbers<[1], [0], [0], [1], [0, 0, 1, 1], [], []>} : vector<128x24xf32>, vector<24x16xf32>, vector<128x16xf32> -> vector<128x16xf32>
    %71 = vector.broadcast %10 : vector<1x16xf32> to vector<128x16xf32>
    %72 = arith.addf %70, %71 : vector<128x16xf32>
    %cst_28 = arith.constant 0.000000e+00 : f32
    %73 = vector.broadcast %cst_28 : f32 to vector<128x16xf32>
    %74 = arith.maximumf %72, %73 : vector<128x16xf32>
    %c2_i32_29 = arith.constant 2 : i32
    %75 = tpu.dynamic_rotate %74 by %c2_i32_29 dim 0 : vector<128x16xf32>, i32 -> vector<128x16xf32>
    %76 = tpu.iota {dimensions = array<i32: 0>} : vector<128x16xi32>
    %c16_i32_30 = arith.constant 16 : i32
    %c0_i32_31 = arith.constant 0 : i32
    %77 = arith.cmpi eq, %c16_i32_30, %c0_i32_31 : i32
    %c1_i32_32 = arith.constant 1 : i32
    %78 = arith.select %77, %c1_i32_32, %c16_i32_30 : i32
    %79 = vector.broadcast %78 : i32 to vector<128x16xi32>
    %80 = arith.remsi %76, %79 : vector<128x16xi32>
    %c0_i32_33 = arith.constant 0 : i32
    %81 = vector.broadcast %c0_i32_33 : i32 to vector<128x16xi32>
    %82 = arith.cmpi ne, %80, %81 : vector<128x16xi32>
    %c0_i32_34 = arith.constant 0 : i32
    %83 = vector.broadcast %c0_i32_34 : i32 to vector<128x16xi32>
    %84 = arith.cmpi slt, %80, %83 : vector<128x16xi32>
    %c0_i32_35 = arith.constant 0 : i32
    %85 = arith.cmpi slt, %78, %c0_i32_35 : i32
    %86 = vector.broadcast %85 : i1 to vector<128x16xi1>
    %87 = vector.broadcast %86 : vector<128x16xi1> to vector<128x16xi1>
    %88 = arith.xori %84, %87 : vector<128x16xi1>
    %89 = arith.andi %88, %82 : vector<128x16xi1>
    %90 = vector.broadcast %78 : i32 to vector<128x16xi32>
    %91 = arith.addi %80, %90 : vector<128x16xi32>
    %92 = arith.select %89, %91, %80 : vector<128x16xi1>, vector<128x16xi32>
    %c2_i32_36 = arith.constant 2 : i32
    %93 = vector.broadcast %c2_i32_36 : i32 to vector<128x16xi32>
    %94 = arith.cmpi slt, %92, %93 : vector<128x16xi32>
    %cst_37 = arith.constant 0.000000e+00 : f32
    %95 = vector.broadcast %cst_37 : f32 to vector<128x16xf32>
    %96 = arith.select %94, %95, %75 : vector<128x16xi1>, vector<128x16xf32>
    %c1_i32_38 = arith.constant 1 : i32
    %97 = tpu.dynamic_rotate %74 by %c1_i32_38 dim 0 : vector<128x16xf32>, i32 -> vector<128x16xf32>
    %98 = tpu.iota {dimensions = array<i32: 0>} : vector<128x16xi32>
    %c16_i32_39 = arith.constant 16 : i32
    %c0_i32_40 = arith.constant 0 : i32
    %99 = arith.cmpi eq, %c16_i32_39, %c0_i32_40 : i32
    %c1_i32_41 = arith.constant 1 : i32
    %100 = arith.select %99, %c1_i32_41, %c16_i32_39 : i32
    %101 = vector.broadcast %100 : i32 to vector<128x16xi32>
    %102 = arith.remsi %98, %101 : vector<128x16xi32>
    %c0_i32_42 = arith.constant 0 : i32
    %103 = vector.broadcast %c0_i32_42 : i32 to vector<128x16xi32>
    %104 = arith.cmpi ne, %102, %103 : vector<128x16xi32>
    %c0_i32_43 = arith.constant 0 : i32
    %105 = vector.broadcast %c0_i32_43 : i32 to vector<128x16xi32>
    %106 = arith.cmpi slt, %102, %105 : vector<128x16xi32>
    %c0_i32_44 = arith.constant 0 : i32
    %107 = arith.cmpi slt, %100, %c0_i32_44 : i32
    %108 = vector.broadcast %107 : i1 to vector<128x16xi1>
    %109 = vector.broadcast %108 : vector<128x16xi1> to vector<128x16xi1>
    %110 = arith.xori %106, %109 : vector<128x16xi1>
    %111 = arith.andi %110, %104 : vector<128x16xi1>
    %112 = vector.broadcast %100 : i32 to vector<128x16xi32>
    %113 = arith.addi %102, %112 : vector<128x16xi32>
    %114 = arith.select %111, %113, %102 : vector<128x16xi1>, vector<128x16xi32>
    %c1_i32_45 = arith.constant 1 : i32
    %115 = vector.broadcast %c1_i32_45 : i32 to vector<128x16xi32>
    %116 = arith.cmpi slt, %114, %115 : vector<128x16xi32>
    %cst_46 = arith.constant 0.000000e+00 : f32
    %117 = vector.broadcast %cst_46 : f32 to vector<128x16xf32>
    %118 = arith.select %116, %117, %97 : vector<128x16xi1>, vector<128x16xf32>
    %119 = tpu.concatenate %96, %118, %74 in 1 : vector<128x16xf32>, vector<128x16xf32>, vector<128x16xf32> -> vector<128x48xf32>
    %cst_47 = arith.constant dense<0.000000e+00> : vector<128x16xf32>
    %120 = tpu.matmul %119, %5, %cst_47 {dimension_numbers = #tpu.dot_dimension_numbers<[1], [0], [0], [1], [0, 0, 1, 1], [], []>} : vector<128x48xf32>, vector<48x16xf32>, vector<128x16xf32> -> vector<128x16xf32>
    %121 = vector.broadcast %11 : vector<1x16xf32> to vector<128x16xf32>
    %122 = arith.addf %120, %121 : vector<128x16xf32>
    %cst_48 = arith.constant 0.000000e+00 : f32
    %123 = vector.broadcast %cst_48 : f32 to vector<128x16xf32>
    %124 = arith.maximumf %122, %123 : vector<128x16xf32>
    %cst_49 = arith.constant dense<0.000000e+00> : vector<128x16xf32>
    %125 = tpu.matmul %24, %8, %cst_49 {dimension_numbers = #tpu.dot_dimension_numbers<[1], [0], [0], [1], [0, 0, 1, 1], [], []>} : vector<128x8xf32>, vector<8x16xf32>, vector<128x16xf32> -> vector<128x16xf32>
    %126 = vector.broadcast %14 : vector<1x16xf32> to vector<128x16xf32>
    %127 = arith.addf %125, %126 : vector<128x16xf32>
    %128 = arith.addf %124, %127 : vector<128x16xf32>
    %cst_50 = arith.constant 0.000000e+00 : f32
    %129 = vector.broadcast %cst_50 : f32 to vector<128x16xf32>
    %130 = arith.maximumf %128, %129 : vector<128x16xf32>
    %c4_i32 = arith.constant 4 : i32
    %131 = tpu.dynamic_rotate %130 by %c4_i32 dim 0 : vector<128x16xf32>, i32 -> vector<128x16xf32>
    %132 = tpu.iota {dimensions = array<i32: 0>} : vector<128x16xi32>
    %c16_i32_51 = arith.constant 16 : i32
    %c0_i32_52 = arith.constant 0 : i32
    %133 = arith.cmpi eq, %c16_i32_51, %c0_i32_52 : i32
    %c1_i32_53 = arith.constant 1 : i32
    %134 = arith.select %133, %c1_i32_53, %c16_i32_51 : i32
    %135 = vector.broadcast %134 : i32 to vector<128x16xi32>
    %136 = arith.remsi %132, %135 : vector<128x16xi32>
    %c0_i32_54 = arith.constant 0 : i32
    %137 = vector.broadcast %c0_i32_54 : i32 to vector<128x16xi32>
    %138 = arith.cmpi ne, %136, %137 : vector<128x16xi32>
    %c0_i32_55 = arith.constant 0 : i32
    %139 = vector.broadcast %c0_i32_55 : i32 to vector<128x16xi32>
    %140 = arith.cmpi slt, %136, %139 : vector<128x16xi32>
    %c0_i32_56 = arith.constant 0 : i32
    %141 = arith.cmpi slt, %134, %c0_i32_56 : i32
    %142 = vector.broadcast %141 : i1 to vector<128x16xi1>
    %143 = vector.broadcast %142 : vector<128x16xi1> to vector<128x16xi1>
    %144 = arith.xori %140, %143 : vector<128x16xi1>
    %145 = arith.andi %144, %138 : vector<128x16xi1>
    %146 = vector.broadcast %134 : i32 to vector<128x16xi32>
    %147 = arith.addi %136, %146 : vector<128x16xi32>
    %148 = arith.select %145, %147, %136 : vector<128x16xi1>, vector<128x16xi32>
    %c4_i32_57 = arith.constant 4 : i32
    %149 = vector.broadcast %c4_i32_57 : i32 to vector<128x16xi32>
    %150 = arith.cmpi slt, %148, %149 : vector<128x16xi32>
    %cst_58 = arith.constant 0.000000e+00 : f32
    %151 = vector.broadcast %cst_58 : f32 to vector<128x16xf32>
    %152 = arith.select %150, %151, %131 : vector<128x16xi1>, vector<128x16xf32>
    %c2_i32_59 = arith.constant 2 : i32
    %153 = tpu.dynamic_rotate %130 by %c2_i32_59 dim 0 : vector<128x16xf32>, i32 -> vector<128x16xf32>
    %154 = tpu.iota {dimensions = array<i32: 0>} : vector<128x16xi32>
    %c16_i32_60 = arith.constant 16 : i32
    %c0_i32_61 = arith.constant 0 : i32
    %155 = arith.cmpi eq, %c16_i32_60, %c0_i32_61 : i32
    %c1_i32_62 = arith.constant 1 : i32
    %156 = arith.select %155, %c1_i32_62, %c16_i32_60 : i32
    %157 = vector.broadcast %156 : i32 to vector<128x16xi32>
    %158 = arith.remsi %154, %157 : vector<128x16xi32>
    %c0_i32_63 = arith.constant 0 : i32
    %159 = vector.broadcast %c0_i32_63 : i32 to vector<128x16xi32>
    %160 = arith.cmpi ne, %158, %159 : vector<128x16xi32>
    %c0_i32_64 = arith.constant 0 : i32
    %161 = vector.broadcast %c0_i32_64 : i32 to vector<128x16xi32>
    %162 = arith.cmpi slt, %158, %161 : vector<128x16xi32>
    %c0_i32_65 = arith.constant 0 : i32
    %163 = arith.cmpi slt, %156, %c0_i32_65 : i32
    %164 = vector.broadcast %163 : i1 to vector<128x16xi1>
    %165 = vector.broadcast %164 : vector<128x16xi1> to vector<128x16xi1>
    %166 = arith.xori %162, %165 : vector<128x16xi1>
    %167 = arith.andi %166, %160 : vector<128x16xi1>
    %168 = vector.broadcast %156 : i32 to vector<128x16xi32>
    %169 = arith.addi %158, %168 : vector<128x16xi32>
    %170 = arith.select %167, %169, %158 : vector<128x16xi1>, vector<128x16xi32>
    %c2_i32_66 = arith.constant 2 : i32
    %171 = vector.broadcast %c2_i32_66 : i32 to vector<128x16xi32>
    %172 = arith.cmpi slt, %170, %171 : vector<128x16xi32>
    %cst_67 = arith.constant 0.000000e+00 : f32
    %173 = vector.broadcast %cst_67 : f32 to vector<128x16xf32>
    %174 = arith.select %172, %173, %153 : vector<128x16xi1>, vector<128x16xf32>
    %175 = tpu.concatenate %152, %174, %130 in 1 : vector<128x16xf32>, vector<128x16xf32>, vector<128x16xf32> -> vector<128x48xf32>
    %cst_68 = arith.constant dense<0.000000e+00> : vector<128x16xf32>
    %176 = tpu.matmul %175, %6, %cst_68 {dimension_numbers = #tpu.dot_dimension_numbers<[1], [0], [0], [1], [0, 0, 1, 1], [], []>} : vector<128x48xf32>, vector<48x16xf32>, vector<128x16xf32> -> vector<128x16xf32>
    %177 = vector.broadcast %12 : vector<1x16xf32> to vector<128x16xf32>
    %178 = arith.addf %176, %177 : vector<128x16xf32>
    %cst_69 = arith.constant 0.000000e+00 : f32
    %179 = vector.broadcast %cst_69 : f32 to vector<128x16xf32>
    %180 = arith.maximumf %178, %179 : vector<128x16xf32>
    %c4_i32_70 = arith.constant 4 : i32
    %181 = tpu.dynamic_rotate %180 by %c4_i32_70 dim 0 : vector<128x16xf32>, i32 -> vector<128x16xf32>
    %182 = tpu.iota {dimensions = array<i32: 0>} : vector<128x16xi32>
    %c16_i32_71 = arith.constant 16 : i32
    %c0_i32_72 = arith.constant 0 : i32
    %183 = arith.cmpi eq, %c16_i32_71, %c0_i32_72 : i32
    %c1_i32_73 = arith.constant 1 : i32
    %184 = arith.select %183, %c1_i32_73, %c16_i32_71 : i32
    %185 = vector.broadcast %184 : i32 to vector<128x16xi32>
    %186 = arith.remsi %182, %185 : vector<128x16xi32>
    %c0_i32_74 = arith.constant 0 : i32
    %187 = vector.broadcast %c0_i32_74 : i32 to vector<128x16xi32>
    %188 = arith.cmpi ne, %186, %187 : vector<128x16xi32>
    %c0_i32_75 = arith.constant 0 : i32
    %189 = vector.broadcast %c0_i32_75 : i32 to vector<128x16xi32>
    %190 = arith.cmpi slt, %186, %189 : vector<128x16xi32>
    %c0_i32_76 = arith.constant 0 : i32
    %191 = arith.cmpi slt, %184, %c0_i32_76 : i32
    %192 = vector.broadcast %191 : i1 to vector<128x16xi1>
    %193 = vector.broadcast %192 : vector<128x16xi1> to vector<128x16xi1>
    %194 = arith.xori %190, %193 : vector<128x16xi1>
    %195 = arith.andi %194, %188 : vector<128x16xi1>
    %196 = vector.broadcast %184 : i32 to vector<128x16xi32>
    %197 = arith.addi %186, %196 : vector<128x16xi32>
    %198 = arith.select %195, %197, %186 : vector<128x16xi1>, vector<128x16xi32>
    %c4_i32_77 = arith.constant 4 : i32
    %199 = vector.broadcast %c4_i32_77 : i32 to vector<128x16xi32>
    %200 = arith.cmpi slt, %198, %199 : vector<128x16xi32>
    %cst_78 = arith.constant 0.000000e+00 : f32
    %201 = vector.broadcast %cst_78 : f32 to vector<128x16xf32>
    %202 = arith.select %200, %201, %181 : vector<128x16xi1>, vector<128x16xf32>
    %c2_i32_79 = arith.constant 2 : i32
    %203 = tpu.dynamic_rotate %180 by %c2_i32_79 dim 0 : vector<128x16xf32>, i32 -> vector<128x16xf32>
    %204 = tpu.iota {dimensions = array<i32: 0>} : vector<128x16xi32>
    %c16_i32_80 = arith.constant 16 : i32
    %c0_i32_81 = arith.constant 0 : i32
    %205 = arith.cmpi eq, %c16_i32_80, %c0_i32_81 : i32
    %c1_i32_82 = arith.constant 1 : i32
    %206 = arith.select %205, %c1_i32_82, %c16_i32_80 : i32
    %207 = vector.broadcast %206 : i32 to vector<128x16xi32>
    %208 = arith.remsi %204, %207 : vector<128x16xi32>
    %c0_i32_83 = arith.constant 0 : i32
    %209 = vector.broadcast %c0_i32_83 : i32 to vector<128x16xi32>
    %210 = arith.cmpi ne, %208, %209 : vector<128x16xi32>
    %c0_i32_84 = arith.constant 0 : i32
    %211 = vector.broadcast %c0_i32_84 : i32 to vector<128x16xi32>
    %212 = arith.cmpi slt, %208, %211 : vector<128x16xi32>
    %c0_i32_85 = arith.constant 0 : i32
    %213 = arith.cmpi slt, %206, %c0_i32_85 : i32
    %214 = vector.broadcast %213 : i1 to vector<128x16xi1>
    %215 = vector.broadcast %214 : vector<128x16xi1> to vector<128x16xi1>
    %216 = arith.xori %212, %215 : vector<128x16xi1>
    %217 = arith.andi %216, %210 : vector<128x16xi1>
    %218 = vector.broadcast %206 : i32 to vector<128x16xi32>
    %219 = arith.addi %208, %218 : vector<128x16xi32>
    %220 = arith.select %217, %219, %208 : vector<128x16xi1>, vector<128x16xi32>
    %c2_i32_86 = arith.constant 2 : i32
    %221 = vector.broadcast %c2_i32_86 : i32 to vector<128x16xi32>
    %222 = arith.cmpi slt, %220, %221 : vector<128x16xi32>
    %cst_87 = arith.constant 0.000000e+00 : f32
    %223 = vector.broadcast %cst_87 : f32 to vector<128x16xf32>
    %224 = arith.select %222, %223, %203 : vector<128x16xi1>, vector<128x16xf32>
    %225 = tpu.concatenate %202, %224, %180 in 1 : vector<128x16xf32>, vector<128x16xf32>, vector<128x16xf32> -> vector<128x48xf32>
    %cst_88 = arith.constant dense<0.000000e+00> : vector<128x16xf32>
    %226 = tpu.matmul %225, %7, %cst_88 {dimension_numbers = #tpu.dot_dimension_numbers<[1], [0], [0], [1], [0, 0, 1, 1], [], []>} : vector<128x48xf32>, vector<48x16xf32>, vector<128x16xf32> -> vector<128x16xf32>
    %227 = vector.broadcast %13 : vector<1x16xf32> to vector<128x16xf32>
    %228 = arith.addf %226, %227 : vector<128x16xf32>
    %cst_89 = arith.constant 0.000000e+00 : f32
    %229 = vector.broadcast %cst_89 : f32 to vector<128x16xf32>
    %230 = arith.maximumf %228, %229 : vector<128x16xf32>
    %231 = arith.addf %230, %130 : vector<128x16xf32>
    %cst_90 = arith.constant 0.000000e+00 : f32
    %232 = vector.broadcast %cst_90 : f32 to vector<128x16xf32>
    %233 = arith.maximumf %231, %232 : vector<128x16xf32>
    %cst_91 = arith.constant dense<0.000000e+00> : vector<128xf32>
    %234 = vector.multi_reduction <add>, %233, %cst_91 [1] : vector<128x16xf32> to vector<128xf32>
    %235 = vector.shape_cast %234 : vector<128xf32> to vector<128x1xf32>
    %cst_92 = arith.constant 1.600000e+01 : f32
    %236 = vector.broadcast %cst_92 : f32 to vector<128x1xf32>
    %237 = arith.divf %235, %236 : vector<128x1xf32>
    %238 = vector.broadcast %237 : vector<128x1xf32> to vector<128x16xf32>
    %239 = arith.subf %233, %238 : vector<128x16xf32>
    %240 = arith.mulf %239, %239 : vector<128x16xf32>
    %cst_93 = arith.constant dense<0.000000e+00> : vector<128xf32>
    %241 = vector.multi_reduction <add>, %240, %cst_93 [1] : vector<128x16xf32> to vector<128xf32>
    %242 = vector.shape_cast %241 : vector<128xf32> to vector<128x1xf32>
    %cst_94 = arith.constant 1.600000e+01 : f32
    %243 = vector.broadcast %cst_94 : f32 to vector<128x1xf32>
    %244 = arith.divf %242, %243 : vector<128x1xf32>
    %245 = vector.broadcast %237 : vector<128x1xf32> to vector<128x16xf32>
    %246 = arith.subf %233, %245 : vector<128x16xf32>
    %cst_95 = arith.constant 9.99999974E-6 : f32
    %247 = vector.broadcast %cst_95 : f32 to vector<128x1xf32>
    %248 = arith.addf %244, %247 : vector<128x1xf32>
    %249 = math.rsqrt %248 : vector<128x1xf32>
    %250 = vector.broadcast %249 : vector<128x1xf32> to vector<128x16xf32>
    %251 = arith.mulf %246, %250 : vector<128x16xf32>
    %252 = vector.broadcast %15 : vector<1x16xf32> to vector<128x16xf32>
    %253 = arith.mulf %251, %252 : vector<128x16xf32>
    %254 = vector.broadcast %16 : vector<1x16xf32> to vector<128x16xf32>
    %255 = arith.addf %253, %254 : vector<128x16xf32>
    %cst_96 = arith.constant dense<0.000000e+00> : vector<16x16xf32>
    %256 = tpu.matmul %19, %255, %cst_96 {dimension_numbers = #tpu.dot_dimension_numbers<[1], [0], [0], [1], [0, 0, 1, 1], [], []>} : vector<16x128xf32>, vector<128x16xf32>, vector<16x16xf32> -> vector<16x16xf32>
    %257 = vector.extract_strided_slice %256 {offsets = [0, 0], sizes = [8, 16], strides = [1, 1]} : vector<16x16xf32> to vector<8x16xf32>
    %258 = vector.broadcast %2 : vector<8x1xf32> to vector<8x16xf32>
    %259 = arith.mulf %257, %258 : vector<8x16xf32>
    %260 = vector.extract_strided_slice %256 {offsets = [8, 0], sizes = [8, 16], strides = [1, 1]} : vector<16x16xf32> to vector<8x16xf32>
    %261 = vector.broadcast %2 : vector<8x1xf32> to vector<8x16xf32>
    %262 = arith.mulf %260, %261 : vector<8x16xf32>
    %c336 = arith.constant 336 : index
    %c0_97 = arith.constant 0 : index
    %263 = vector.load %arg5[%c336, %c0_97] : memref<368x96xf32, #tpu.memory_space<vmem>>, vector<16x32xf32>
    %c352 = arith.constant 352 : index
    %c0_98 = arith.constant 0 : index
    %264 = vector.load %arg5[%c352, %c0_98] : memref<368x96xf32, #tpu.memory_space<vmem>>, vector<8x32xf32>
    %cst_99 = arith.constant dense<0.000000e+00> : vector<8x32xf32>
    %265 = tpu.matmul %259, %263, %cst_99 {dimension_numbers = #tpu.dot_dimension_numbers<[1], [0], [0], [1], [0, 0, 1, 1], [], []>} : vector<8x16xf32>, vector<16x32xf32>, vector<8x32xf32> -> vector<8x32xf32>
    %266 = arith.addf %265, %264 : vector<8x32xf32>
    %c0_100 = arith.constant 0 : index
    %c0_101 = arith.constant 0 : index
    %267 = vector.load %arg5[%c0_100, %c0_101] : memref<368x96xf32, #tpu.memory_space<vmem>>, vector<32x96xf32>
    %c32_102 = arith.constant 32 : index
    %c0_103 = arith.constant 0 : index
    %268 = vector.load %arg5[%c32_102, %c0_103] : memref<368x96xf32, #tpu.memory_space<vmem>>, vector<32x32xf32>
    %c64 = arith.constant 64 : index
    %c0_104 = arith.constant 0 : index
    %269 = vector.load %arg5[%c64, %c0_104] : memref<368x96xf32, #tpu.memory_space<vmem>>, vector<32x64xf32>
    %c96 = arith.constant 96 : index
    %c0_105 = arith.constant 0 : index
    %270 = vector.load %arg5[%c96, %c0_105] : memref<368x96xf32, #tpu.memory_space<vmem>>, vector<64x32xf32>
    %c160 = arith.constant 160 : index
    %c0_106 = arith.constant 0 : index
    %271 = vector.load %arg5[%c160, %c0_106] : memref<368x96xf32, #tpu.memory_space<vmem>>, vector<8x96xf32>
    %272 = vector.extract_strided_slice %271 {offsets = [0, 0], sizes = [1, 96], strides = [1, 1]} : vector<8x96xf32> to vector<1x96xf32>
    %273 = vector.extract_strided_slice %271 {offsets = [1, 0], sizes = [1, 32], strides = [1, 1]} : vector<8x96xf32> to vector<1x32xf32>
    %274 = vector.extract_strided_slice %271 {offsets = [2, 0], sizes = [1, 64], strides = [1, 1]} : vector<8x96xf32> to vector<1x64xf32>
    %275 = vector.extract_strided_slice %271 {offsets = [3, 0], sizes = [1, 32], strides = [1, 1]} : vector<8x96xf32> to vector<1x32xf32>
    %276 = vector.extract_strided_slice %271 {offsets = [4, 0], sizes = [1, 32], strides = [1, 1]} : vector<8x96xf32> to vector<1x32xf32>
    %277 = vector.extract_strided_slice %271 {offsets = [5, 0], sizes = [1, 32], strides = [1, 1]} : vector<8x96xf32> to vector<1x32xf32>
    %278 = vector.extract_strided_slice %271 {offsets = [6, 0], sizes = [1, 32], strides = [1, 1]} : vector<8x96xf32> to vector<1x32xf32>
    %279 = vector.extract_strided_slice %271 {offsets = [7, 0], sizes = [1, 32], strides = [1, 1]} : vector<8x96xf32> to vector<1x32xf32>
    %cst_107 = arith.constant dense<0.000000e+00> : vector<8xf32>
    %280 = vector.multi_reduction <add>, %266, %cst_107 [1] : vector<8x32xf32> to vector<8xf32>
    %281 = vector.shape_cast %280 : vector<8xf32> to vector<8x1xf32>
    %cst_108 = arith.constant 3.200000e+01 : f32
    %282 = vector.broadcast %cst_108 : f32 to vector<8x1xf32>
    %283 = arith.divf %281, %282 : vector<8x1xf32>
    %284 = vector.broadcast %283 : vector<8x1xf32> to vector<8x32xf32>
    %285 = arith.subf %266, %284 : vector<8x32xf32>
    %286 = arith.mulf %285, %285 : vector<8x32xf32>
    %cst_109 = arith.constant dense<0.000000e+00> : vector<8xf32>
    %287 = vector.multi_reduction <add>, %286, %cst_109 [1] : vector<8x32xf32> to vector<8xf32>
    %288 = vector.shape_cast %287 : vector<8xf32> to vector<8x1xf32>
    %cst_110 = arith.constant 3.200000e+01 : f32
    %289 = vector.broadcast %cst_110 : f32 to vector<8x1xf32>
    %290 = arith.divf %288, %289 : vector<8x1xf32>
    %291 = vector.broadcast %283 : vector<8x1xf32> to vector<8x32xf32>
    %292 = arith.subf %266, %291 : vector<8x32xf32>
    %cst_111 = arith.constant 9.99999974E-6 : f32
    %293 = vector.broadcast %cst_111 : f32 to vector<8x1xf32>
    %294 = arith.addf %290, %293 : vector<8x1xf32>
    %295 = math.rsqrt %294 : vector<8x1xf32>
    %296 = vector.broadcast %295 : vector<8x1xf32> to vector<8x32xf32>
    %297 = arith.mulf %292, %296 : vector<8x32xf32>
    %298 = vector.broadcast %276 : vector<1x32xf32> to vector<8x32xf32>
    %299 = arith.mulf %297, %298 : vector<8x32xf32>
    %300 = vector.broadcast %277 : vector<1x32xf32> to vector<8x32xf32>
    %301 = arith.addf %299, %300 : vector<8x32xf32>
    %cst_112 = arith.constant dense<0.000000e+00> : vector<8x96xf32>
    %302 = tpu.matmul %301, %267, %cst_112 {dimension_numbers = #tpu.dot_dimension_numbers<[1], [0], [0], [1], [0, 0, 1, 1], [], []>} : vector<8x32xf32>, vector<32x96xf32>, vector<8x96xf32> -> vector<8x96xf32>
    %303 = vector.broadcast %272 : vector<1x96xf32> to vector<8x96xf32>
    %304 = arith.addf %302, %303 : vector<8x96xf32>
    %305 = vector.extract_strided_slice %304 {offsets = [0, 0], sizes = [8, 8], strides = [1, 1]} : vector<8x96xf32> to vector<8x8xf32>
    %306 = vector.extract_strided_slice %304 {offsets = [0, 8], sizes = [8, 8], strides = [1, 1]} : vector<8x96xf32> to vector<8x8xf32>
    %307 = vector.extract_strided_slice %304 {offsets = [0, 16], sizes = [8, 8], strides = [1, 1]} : vector<8x96xf32> to vector<8x8xf32>
    %308 = vector.extract_strided_slice %304 {offsets = [0, 24], sizes = [8, 8], strides = [1, 1]} : vector<8x96xf32> to vector<8x8xf32>
    %309 = tpu.concatenate %305, %306, %307, %308 in 0 : vector<8x8xf32>, vector<8x8xf32>, vector<8x8xf32>, vector<8x8xf32> -> vector<32x8xf32>
    %310 = vector.extract_strided_slice %304 {offsets = [0, 32], sizes = [8, 8], strides = [1, 1]} : vector<8x96xf32> to vector<8x8xf32>
    %311 = vector.extract_strided_slice %304 {offsets = [0, 40], sizes = [8, 8], strides = [1, 1]} : vector<8x96xf32> to vector<8x8xf32>
    %312 = vector.extract_strided_slice %304 {offsets = [0, 48], sizes = [8, 8], strides = [1, 1]} : vector<8x96xf32> to vector<8x8xf32>
    %313 = vector.extract_strided_slice %304 {offsets = [0, 56], sizes = [8, 8], strides = [1, 1]} : vector<8x96xf32> to vector<8x8xf32>
    %314 = tpu.concatenate %310, %311, %312, %313 in 0 : vector<8x8xf32>, vector<8x8xf32>, vector<8x8xf32>, vector<8x8xf32> -> vector<32x8xf32>
    %315 = vector.extract_strided_slice %304 {offsets = [0, 64], sizes = [8, 8], strides = [1, 1]} : vector<8x96xf32> to vector<8x8xf32>
    %316 = vector.extract_strided_slice %304 {offsets = [0, 72], sizes = [8, 8], strides = [1, 1]} : vector<8x96xf32> to vector<8x8xf32>
    %317 = vector.extract_strided_slice %304 {offsets = [0, 80], sizes = [8, 8], strides = [1, 1]} : vector<8x96xf32> to vector<8x8xf32>
    %318 = vector.extract_strided_slice %304 {offsets = [0, 88], sizes = [8, 8], strides = [1, 1]} : vector<8x96xf32> to vector<8x8xf32>
    %319 = tpu.concatenate %315, %316, %317, %318 in 0 : vector<8x8xf32>, vector<8x8xf32>, vector<8x8xf32>, vector<8x8xf32> -> vector<32x8xf32>
    %cst_113 = arith.constant dense<0.000000e+00> : vector<32x32xf32>
    %320 = tpu.matmul %309, %314, %cst_113 {dimension_numbers = #tpu.dot_dimension_numbers<[1], [1], [0], [0], [0, 0, 1, 0], [], []>} : vector<32x8xf32>, vector<32x8xf32>, vector<32x32xf32> -> vector<32x32xf32>
    %321 = arith.addf %320, %0 : vector<32x32xf32>
    %cst_114 = arith.constant dense<0xFF800000> : vector<32xf32>
    %322 = vector.multi_reduction <maximumf>, %321, %cst_114 [1] : vector<32x32xf32> to vector<32xf32>
    %323 = vector.shape_cast %322 : vector<32xf32> to vector<32x1xf32>
    %324 = vector.broadcast %323 : vector<32x1xf32> to vector<32x32xf32>
    %325 = arith.subf %321, %324 : vector<32x32xf32>
    %326 = math.exp %325 : vector<32x32xf32>
    %cst_115 = arith.constant dense<0.000000e+00> : vector<32xf32>
    %327 = vector.multi_reduction <add>, %326, %cst_115 [1] : vector<32x32xf32> to vector<32xf32>
    %328 = vector.shape_cast %327 : vector<32xf32> to vector<32x1xf32>
    %329 = tpu.reciprocal %328 {approx = true} : vector<32x1xf32> -> vector<32x1xf32>
    %330 = vector.broadcast %329 : vector<32x1xf32> to vector<32x32xf32>
    %331 = arith.mulf %326, %330 : vector<32x32xf32>
    %cst_116 = arith.constant dense<0.000000e+00> : vector<32x8xf32>
    %332 = tpu.matmul %331, %319, %cst_116 {dimension_numbers = #tpu.dot_dimension_numbers<[1], [0], [0], [1], [0, 0, 1, 1], [], []>} : vector<32x32xf32>, vector<32x8xf32>, vector<32x8xf32> -> vector<32x8xf32>
    %333 = vector.extract_strided_slice %332 {offsets = [0, 0], sizes = [8, 8], strides = [1, 1]} : vector<32x8xf32> to vector<8x8xf32>
    %334 = vector.extract_strided_slice %332 {offsets = [8, 0], sizes = [8, 8], strides = [1, 1]} : vector<32x8xf32> to vector<8x8xf32>
    %335 = vector.extract_strided_slice %332 {offsets = [16, 0], sizes = [8, 8], strides = [1, 1]} : vector<32x8xf32> to vector<8x8xf32>
    %336 = vector.extract_strided_slice %332 {offsets = [24, 0], sizes = [8, 8], strides = [1, 1]} : vector<32x8xf32> to vector<8x8xf32>
    %337 = tpu.concatenate %333, %334, %335, %336 in 1 : vector<8x8xf32>, vector<8x8xf32>, vector<8x8xf32>, vector<8x8xf32> -> vector<8x32xf32>
    %cst_117 = arith.constant dense<0.000000e+00> : vector<8x32xf32>
    %338 = tpu.matmul %337, %268, %cst_117 {dimension_numbers = #tpu.dot_dimension_numbers<[1], [0], [0], [1], [0, 0, 1, 1], [], []>} : vector<8x32xf32>, vector<32x32xf32>, vector<8x32xf32> -> vector<8x32xf32>
    %339 = arith.addf %266, %338 : vector<8x32xf32>
    %340 = vector.broadcast %273 : vector<1x32xf32> to vector<8x32xf32>
    %341 = arith.addf %339, %340 : vector<8x32xf32>
    %cst_118 = arith.constant dense<0.000000e+00> : vector<8xf32>
    %342 = vector.multi_reduction <add>, %341, %cst_118 [1] : vector<8x32xf32> to vector<8xf32>
    %343 = vector.shape_cast %342 : vector<8xf32> to vector<8x1xf32>
    %cst_119 = arith.constant 3.200000e+01 : f32
    %344 = vector.broadcast %cst_119 : f32 to vector<8x1xf32>
    %345 = arith.divf %343, %344 : vector<8x1xf32>
    %346 = vector.broadcast %345 : vector<8x1xf32> to vector<8x32xf32>
    %347 = arith.subf %341, %346 : vector<8x32xf32>
    %348 = arith.mulf %347, %347 : vector<8x32xf32>
    %cst_120 = arith.constant dense<0.000000e+00> : vector<8xf32>
    %349 = vector.multi_reduction <add>, %348, %cst_120 [1] : vector<8x32xf32> to vector<8xf32>
    %350 = vector.shape_cast %349 : vector<8xf32> to vector<8x1xf32>
    %cst_121 = arith.constant 3.200000e+01 : f32
    %351 = vector.broadcast %cst_121 : f32 to vector<8x1xf32>
    %352 = arith.divf %350, %351 : vector<8x1xf32>
    %353 = vector.broadcast %345 : vector<8x1xf32> to vector<8x32xf32>
    %354 = arith.subf %341, %353 : vector<8x32xf32>
    %cst_122 = arith.constant 9.99999974E-6 : f32
    %355 = vector.broadcast %cst_122 : f32 to vector<8x1xf32>
    %356 = arith.addf %352, %355 : vector<8x1xf32>
    %357 = math.rsqrt %356 : vector<8x1xf32>
    %358 = vector.broadcast %357 : vector<8x1xf32> to vector<8x32xf32>
    %359 = arith.mulf %354, %358 : vector<8x32xf32>
    %360 = vector.broadcast %278 : vector<1x32xf32> to vector<8x32xf32>
    %361 = arith.mulf %359, %360 : vector<8x32xf32>
    %362 = vector.broadcast %279 : vector<1x32xf32> to vector<8x32xf32>
    %363 = arith.addf %361, %362 : vector<8x32xf32>
    %cst_123 = arith.constant dense<0.000000e+00> : vector<8x64xf32>
    %364 = tpu.matmul %363, %269, %cst_123 {dimension_numbers = #tpu.dot_dimension_numbers<[1], [0], [0], [1], [0, 0, 1, 1], [], []>} : vector<8x32xf32>, vector<32x64xf32>, vector<8x64xf32> -> vector<8x64xf32>
    %365 = vector.broadcast %274 : vector<1x64xf32> to vector<8x64xf32>
    %366 = arith.addf %364, %365 : vector<8x64xf32>
    %cst_124 = arith.constant 0.000000e+00 : f32
    %367 = vector.broadcast %cst_124 : f32 to vector<8x64xf32>
    %368 = arith.maximumf %366, %367 : vector<8x64xf32>
    %cst_125 = arith.constant dense<0.000000e+00> : vector<8x32xf32>
    %369 = tpu.matmul %368, %270, %cst_125 {dimension_numbers = #tpu.dot_dimension_numbers<[1], [0], [0], [1], [0, 0, 1, 1], [], []>} : vector<8x64xf32>, vector<64x32xf32>, vector<8x32xf32> -> vector<8x32xf32>
    %370 = arith.addf %341, %369 : vector<8x32xf32>
    %371 = vector.broadcast %275 : vector<1x32xf32> to vector<8x32xf32>
    %372 = arith.addf %370, %371 : vector<8x32xf32>
    %c168_126 = arith.constant 168 : index
    %c0_127 = arith.constant 0 : index
    %373 = vector.load %arg5[%c168_126, %c0_127] : memref<368x96xf32, #tpu.memory_space<vmem>>, vector<32x96xf32>
    %c200 = arith.constant 200 : index
    %c0_128 = arith.constant 0 : index
    %374 = vector.load %arg5[%c200, %c0_128] : memref<368x96xf32, #tpu.memory_space<vmem>>, vector<32x32xf32>
    %c232 = arith.constant 232 : index
    %c0_129 = arith.constant 0 : index
    %375 = vector.load %arg5[%c232, %c0_129] : memref<368x96xf32, #tpu.memory_space<vmem>>, vector<32x64xf32>
    %c264 = arith.constant 264 : index
    %c0_130 = arith.constant 0 : index
    %376 = vector.load %arg5[%c264, %c0_130] : memref<368x96xf32, #tpu.memory_space<vmem>>, vector<64x32xf32>
    %c328 = arith.constant 328 : index
    %c0_131 = arith.constant 0 : index
    %377 = vector.load %arg5[%c328, %c0_131] : memref<368x96xf32, #tpu.memory_space<vmem>>, vector<8x96xf32>
    %378 = vector.extract_strided_slice %377 {offsets = [0, 0], sizes = [1, 96], strides = [1, 1]} : vector<8x96xf32> to vector<1x96xf32>
    %379 = vector.extract_strided_slice %377 {offsets = [1, 0], sizes = [1, 32], strides = [1, 1]} : vector<8x96xf32> to vector<1x32xf32>
    %380 = vector.extract_strided_slice %377 {offsets = [2, 0], sizes = [1, 64], strides = [1, 1]} : vector<8x96xf32> to vector<1x64xf32>
    %381 = vector.extract_strided_slice %377 {offsets = [3, 0], sizes = [1, 32], strides = [1, 1]} : vector<8x96xf32> to vector<1x32xf32>
    %382 = vector.extract_strided_slice %377 {offsets = [4, 0], sizes = [1, 32], strides = [1, 1]} : vector<8x96xf32> to vector<1x32xf32>
    %383 = vector.extract_strided_slice %377 {offsets = [5, 0], sizes = [1, 32], strides = [1, 1]} : vector<8x96xf32> to vector<1x32xf32>
    %384 = vector.extract_strided_slice %377 {offsets = [6, 0], sizes = [1, 32], strides = [1, 1]} : vector<8x96xf32> to vector<1x32xf32>
    %385 = vector.extract_strided_slice %377 {offsets = [7, 0], sizes = [1, 32], strides = [1, 1]} : vector<8x96xf32> to vector<1x32xf32>
    %cst_132 = arith.constant dense<0.000000e+00> : vector<8xf32>
    %386 = vector.multi_reduction <add>, %372, %cst_132 [1] : vector<8x32xf32> to vector<8xf32>
    %387 = vector.shape_cast %386 : vector<8xf32> to vector<8x1xf32>
    %cst_133 = arith.constant 3.200000e+01 : f32
    %388 = vector.broadcast %cst_133 : f32 to vector<8x1xf32>
    %389 = arith.divf %387, %388 : vector<8x1xf32>
    %390 = vector.broadcast %389 : vector<8x1xf32> to vector<8x32xf32>
    %391 = arith.subf %372, %390 : vector<8x32xf32>
    %392 = arith.mulf %391, %391 : vector<8x32xf32>
    %cst_134 = arith.constant dense<0.000000e+00> : vector<8xf32>
    %393 = vector.multi_reduction <add>, %392, %cst_134 [1] : vector<8x32xf32> to vector<8xf32>
    %394 = vector.shape_cast %393 : vector<8xf32> to vector<8x1xf32>
    %cst_135 = arith.constant 3.200000e+01 : f32
    %395 = vector.broadcast %cst_135 : f32 to vector<8x1xf32>
    %396 = arith.divf %394, %395 : vector<8x1xf32>
    %397 = vector.broadcast %389 : vector<8x1xf32> to vector<8x32xf32>
    %398 = arith.subf %372, %397 : vector<8x32xf32>
    %cst_136 = arith.constant 9.99999974E-6 : f32
    %399 = vector.broadcast %cst_136 : f32 to vector<8x1xf32>
    %400 = arith.addf %396, %399 : vector<8x1xf32>
    %401 = math.rsqrt %400 : vector<8x1xf32>
    %402 = vector.broadcast %401 : vector<8x1xf32> to vector<8x32xf32>
    %403 = arith.mulf %398, %402 : vector<8x32xf32>
    %404 = vector.broadcast %382 : vector<1x32xf32> to vector<8x32xf32>
    %405 = arith.mulf %403, %404 : vector<8x32xf32>
    %406 = vector.broadcast %383 : vector<1x32xf32> to vector<8x32xf32>
    %407 = arith.addf %405, %406 : vector<8x32xf32>
    %cst_137 = arith.constant dense<0.000000e+00> : vector<8x96xf32>
    %408 = tpu.matmul %407, %373, %cst_137 {dimension_numbers = #tpu.dot_dimension_numbers<[1], [0], [0], [1], [0, 0, 1, 1], [], []>} : vector<8x32xf32>, vector<32x96xf32>, vector<8x96xf32> -> vector<8x96xf32>
    %409 = vector.broadcast %378 : vector<1x96xf32> to vector<8x96xf32>
    %410 = arith.addf %408, %409 : vector<8x96xf32>
    %411 = vector.extract_strided_slice %410 {offsets = [0, 0], sizes = [8, 8], strides = [1, 1]} : vector<8x96xf32> to vector<8x8xf32>
    %412 = vector.extract_strided_slice %410 {offsets = [0, 8], sizes = [8, 8], strides = [1, 1]} : vector<8x96xf32> to vector<8x8xf32>
    %413 = vector.extract_strided_slice %410 {offsets = [0, 16], sizes = [8, 8], strides = [1, 1]} : vector<8x96xf32> to vector<8x8xf32>
    %414 = vector.extract_strided_slice %410 {offsets = [0, 24], sizes = [8, 8], strides = [1, 1]} : vector<8x96xf32> to vector<8x8xf32>
    %415 = tpu.concatenate %411, %412, %413, %414 in 0 : vector<8x8xf32>, vector<8x8xf32>, vector<8x8xf32>, vector<8x8xf32> -> vector<32x8xf32>
    %416 = vector.extract_strided_slice %410 {offsets = [0, 32], sizes = [8, 8], strides = [1, 1]} : vector<8x96xf32> to vector<8x8xf32>
    %417 = vector.extract_strided_slice %410 {offsets = [0, 40], sizes = [8, 8], strides = [1, 1]} : vector<8x96xf32> to vector<8x8xf32>
    %418 = vector.extract_strided_slice %410 {offsets = [0, 48], sizes = [8, 8], strides = [1, 1]} : vector<8x96xf32> to vector<8x8xf32>
    %419 = vector.extract_strided_slice %410 {offsets = [0, 56], sizes = [8, 8], strides = [1, 1]} : vector<8x96xf32> to vector<8x8xf32>
    %420 = tpu.concatenate %416, %417, %418, %419 in 0 : vector<8x8xf32>, vector<8x8xf32>, vector<8x8xf32>, vector<8x8xf32> -> vector<32x8xf32>
    %421 = vector.extract_strided_slice %410 {offsets = [0, 64], sizes = [8, 8], strides = [1, 1]} : vector<8x96xf32> to vector<8x8xf32>
    %422 = vector.extract_strided_slice %410 {offsets = [0, 72], sizes = [8, 8], strides = [1, 1]} : vector<8x96xf32> to vector<8x8xf32>
    %423 = vector.extract_strided_slice %410 {offsets = [0, 80], sizes = [8, 8], strides = [1, 1]} : vector<8x96xf32> to vector<8x8xf32>
    %424 = vector.extract_strided_slice %410 {offsets = [0, 88], sizes = [8, 8], strides = [1, 1]} : vector<8x96xf32> to vector<8x8xf32>
    %425 = tpu.concatenate %421, %422, %423, %424 in 0 : vector<8x8xf32>, vector<8x8xf32>, vector<8x8xf32>, vector<8x8xf32> -> vector<32x8xf32>
    %cst_138 = arith.constant dense<0.000000e+00> : vector<32x32xf32>
    %426 = tpu.matmul %415, %420, %cst_138 {dimension_numbers = #tpu.dot_dimension_numbers<[1], [1], [0], [0], [0, 0, 1, 0], [], []>} : vector<32x8xf32>, vector<32x8xf32>, vector<32x32xf32> -> vector<32x32xf32>
    %427 = arith.addf %426, %0 : vector<32x32xf32>
    %cst_139 = arith.constant dense<0xFF800000> : vector<32xf32>
    %428 = vector.multi_reduction <maximumf>, %427, %cst_139 [1] : vector<32x32xf32> to vector<32xf32>
    %429 = vector.shape_cast %428 : vector<32xf32> to vector<32x1xf32>
    %430 = vector.broadcast %429 : vector<32x1xf32> to vector<32x32xf32>
    %431 = arith.subf %427, %430 : vector<32x32xf32>
    %432 = math.exp %431 : vector<32x32xf32>
    %cst_140 = arith.constant dense<0.000000e+00> : vector<32xf32>
    %433 = vector.multi_reduction <add>, %432, %cst_140 [1] : vector<32x32xf32> to vector<32xf32>
    %434 = vector.shape_cast %433 : vector<32xf32> to vector<32x1xf32>
    %435 = tpu.reciprocal %434 {approx = true} : vector<32x1xf32> -> vector<32x1xf32>
    %436 = vector.broadcast %435 : vector<32x1xf32> to vector<32x32xf32>
    %437 = arith.mulf %432, %436 : vector<32x32xf32>
    %cst_141 = arith.constant dense<0.000000e+00> : vector<32x8xf32>
    %438 = tpu.matmul %437, %425, %cst_141 {dimension_numbers = #tpu.dot_dimension_numbers<[1], [0], [0], [1], [0, 0, 1, 1], [], []>} : vector<32x32xf32>, vector<32x8xf32>, vector<32x8xf32> -> vector<32x8xf32>
    %439 = vector.extract_strided_slice %438 {offsets = [0, 0], sizes = [8, 8], strides = [1, 1]} : vector<32x8xf32> to vector<8x8xf32>
    %440 = vector.extract_strided_slice %438 {offsets = [8, 0], sizes = [8, 8], strides = [1, 1]} : vector<32x8xf32> to vector<8x8xf32>
    %441 = vector.extract_strided_slice %438 {offsets = [16, 0], sizes = [8, 8], strides = [1, 1]} : vector<32x8xf32> to vector<8x8xf32>
    %442 = vector.extract_strided_slice %438 {offsets = [24, 0], sizes = [8, 8], strides = [1, 1]} : vector<32x8xf32> to vector<8x8xf32>
    %443 = tpu.concatenate %439, %440, %441, %442 in 1 : vector<8x8xf32>, vector<8x8xf32>, vector<8x8xf32>, vector<8x8xf32> -> vector<8x32xf32>
    %cst_142 = arith.constant dense<0.000000e+00> : vector<8x32xf32>
    %444 = tpu.matmul %443, %374, %cst_142 {dimension_numbers = #tpu.dot_dimension_numbers<[1], [0], [0], [1], [0, 0, 1, 1], [], []>} : vector<8x32xf32>, vector<32x32xf32>, vector<8x32xf32> -> vector<8x32xf32>
    %445 = arith.addf %372, %444 : vector<8x32xf32>
    %446 = vector.broadcast %379 : vector<1x32xf32> to vector<8x32xf32>
    %447 = arith.addf %445, %446 : vector<8x32xf32>
    %cst_143 = arith.constant dense<0.000000e+00> : vector<8xf32>
    %448 = vector.multi_reduction <add>, %447, %cst_143 [1] : vector<8x32xf32> to vector<8xf32>
    %449 = vector.shape_cast %448 : vector<8xf32> to vector<8x1xf32>
    %cst_144 = arith.constant 3.200000e+01 : f32
    %450 = vector.broadcast %cst_144 : f32 to vector<8x1xf32>
    %451 = arith.divf %449, %450 : vector<8x1xf32>
    %452 = vector.broadcast %451 : vector<8x1xf32> to vector<8x32xf32>
    %453 = arith.subf %447, %452 : vector<8x32xf32>
    %454 = arith.mulf %453, %453 : vector<8x32xf32>
    %cst_145 = arith.constant dense<0.000000e+00> : vector<8xf32>
    %455 = vector.multi_reduction <add>, %454, %cst_145 [1] : vector<8x32xf32> to vector<8xf32>
    %456 = vector.shape_cast %455 : vector<8xf32> to vector<8x1xf32>
    %cst_146 = arith.constant 3.200000e+01 : f32
    %457 = vector.broadcast %cst_146 : f32 to vector<8x1xf32>
    %458 = arith.divf %456, %457 : vector<8x1xf32>
    %459 = vector.broadcast %451 : vector<8x1xf32> to vector<8x32xf32>
    %460 = arith.subf %447, %459 : vector<8x32xf32>
    %cst_147 = arith.constant 9.99999974E-6 : f32
    %461 = vector.broadcast %cst_147 : f32 to vector<8x1xf32>
    %462 = arith.addf %458, %461 : vector<8x1xf32>
    %463 = math.rsqrt %462 : vector<8x1xf32>
    %464 = vector.broadcast %463 : vector<8x1xf32> to vector<8x32xf32>
    %465 = arith.mulf %460, %464 : vector<8x32xf32>
    %466 = vector.broadcast %384 : vector<1x32xf32> to vector<8x32xf32>
    %467 = arith.mulf %465, %466 : vector<8x32xf32>
    %468 = vector.broadcast %385 : vector<1x32xf32> to vector<8x32xf32>
    %469 = arith.addf %467, %468 : vector<8x32xf32>
    %cst_148 = arith.constant dense<0.000000e+00> : vector<8x64xf32>
    %470 = tpu.matmul %469, %375, %cst_148 {dimension_numbers = #tpu.dot_dimension_numbers<[1], [0], [0], [1], [0, 0, 1, 1], [], []>} : vector<8x32xf32>, vector<32x64xf32>, vector<8x64xf32> -> vector<8x64xf32>
    %471 = vector.broadcast %380 : vector<1x64xf32> to vector<8x64xf32>
    %472 = arith.addf %470, %471 : vector<8x64xf32>
    %cst_149 = arith.constant 0.000000e+00 : f32
    %473 = vector.broadcast %cst_149 : f32 to vector<8x64xf32>
    %474 = arith.maximumf %472, %473 : vector<8x64xf32>
    %cst_150 = arith.constant dense<0.000000e+00> : vector<8x32xf32>
    %475 = tpu.matmul %474, %376, %cst_150 {dimension_numbers = #tpu.dot_dimension_numbers<[1], [0], [0], [1], [0, 0, 1, 1], [], []>} : vector<8x64xf32>, vector<64x32xf32>, vector<8x32xf32> -> vector<8x32xf32>
    %476 = arith.addf %447, %475 : vector<8x32xf32>
    %477 = vector.broadcast %381 : vector<1x32xf32> to vector<8x32xf32>
    %478 = arith.addf %476, %477 : vector<8x32xf32>
    %c360 = arith.constant 360 : index
    %c0_151 = arith.constant 0 : index
    %479 = vector.load %arg5[%c360, %c0_151] : memref<368x96xf32, #tpu.memory_space<vmem>>, vector<8x96xf32>
    %480 = vector.extract_strided_slice %479 {offsets = [0, 0], sizes = [1, 32], strides = [1, 1]} : vector<8x96xf32> to vector<1x32xf32>
    %481 = vector.extract_strided_slice %479 {offsets = [1, 0], sizes = [1, 32], strides = [1, 1]} : vector<8x96xf32> to vector<1x32xf32>
    %482 = vector.extract_strided_slice %479 {offsets = [2, 0], sizes = [1, 32], strides = [1, 1]} : vector<8x96xf32> to vector<1x32xf32>
    %483 = vector.extract_strided_slice %479 {offsets = [3, 0], sizes = [1, 16], strides = [1, 1]} : vector<8x96xf32> to vector<1x16xf32>
    %484 = vector.extract_strided_slice %479 {offsets = [4, 0], sizes = [1, 1], strides = [1, 1]} : vector<8x96xf32> to vector<1x1xf32>
    %cst_152 = arith.constant dense<0.000000e+00> : vector<8xf32>
    %485 = vector.multi_reduction <add>, %478, %cst_152 [1] : vector<8x32xf32> to vector<8xf32>
    %486 = vector.shape_cast %485 : vector<8xf32> to vector<8x1xf32>
    %cst_153 = arith.constant 3.200000e+01 : f32
    %487 = vector.broadcast %cst_153 : f32 to vector<8x1xf32>
    %488 = arith.divf %486, %487 : vector<8x1xf32>
    %489 = vector.broadcast %488 : vector<8x1xf32> to vector<8x32xf32>
    %490 = arith.subf %478, %489 : vector<8x32xf32>
    %491 = arith.mulf %490, %490 : vector<8x32xf32>
    %cst_154 = arith.constant dense<0.000000e+00> : vector<8xf32>
    %492 = vector.multi_reduction <add>, %491, %cst_154 [1] : vector<8x32xf32> to vector<8xf32>
    %493 = vector.shape_cast %492 : vector<8xf32> to vector<8x1xf32>
    %cst_155 = arith.constant 3.200000e+01 : f32
    %494 = vector.broadcast %cst_155 : f32 to vector<8x1xf32>
    %495 = arith.divf %493, %494 : vector<8x1xf32>
    %496 = vector.broadcast %488 : vector<8x1xf32> to vector<8x32xf32>
    %497 = arith.subf %478, %496 : vector<8x32xf32>
    %cst_156 = arith.constant 9.99999974E-6 : f32
    %498 = vector.broadcast %cst_156 : f32 to vector<8x1xf32>
    %499 = arith.addf %495, %498 : vector<8x1xf32>
    %500 = math.rsqrt %499 : vector<8x1xf32>
    %501 = vector.broadcast %500 : vector<8x1xf32> to vector<8x32xf32>
    %502 = arith.mulf %497, %501 : vector<8x32xf32>
    %503 = vector.broadcast %480 : vector<1x32xf32> to vector<8x32xf32>
    %504 = arith.mulf %502, %503 : vector<8x32xf32>
    %505 = vector.broadcast %481 : vector<1x32xf32> to vector<8x32xf32>
    %506 = arith.addf %504, %505 : vector<8x32xf32>
    %507 = vector.broadcast %2 : vector<8x1xf32> to vector<8x32xf32>
    %508 = arith.mulf %506, %507 : vector<8x32xf32>
    %509 = vector.broadcast %483 : vector<1x16xf32> to vector<8x16xf32>
    %510 = arith.mulf %262, %509 : vector<8x16xf32>
    %cst_157 = arith.constant dense<0.000000e+00> : vector<8xf32>
    %511 = vector.multi_reduction <add>, %510, %cst_157 [1] : vector<8x16xf32> to vector<8xf32>
    %512 = vector.shape_cast %511 : vector<8xf32> to vector<8x1xf32>
    %513 = vector.broadcast %482 : vector<1x32xf32> to vector<8x32xf32>
    %514 = arith.mulf %508, %513 : vector<8x32xf32>
    %cst_158 = arith.constant dense<0.000000e+00> : vector<8xf32>
    %515 = vector.multi_reduction <add>, %514, %cst_158 [1] : vector<8x32xf32> to vector<8xf32>
    %516 = vector.shape_cast %515 : vector<8xf32> to vector<8x1xf32>
    %517 = arith.addf %512, %516 : vector<8x1xf32>
    %518 = vector.broadcast %484 : vector<1x1xf32> to vector<8x1xf32>
    %519 = arith.addf %517, %518 : vector<8x1xf32>
    %520 = arith.addf %3, %519 : vector<8x1xf32>
    %521 = arith.mulf %520, %2 : vector<8x1xf32>
    %522 = vector.shape_cast %521 : vector<8x1xf32> to vector<8x1xf32>
    %523 = vector.broadcast %522 : vector<8x1xf32> to vector<8x128xf32>
    %c0_159 = arith.constant 0 : index
    %c0_160 = arith.constant 0 : index
    %524 = vector.load %arg6[%c0_159, %c0_160] : memref<8x128xf32, #tpu.memory_space<vmem>>, vector<8x128xf32>
    tpu.vector_store %arg6[%c0_159, %c0_160], %523 {strides = array<i32>} : memref<8x128xf32, #tpu.memory_space<vmem>>, vector<8x128xf32>,
    return
  }
  func.func @transform_0(%arg0: i32) -> (i32, i32) {
    %c0_i32 = arith.constant 0 : i32
    %c0_i32_0 = arith.constant 0 : i32
    %c0_i32_1 = arith.constant 0 : i32
    return %c0_i32, %c0_i32_0 : i32, i32
  }
  func.func @transform_1(%arg0: i32) -> (i32, i32) {
    %c0_i32 = arith.constant 0 : i32
    %c0_i32_0 = arith.constant 0 : i32
    %c0_i32_1 = arith.constant 0 : i32
    return %c0_i32, %c0_i32_0 : i32, i32
  }
  func.func @transform_2(%arg0: i32) -> (i32, i32) {
    %c0_i32 = arith.constant 0 : i32
    %c0_i32_0 = arith.constant 0 : i32
    %c0_i32_1 = arith.constant 0 : i32
    return %c0_i32, %c0_i32_0 : i32, i32
  }
  func.func @transform_3(%arg0: i32) -> (i32, i32) {
    %c0_i32 = arith.constant 0 : i32
    %c0_i32_0 = arith.constant 0 : i32
    %c0_i32_1 = arith.constant 0 : i32
    return %c0_i32, %c0_i32_0 : i32, i32
  }
  func.func @transform_4(%arg0: i32) -> (i32, i32) {
    %c0_i32 = arith.constant 0 : i32
    %c0_i32_0 = arith.constant 0 : i32
    %c0_i32_1 = arith.constant 0 : i32
    return %c0_i32, %c0_i32_0 : i32, i32
  }
  func.func @transform_5(%arg0: i32) -> (i32, i32) {
    %c0_i32 = arith.constant 0 : i32
    %c0_i32_0 = arith.constant 0 : i32
    %c0_i32_1 = arith.constant 0 : i32
    return %c0_i32, %c0_i32_0 : i32, i32
  }
}

</mosaic_0001>

<llo_original>
// kernel: tile.8
$region0: #{tile.8}
  #allocation0 [shape = 's32[1]{0}', space=sflag, size = 0x4, scoped, tag = 'scoped memory for tile.8']
  %s0 = inlined_call_operand.vmem [shape: pred[8], index: 0, kind: input, shape index: {}]
  %s1 = inlined_call_operand.vmem [shape: pred[4,8], index: 1, kind: output, shape index: {}]
  // Predicated region
  $region2: #{tile.8} parent=0 // pred_check
    _
  $region3: #{tile.8} parent=0 // pred_check_branch
    %3 = sbr.rel (0) target = $region5
  $region4: #{tile.8} parent=0 // pred_region
    _
  $region5: #{tile.8} parent=0 // pred_fallthru
    _
  %v4 = vld [vmem:[%s0] ss:$0 sm:$0xff]
  %v6 = vshra.s32 %v4, 0
  %v7 = vand.u32 %v6, 255
  %v8 = vpack.c.b16 0, %v7
  %v9 = vpack.c.b8 0, %v8
  %11 = vst [vmem:[%s1] sm:$0x1] %v9

// kernel: forward.1
$region0: #{forward.1}
  #allocation0 [shape = 'u32[]', space=smem, size = 0x4, offset = 0x4, fixed_abs, tag = 'smem constant byte address 0x4 - core index']
  #allocation1 [shape = 'u32[144,128]{1,0:T(1,128)}', space=vmem, size = 0x12000, scoped, tag = 'internal scratch']
  %s0 = inlined_call_operand.vmem [shape: f32[128,1], index: 0, kind: input, shape index: {}]
  %s1 = inlined_call_operand.vmem [shape: f32[40,32], index: 1, kind: input, shape index: {}]
  %s2 = inlined_call_operand.vmem [shape: f32[144,128], index: 2, kind: input, shape index: {}]
  %s3 = inlined_call_operand.vmem [shape: f32[184,16], index: 3, kind: input, shape index: {}]
  %s4 = inlined_call_operand.vmem [shape: f32[368,96], index: 4, kind: input, shape index: {}]
  %s5 = inlined_call_operand.vmem [shape: f32[8,128], index: 5, kind: output, shape index: {}]
  %s6 = sld [smem:[#allocation0]]
  $region30: #{forward.1} parent=0
    _
  %s8 = ssub.s32 1, %s6
  %s9 = scalar_select 0, %s8, %s6
  // Predicated region
  $region2: #{forward.1} parent=0 // pred_check
    _
  $region3: #{forward.1} parent=0 // pred_check_branch
    %11 = sbr.rel (0) target = $region5
  $region4: #{forward.1} parent=0 // pred_region
    _
  $region5: #{forward.1} parent=0 // pred_fallthru
    _
  // Predicated region
  $region6: #{forward.1} parent=0 // pred_check
    _
  $region7: #{forward.1} parent=0 // pred_check_branch
    %13 = sbr.rel (0) target = $region9
  $region8: #{forward.1} parent=0 // pred_region
    _
  $region9: #{forward.1} parent=0 // pred_fallthru
    _
  // Predicated region
  $region10: #{forward.1} parent=0 // pred_check
    _
  $region11: #{forward.1} parent=0 // pred_check_branch
    %15 = sbr.rel (0) target = $region13
  $region12: #{forward.1} parent=0 // pred_region
    _
  $region13: #{forward.1} parent=0 // pred_fallthru
    _
  // Predicated region
  $region14: #{forward.1} parent=0 // pred_check
    _
  $region15: #{forward.1} parent=0 // pred_check_branch
    %17 = sbr.rel (0) target = $region17
  $region16: #{forward.1} parent=0 // pred_region
    _
  $region17: #{forward.1} parent=0 // pred_fallthru
    _
  // Predicated region
  $region18: #{forward.1} parent=0 // pred_check
    _
  $region19: #{forward.1} parent=0 // pred_check_branch
    %19 = sbr.rel (0) target = $region21
  $region20: #{forward.1} parent=0 // pred_region
    _
  $region21: #{forward.1} parent=0 // pred_fallthru
    _
  %v20 = vld [vmem:[%s1] sm:$0xff]
  %v21 = vld [vmem:[%s1 + $0x8] sm:$0xff]
  %v22 = vld [vmem:[%s1 + $0x10] sm:$0xff]
  %v23 = vld [vmem:[%s1 + $0x18] sm:$0xff]
  %v24 = vld [vmem:[%s1 + $0x20] sm:$0xff]
  %v25 = vld [vmem:[%s3] sm:$0xff]
  %v26 = vld [vmem:[%s3 + $0x8] sm:$0xff]
  %v27 = vld [vmem:[%s3 + $0x10] sm:$0xff]
  %v28 = vld [vmem:[%s3 + $0x18] sm:$0xff]
  %v29 = vld [vmem:[%s3 + $0x20] sm:$0xff]
  %v30 = vld [vmem:[%s3 + $0x28] sm:$0xff]
  %v31 = vld [vmem:[%s3 + $0x30] sm:$0xff]
  %v32 = vld [vmem:[%s3 + $0x38] sm:$0xff]
  %v33 = vld [vmem:[%s3 + $0x40] sm:$0xff]
  %v34 = vld [vmem:[%s3 + $0x48] sm:$0xff]
  %v35 = vld [vmem:[%s3 + $0x50] sm:$0xff]
  %v36 = vld [vmem:[%s3 + $0x58] sm:$0xff]
  %v37 = vld [vmem:[%s3 + $0x60] sm:$0xff]
  %v38 = vld [vmem:[%s3 + $0x68] sm:$0xff]
  %v39 = vld [vmem:[%s3 + $0x70] sm:$0xff]
  %v40 = vld [vmem:[%s3 + $0x78] sm:$0xff]
  %v41 = vld [vmem:[%s3 + $0x80] sm:$0xff]
  %v42 = vld [vmem:[%s3 + $0x88] sm:$0xff]
  %v43 = vld [vmem:[%s3 + $0x90] sm:$0xff]
  %v44 = vld [vmem:[%s3 + $0x98] sm:$0xff]
  %v45 = vld [vmem:[%s3 + $0xa0] sm:$0xff]
  %v46 = vld [vmem:[%s3 + $0xa8] sm:$0xff]
  %v47 = vld [vmem:[%s3 + $0xb0] sm:$0xff]
  %v48 = vld [vmem:[%s2] sm:$0xff]
  %v49 = vld [vmem:[%s2 + $0x8] sm:$0xff]
  %v50 = vld [vmem:[%s2 + $0x10] sm:$0xff]
  %v51 = vld [vmem:[%s2 + $0x18] sm:$0xff]
  %v52 = vld [vmem:[%s2 + $0x20] sm:$0xff]
  %v53 = vld [vmem:[%s2 + $0x28] sm:$0xff]
  %v54 = vld [vmem:[%s2 + $0x30] sm:$0xff]
  %v55 = vld [vmem:[%s2 + $0x38] sm:$0xff]
  %v56 = vld [vmem:[%s2 + $0x40] sm:$0xff]
  %v57 = vld [vmem:[%s2 + $0x48] sm:$0xff]
  %v58 = vld [vmem:[%s2 + $0x50] sm:$0xff]
  %v59 = vld [vmem:[%s2 + $0x58] sm:$0xff]
  %v60 = vld [vmem:[%s2 + $0x60] sm:$0xff]
  %v61 = vld [vmem:[%s2 + $0x68] sm:$0xff]
  %v62 = vld [vmem:[%s2 + $0x70] sm:$0xff]
  %v63 = vld [vmem:[%s2 + $0x78] sm:$0xff]
  %v64 = vld [vmem:[%s2 + $0x80] sm:$0xff]
  %v65 = vld [vmem:[%s2 + $0x88] sm:$0xff]
  %v66 = vld [vmem:[%s0] sm:$0xff]
  %v67 = vld [vmem:[%s0 + $0x8] sm:$0xff]
  %v68 = vld [vmem:[%s0 + $0x10] sm:$0xff]
  %v69 = vld [vmem:[%s0 + $0x18] sm:$0xff]
  %v70 = vld [vmem:[%s0 + $0x20] sm:$0xff]
  %v71 = vld [vmem:[%s0 + $0x28] sm:$0xff]
  %v72 = vld [vmem:[%s0 + $0x30] sm:$0xff]
  %v73 = vld [vmem:[%s0 + $0x38] sm:$0xff]
  %v74 = vld [vmem:[%s0 + $0x40] sm:$0xff]
  %v75 = vld [vmem:[%s0 + $0x48] sm:$0xff]
  %v76 = vld [vmem:[%s0 + $0x50] sm:$0xff]
  %v77 = vld [vmem:[%s0 + $0x58] sm:$0xff]
  %v78 = vld [vmem:[%s0 + $0x60] sm:$0xff]
  %v79 = vld [vmem:[%s0 + $0x68] sm:$0xff]
  %v80 = vld [vmem:[%s0 + $0x70] sm:$0xff]
  %v81 = vld [vmem:[%s0 + $0x78] sm:$0xff]
  %83 = vset.pattern.permute.xlu0 0
  %84 = vperm.xlu0 %83, %v66
  %v85 = vpop.permute.xlu0 %84
  %88 = vset.pattern.permute.xlu0 0
  %89 = vperm.xlu0 %88, %v67
  %v90 = vpop.permute.xlu0 %89
  %93 = vset.pattern.permute.xlu0 0
  %94 = vperm.xlu0 %93, %v68
  %v95 = vpop.permute.xlu0 %94
  %98 = vset.pattern.permute.xlu0 0
  %99 = vperm.xlu0 %98, %v69
  %v100 = vpop.permute.xlu0 %99
  %103 = vset.pattern.permute.xlu0 0
  %104 = vperm.xlu0 %103, %v70
  %v105 = vpop.permute.xlu0 %104
  %108 = vset.pattern.permute.xlu0 0
  %109 = vperm.xlu0 %108, %v71
  %v110 = vpop.permute.xlu0 %109
  %113 = vset.pattern.permute.xlu0 0
  %114 = vperm.xlu0 %113, %v72
  %v115 = vpop.permute.xlu0 %114
  %118 = vset.pattern.permute.xlu0 0
  %119 = vperm.xlu0 %118, %v73
  %v120 = vpop.permute.xlu0 %119
  %123 = vset.pattern.permute.xlu0 0
  %124 = vperm.xlu0 %123, %v74
  %v125 = vpop.permute.xlu0 %124
  %128 = vset.pattern.permute.xlu0 0
  %129 = vperm.xlu0 %128, %v75
  %v130 = vpop.permute.xlu0 %129
  %133 = vset.pattern.permute.xlu0 0
  %134 = vperm.xlu0 %133, %v76
  %v135 = vpop.permute.xlu0 %134
  %138 = vset.pattern.permute.xlu0 0
  %139 = vperm.xlu0 %138, %v77
  %v140 = vpop.permute.xlu0 %139
  %143 = vset.pattern.permute.xlu0 0
  %144 = vperm.xlu0 %143, %v78
  %v145 = vpop.permute.xlu0 %144
  %148 = vset.pattern.permute.xlu0 0
  %149 = vperm.xlu0 %148, %v79
  %v150 = vpop.permute.xlu0 %149
  %153 = vset.pattern.permute.xlu0 0
  %154 = vperm.xlu0 %153, %v80
  %v155 = vpop.permute.xlu0 %154
  %158 = vset.pattern.permute.xlu0 0
  %159 = vperm.xlu0 %158, %v81
  %v160 = vpop.permute.xlu0 %159
  %v162 = vlaneseq
  %v163 = vshrl.u32 %v162, 7
  %v164 = vsub.s32 7, %v163
  %v165 = vrot.slane %v47, %v164
  %v166 = vmul.f32 %v85, %v165
  %v167 = vmul.f32 %v90, %v165
  %v168 = vmul.f32 %v95, %v165
  %v169 = vmul.f32 %v100, %v165
  %v170 = vmul.f32 %v105, %v165
  %v171 = vmul.f32 %v110, %v165
  %v172 = vmul.f32 %v115, %v165
  %v173 = vmul.f32 %v120, %v165
  %v174 = vmul.f32 %v125, %v165
  %v175 = vmul.f32 %v130, %v165
  %v176 = vmul.f32 %v135, %v165
  %v177 = vmul.f32 %v140, %v165
  %v178 = vmul.f32 %v145, %v165
  %v179 = vmul.f32 %v150, %v165
  %v180 = vmul.f32 %v155, %v165
  %v181 = vmul.f32 %v160, %v165
  %v182 = vadd.f32 %v166, %v48
  %v183 = vadd.f32 %v167, %v49
  %v184 = vadd.f32 %v168, %v50
  %v185 = vadd.f32 %v169, %v51
  %v186 = vadd.f32 %v170, %v52
  %v187 = vadd.f32 %v171, %v53
  %v188 = vadd.f32 %v172, %v54
  %v189 = vadd.f32 %v173, %v55
  %v190 = vadd.f32 %v174, %v56
  %v191 = vadd.f32 %v175, %v57
  %v192 = vadd.f32 %v176, %v58
  %v193 = vadd.f32 %v177, %v59
  %v194 = vadd.f32 %v178, %v60
  %v195 = vadd.f32 %v179, %v61
  %v196 = vadd.f32 %v180, %v62
  %v197 = vadd.f32 %v181, %v63
  %v198 = vrot.slane %v182, 6
  %v199 = vrot.slane %v183, 6
  %v200 = vrot.slane %v184, 6
  %v201 = vrot.slane %v185, 6
  %v202 = vrot.slane %v186, 6
  %v203 = vrot.slane %v187, 6
  %v204 = vrot.slane %v188, 6
  %v205 = vrot.slane %v189, 6
  %v206 = vrot.slane %v190, 6
  %v207 = vrot.slane %v191, 6
  %v208 = vrot.slane %v192, 6
  %v209 = vrot.slane %v193, 6
  %v210 = vrot.slane %v194, 6
  %v211 = vrot.slane %v195, 6
  %v212 = vrot.slane %v196, 6
  %v213 = vrot.slane %v197, 6
  %v214 = vlaneseq
  %v215 = vshrl.u32 %v214, 7
  %vm216 = vcmp.lt.s32.totalorder %v215, 2
  %v217 = vsel %vm216, %v212, %v213
  %v218 = vsel %vm216, %v211, %v212
  %v219 = vsel %vm216, %v210, %v211
  %v220 = vsel %vm216, %v209, %v210
  %v221 = vsel %vm216, %v208, %v209
  %v222 = vsel %vm216, %v207, %v208
  %v223 = vsel %vm216, %v206, %v207
  %v224 = vsel %vm216, %v205, %v206
  %v225 = vsel %vm216, %v204, %v205
  %v226 = vsel %vm216, %v203, %v204
  %v227 = vsel %vm216, %v202, %v203
  %v228 = vsel %vm216, %v201, %v202
  %v229 = vsel %vm216, %v200, %v201
  %v230 = vsel %vm216, %v199, %v200
  %v231 = vsel %vm216, %v198, %v199
  %v232 = vsel %vm216, %v213, %v198
  %v233 = vadd.s32 %v215, 8
  %v234 = vadd.s32 %v215, 16
  %v235 = vadd.s32 %v215, 24
  %v236 = vadd.s32 %v215, 32
  %v237 = vadd.s32 %v215, 40
  %v238 = vadd.s32 %v215, 48
  %v239 = vadd.s32 %v215, 56
  %v240 = vadd.s32 %v215, 64
  %v241 = vadd.s32 %v215, 72
  %v242 = vadd.s32 %v215, 80
  %v243 = vadd.s32 %v215, 88
  %v244 = vadd.s32 %v215, 96
  %v245 = vadd.s32 %v215, 104
  %v246 = vadd.s32 %v215, 112
  %v247 = vadd.s32 %v215, 120
  %vm248 = vcmp.lt.s32.totalorder %v215, 0
  %v249 = vsub.s32 0, %v215
  %v250 = vsel %vm248, %v249, %v215
  %v251 = vshrl.u32 %v250, 4
  %v252 = vand.u32 %v250, 15
  %v253 = vsub.s32 0, %v252
  %v254 = vsel %vm248, %v253, %v252
  %vm255 = vcmp.lt.s32.totalorder %v233, 0
  %v256 = vsub.s32 0, %v233
  %v257 = vsel %vm255, %v256, %v233
  %v258 = vshrl.u32 %v257, 4
  %v259 = vand.u32 %v257, 15
  %v260 = vsub.s32 0, %v259
  %v261 = vsel %vm255, %v260, %v259
  %vm262 = vcmp.lt.s32.totalorder %v234, 0
  %v263 = vsub.s32 0, %v234
  %v264 = vsel %vm262, %v263, %v234
  %v265 = vshrl.u32 %v264, 4
  %v266 = vand.u32 %v264, 15
  %v267 = vsub.s32 0, %v266
  %v268 = vsel %vm262, %v267, %v266
  %vm269 = vcmp.lt.s32.totalorder %v235, 0
  %v270 = vsub.s32 0, %v235
  %v271 = vsel %vm269, %v270, %v235
  %v272 = vshrl.u32 %v271, 4
  %v273 = vand.u32 %v271, 15
  %v274 = vsub.s32 0, %v273
  %v275 = vsel %vm269, %v274, %v273
  %vm276 = vcmp.lt.s32.totalorder %v236, 0
  %v277 = vsub.s32 0, %v236
  %v278 = vsel %vm276, %v277, %v236
  %v279 = vshrl.u32 %v278, 4
  %v280 = vand.u32 %v278, 15
  %v281 = vsub.s32 0, %v280
  %v282 = vsel %vm276, %v281, %v280
  %vm283 = vcmp.lt.s32.totalorder %v237, 0
  %v284 = vsub.s32 0, %v237
  %v285 = vsel %vm283, %v284, %v237
  %v286 = vshrl.u32 %v285, 4
  %v287 = vand.u32 %v285, 15
  %v288 = vsub.s32 0, %v287
  %v289 = vsel %vm283, %v288, %v287
  %vm290 = vcmp.lt.s32.totalorder %v238, 0
  %v291 = vsub.s32 0, %v238
  %v292 = vsel %vm290, %v291, %v238
  %v293 = vshrl.u32 %v292, 4
  %v294 = vand.u32 %v292, 15
  %v295 = vsub.s32 0, %v294
  %v296 = vsel %vm290, %v295, %v294
  %vm297 = vcmp.lt.s32.totalorder %v239, 0
  %v298 = vsub.s32 0, %v239
  %v299 = vsel %vm297, %v298, %v239
  %v300 = vshrl.u32 %v299, 4
  %v301 = vand.u32 %v299, 15
  %v302 = vsub.s32 0, %v301
  %v303 = vsel %vm297, %v302, %v301
  %vm304 = vcmp.lt.s32.totalorder %v240, 0
  %v305 = vsub.s32 0, %v240
  %v306 = vsel %vm304, %v305, %v240
  %v307 = vshrl.u32 %v306, 4
  %v308 = vand.u32 %v306, 15
  %v309 = vsub.s32 0, %v308
  %v310 = vsel %vm304, %v309, %v308
  %vm311 = vcmp.lt.s32.totalorder %v241, 0
  %v312 = vsub.s32 0, %v241
  %v313 = vsel %vm311, %v312, %v241
  %v314 = vshrl.u32 %v313, 4
  %v315 = vand.u32 %v313, 15
  %v316 = vsub.s32 0, %v315
  %v317 = vsel %vm311, %v316, %v315
  %vm318 = vcmp.lt.s32.totalorder %v242, 0
  %v319 = vsub.s32 0, %v242
  %v320 = vsel %vm318, %v319, %v242
  %v321 = vshrl.u32 %v320, 4
  %v322 = vand.u32 %v320, 15
  %v323 = vsub.s32 0, %v322
  %v324 = vsel %vm318, %v323, %v322
  %vm325 = vcmp.lt.s32.totalorder %v243, 0
  %v326 = vsub.s32 0, %v243
  %v327 = vsel %vm325, %v326, %v243
  %v328 = vshrl.u32 %v327, 4
  %v329 = vand.u32 %v327, 15
  %v330 = vsub.s32 0, %v329
  %v331 = vsel %vm325, %v330, %v329
  %vm332 = vcmp.lt.s32.totalorder %v244, 0
  %v333 = vsub.s32 0, %v244
  %v334 = vsel %vm332, %v333, %v244
  %v335 = vshrl.u32 %v334, 4
  %v336 = vand.u32 %v334, 15
  %v337 = vsub.s32 0, %v336
  %v338 = vsel %vm332, %v337, %v336
  %vm339 = vcmp.lt.s32.totalorder %v245, 0
  %v340 = vsub.s32 0, %v245
  %v341 = vsel %vm339, %v340, %v245
  %v342 = vshrl.u32 %v341, 4
  %v343 = vand.u32 %v341, 15
  %v344 = vsub.s32 0, %v343
  %v345 = vsel %vm339, %v344, %v343
  %vm346 = vcmp.lt.s32.totalorder %v246, 0
  %v347 = vsub.s32 0, %v246
  %v348 = vsel %vm346, %v347, %v246
  %v349 = vshrl.u32 %v348, 4
  %v350 = vand.u32 %v348, 15
  %v351 = vsub.s32 0, %v350
  %v352 = vsel %vm346, %v351, %v350
  %vm353 = vcmp.lt.s32.totalorder %v247, 0
  %v354 = vsub.s32 0, %v247
  %v355 = vsel %vm353, %v354, %v247
  %v356 = vshrl.u32 %v355, 4
  %v357 = vand.u32 %v355, 15
  %v358 = vsub.s32 0, %v357
  %v359 = vsel %vm353, %v358, %v357
  %vm360 = vcmp.ne.s32.totalorder %v254, 0
  %vm361 = vcmp.ne.s32.totalorder %v261, 0
  %vm362 = vcmp.ne.s32.totalorder %v268, 0
  %vm363 = vcmp.ne.s32.totalorder %v275, 0
  %vm364 = vcmp.ne.s32.totalorder %v282, 0
  %vm365 = vcmp.ne.s32.totalorder %v289, 0
  %vm366 = vcmp.ne.s32.totalorder %v296, 0
  %vm367 = vcmp.ne.s32.totalorder %v303, 0
  %vm368 = vcmp.ne.s32.totalorder %v310, 0
  %vm369 = vcmp.ne.s32.totalorder %v317, 0
  %vm370 = vcmp.ne.s32.totalorder %v324, 0
  %vm371 = vcmp.ne.s32.totalorder %v331, 0
  %vm372 = vcmp.ne.s32.totalorder %v338, 0
  %vm373 = vcmp.ne.s32.totalorder %v345, 0
  %vm374 = vcmp.ne.s32.totalorder %v352, 0
  %vm375 = vcmp.ne.s32.totalorder %v359, 0
  %vm376 = vcmp.lt.s32.totalorder %v254, 0
  %vm377 = vcmp.lt.s32.totalorder %v261, 0
  %vm378 = vcmp.lt.s32.totalorder %v268, 0
  %vm379 = vcmp.lt.s32.totalorder %v275, 0
  %vm380 = vcmp.lt.s32.totalorder %v282, 0
  %vm381 = vcmp.lt.s32.totalorder %v289, 0
  %vm382 = vcmp.lt.s32.totalorder %v296, 0
  %vm383 = vcmp.lt.s32.totalorder %v303, 0
  %vm384 = vcmp.lt.s32.totalorder %v310, 0
  %vm385 = vcmp.lt.s32.totalorder %v317, 0
  %vm386 = vcmp.lt.s32.totalorder %v324, 0
  %vm387 = vcmp.lt.s32.totalorder %v331, 0
  %vm388 = vcmp.lt.s32.totalorder %v338, 0
  %vm389 = vcmp.lt.s32.totalorder %v345, 0
  %vm390 = vcmp.lt.s32.totalorder %v352, 0
  %vm391 = vcmp.lt.s32.totalorder %v359, 0
  %vm392 = vmand %vm376, %vm360
  %vm393 = vmand %vm377, %vm361
  %vm394 = vmand %vm378, %vm362
  %vm395 = vmand %vm379, %vm363
  %vm396 = vmand %vm380, %vm364
  %vm397 = vmand %vm381, %vm365
  %vm398 = vmand %vm382, %vm366
  %vm399 = vmand %vm383, %vm367
  %vm400 = vmand %vm384, %vm368
  %vm401 = vmand %vm385, %vm369
  %vm402 = vmand %vm386, %vm370
  %vm403 = vmand %vm387, %vm371
  %vm404 = vmand %vm388, %vm372
  %vm405 = vmand %vm389, %vm373
  %vm406 = vmand %vm390, %vm374
  %vm407 = vmand %vm391, %vm375
  %v408 = vadd.s32 %v254, 16
  %v409 = vadd.s32 %v261, 16
  %v410 = vadd.s32 %v268, 16
  %v411 = vadd.s32 %v275, 16
  %v412 = vadd.s32 %v282, 16
  %v413 = vadd.s32 %v289, 16
  %v414 = vadd.s32 %v296, 16
  %v415 = vadd.s32 %v303, 16
  %v416 = vadd.s32 %v310, 16
  %v417 = vadd.s32 %v317, 16
  %v418 = vadd.s32 %v324, 16
  %v419 = vadd.s32 %v331, 16
  %v420 = vadd.s32 %v338, 16
  %v421 = vadd.s32 %v345, 16
  %v422 = vadd.s32 %v352, 16
  %v423 = vadd.s32 %v359, 16
  %v424 = vsel %vm392, %v408, %v254
  %v425 = vsel %vm393, %v409, %v261
  %v426 = vsel %vm394, %v410, %v268
  %v427 = vsel %vm395, %v411, %v275
  %v428 = vsel %vm396, %v412, %v282
  %v429 = vsel %vm397, %v413, %v289
  %v430 = vsel %vm398, %v414, %v296
  %v431 = vsel %vm399, %v415, %v303
  %v432 = vsel %vm400, %v416, %v310
  %v433 = vsel %vm401, %v417, %v317
  %v434 = vsel %vm402, %v418, %v324
  %v435 = vsel %vm403, %v419, %v331
  %v436 = vsel %vm404, %v420, %v338
  %v437 = vsel %vm405, %v421, %v345
  %v438 = vsel %vm406, %v422, %v352
  %v439 = vsel %vm407, %v423, %v359
  %vm440 = vcmp.lt.s32.totalorder %v424, 2
  %vm441 = vcmp.lt.s32.totalorder %v425, 2
  %vm442 = vcmp.lt.s32.totalorder %v426, 2
  %vm443 = vcmp.lt.s32.totalorder %v427, 2
  %vm444 = vcmp.lt.s32.totalorder %v428, 2
  %vm445 = vcmp.lt.s32.totalorder %v429, 2
  %vm446 = vcmp.lt.s32.totalorder %v430, 2
  %vm447 = vcmp.lt.s32.totalorder %v431, 2
  %vm448 = vcmp.lt.s32.totalorder %v432, 2
  %vm449 = vcmp.lt.s32.totalorder %v433, 2
  %vm450 = vcmp.lt.s32.totalorder %v434, 2
  %vm451 = vcmp.lt.s32.totalorder %v435, 2
  %vm452 = vcmp.lt.s32.totalorder %v436, 2
  %vm453 = vcmp.lt.s32.totalorder %v437, 2
  %vm454 = vcmp.lt.s32.totalorder %v438, 2
  %vm455 = vcmp.lt.s32.totalorder %v439, 2
  %v456 = vsel %vm440, 0.0, %v232
  %v457 = vsel %vm441, 0.0, %v231
  %v458 = vsel %vm442, 0.0, %v230
  %v459 = vsel %vm443, 0.0, %v229
  %v460 = vsel %vm444, 0.0, %v228
  %v461 = vsel %vm445, 0.0, %v227
  %v462 = vsel %vm446, 0.0, %v226
  %v463 = vsel %vm447, 0.0, %v225
  %v464 = vsel %vm448, 0.0, %v224
  %v465 = vsel %vm449, 0.0, %v223
  %v466 = vsel %vm450, 0.0, %v222
  %v467 = vsel %vm451, 0.0, %v221
  %v468 = vsel %vm452, 0.0, %v220
  %v469 = vsel %vm453, 0.0, %v219
  %v470 = vsel %vm454, 0.0, %v218
  %v471 = vsel %vm455, 0.0, %v217
  %v472 = vrot.slane %v182, 7
  %v473 = vrot.slane %v183, 7
  %v474 = vrot.slane %v184, 7
  %v475 = vrot.slane %v185, 7
  %v476 = vrot.slane %v186, 7
  %v477 = vrot.slane %v187, 7
  %v478 = vrot.slane %v188, 7
  %v479 = vrot.slane %v189, 7
  %v480 = vrot.slane %v190, 7
  %v481 = vrot.slane %v191, 7
  %v482 = vrot.slane %v192, 7
  %v483 = vrot.slane %v193, 7
  %v484 = vrot.slane %v194, 7
  %v485 = vrot.slane %v195, 7
  %v486 = vrot.slane %v196, 7
  %v487 = vrot.slane %v197, 7
  %vm488 = vcmp.lt.s32.totalorder %v215, 1
  %v489 = vsel %vm488, %v486, %v487
  %v490 = vsel %vm488, %v485, %v486
  %v491 = vsel %vm488, %v484, %v485
  %v492 = vsel %vm488, %v483, %v484
  %v493 = vsel %vm488, %v482, %v483
  %v494 = vsel %vm488, %v481, %v482
  %v495 = vsel %vm488, %v480, %v481
  %v496 = vsel %vm488, %v479, %v480
  %v497 = vsel %vm488, %v478, %v479
  %v498 = vsel %vm488, %v477, %v478
  %v499 = vsel %vm488, %v476, %v477
  %v500 = vsel %vm488, %v475, %v476
  %v501 = vsel %vm488, %v474, %v475
  %v502 = vsel %vm488, %v473, %v474
  %v503 = vsel %vm488, %v472, %v473
  %v504 = vsel %vm488, %v487, %v472
  %vm505 = vcmp.lt.s32.totalorder %v424, 1
  %vm506 = vcmp.lt.s32.totalorder %v425, 1
  %vm507 = vcmp.lt.s32.totalorder %v426, 1
  %vm508 = vcmp.lt.s32.totalorder %v427, 1
  %vm509 = vcmp.lt.s32.totalorder %v428, 1
  %vm510 = vcmp.lt.s32.totalorder %v429, 1
  %vm511 = vcmp.lt.s32.totalorder %v430, 1
  %vm512 = vcmp.lt.s32.totalorder %v431, 1
  %vm513 = vcmp.lt.s32.totalorder %v432, 1
  %vm514 = vcmp.lt.s32.totalorder %v433, 1
  %vm515 = vcmp.lt.s32.totalorder %v434, 1
  %vm516 = vcmp.lt.s32.totalorder %v435, 1
  %vm517 = vcmp.lt.s32.totalorder %v436, 1
  %vm518 = vcmp.lt.s32.totalorder %v437, 1
  %vm519 = vcmp.lt.s32.totalorder %v438, 1
  %vm520 = vcmp.lt.s32.totalorder %v439, 1
  %v521 = vsel %vm505, 0.0, %v504
  %v522 = vsel %vm506, 0.0, %v503
  %v523 = vsel %vm507, 0.0, %v502
  %v524 = vsel %vm508, 0.0, %v501
  %v525 = vsel %vm509, 0.0, %v500
  %v526 = vsel %vm510, 0.0, %v499
  %v527 = vsel %vm511, 0.0, %v498
  %v528 = vsel %vm512, 0.0, %v497
  %v529 = vsel %vm513, 0.0, %v496
  %v530 = vsel %vm514, 0.0, %v495
  %v531 = vsel %vm515, 0.0, %v494
  %v532 = vsel %vm516, 0.0, %v493
  %v533 = vsel %vm517, 0.0, %v492
  %v534 = vsel %vm518, 0.0, %v491
  %v535 = vsel %vm519, 0.0, %v490
  %v536 = vsel %vm520, 0.0, %v489
  %553 = vrot.lane.b32.xlu0 %v521, 8
  %v554 = vpop.permute.xlu0 %553
  %555 = vrot.lane.b32.xlu0 %v522, 8
  %v556 = vpop.permute.xlu0 %555
  %557 = vrot.lane.b32.xlu0 %v523, 8
  %v558 = vpop.permute.xlu0 %557
  %559 = vrot.lane.b32.xlu0 %v524, 8
  %v560 = vpop.permute.xlu0 %559
  %561 = vrot.lane.b32.xlu0 %v525, 8
  %v562 = vpop.permute.xlu0 %561
  %563 = vrot.lane.b32.xlu0 %v526, 8
  %v564 = vpop.permute.xlu0 %563
  %565 = vrot.lane.b32.xlu0 %v527, 8
  %v566 = vpop.permute.xlu0 %565
  %567 = vrot.lane.b32.xlu0 %v528, 8
  %v568 = vpop.permute.xlu0 %567
  %569 = vrot.lane.b32.xlu0 %v529, 8
  %v570 = vpop.permute.xlu0 %569
  %571 = vrot.lane.b32.xlu0 %v530, 8
  %v572 = vpop.permute.xlu0 %571
  %573 = vrot.lane.b32.xlu0 %v531, 8
  %v574 = vpop.permute.xlu0 %573
  %575 = vrot.lane.b32.xlu0 %v532, 8
  %v576 = vpop.permute.xlu0 %575
  %577 = vrot.lane.b32.xlu0 %v533, 8
  %v578 = vpop.permute.xlu0 %577
  %579 = vrot.lane.b32.xlu0 %v534, 8
  %v580 = vpop.permute.xlu0 %579
  %581 = vrot.lane.b32.xlu0 %v535, 8
  %v582 = vpop.permute.xlu0 %581
  %583 = vrot.lane.b32.xlu0 %v536, 8
  %v584 = vpop.permute.xlu0 %583
  %617 = vrot.lane.b32.xlu0 %v182, 16
  %v618 = vpop.permute.xlu0 %617
  %619 = vrot.lane.b32.xlu0 %v183, 16
  %v620 = vpop.permute.xlu0 %619
  %621 = vrot.lane.b32.xlu0 %v184, 16
  %v622 = vpop.permute.xlu0 %621
  %623 = vrot.lane.b32.xlu0 %v185, 16
  %v624 = vpop.permute.xlu0 %623
  %625 = vrot.lane.b32.xlu0 %v186, 16
  %v626 = vpop.permute.xlu0 %625
  %627 = vrot.lane.b32.xlu0 %v187, 16
  %v628 = vpop.permute.xlu0 %627
  %629 = vrot.lane.b32.xlu0 %v188, 16
  %v630 = vpop.permute.xlu0 %629
  %631 = vrot.lane.b32.xlu0 %v189, 16
  %v632 = vpop.permute.xlu0 %631
  %633 = vrot.lane.b32.xlu0 %v190, 16
  %v634 = vpop.permute.xlu0 %633
  %635 = vrot.lane.b32.xlu0 %v191, 16
  %v636 = vpop.permute.xlu0 %635
  %637 = vrot.lane.b32.xlu0 %v192, 16
  %v638 = vpop.permute.xlu0 %637
  %639 = vrot.lane.b32.xlu0 %v193, 16
  %v640 = vpop.permute.xlu0 %639
  %641 = vrot.lane.b32.xlu0 %v194, 16
  %v642 = vpop.permute.xlu0 %641
  %643 = vrot.lane.b32.xlu0 %v195, 16
  %v644 = vpop.permute.xlu0 %643
  %645 = vrot.lane.b32.xlu0 %v196, 16
  %v646 = vpop.permute.xlu0 %645
  %647 = vrot.lane.b32.xlu0 %v197, 16
  %v648 = vpop.permute.xlu0 %647
  %vm665 = vcmask 64512
  %v666 = vsel %vm665, %v456, %v554
  %v667 = vsel %vm665, %v457, %v556
  %v668 = vsel %vm665, %v458, %v558
  %v669 = vsel %vm665, %v459, %v560
  %v670 = vsel %vm665, %v460, %v562
  %v671 = vsel %vm665, %v461, %v564
  %v672 = vsel %vm665, %v462, %v566
  %v673 = vsel %vm665, %v463, %v568
  %v674 = vsel %vm665, %v464, %v570
  %v675 = vsel %vm665, %v465, %v572
  %v676 = vsel %vm665, %v466, %v574
  %v677 = vsel %vm665, %v467, %v576
  %v678 = vsel %vm665, %v468, %v578
  %v679 = vsel %vm665, %v469, %v580
  %v680 = vsel %vm665, %v470, %v582
  %v681 = vsel %vm665, %v471, %v584
  %vm682 = vcmask 130048
  %v683 = vsel %vm682, %v666, %v618
  %v684 = vsel %vm682, %v667, %v620
  %v685 = vsel %vm682, %v668, %v622
  %v686 = vsel %vm682, %v669, %v624
  %v687 = vsel %vm682, %v670, %v626
  %v688 = vsel %vm682, %v671, %v628
  %v689 = vsel %vm682, %v672, %v630
  %v690 = vsel %vm682, %v673, %v632
  %v691 = vsel %vm682, %v674, %v634
  %v692 = vsel %vm682, %v675, %v636
  %v693 = vsel %vm682, %v676, %v638
  %v694 = vsel %vm682, %v677, %v640
  %v695 = vsel %vm682, %v678, %v642
  %v696 = vsel %vm682, %v679, %v644
  %v697 = vsel %vm682, %v680, %v646
  %v698 = vsel %vm682, %v681, %v648
  %v699 = vlaneseq
  %v700 = vshrl.u32 %v699, 7
  %v701 = vsub.s32 0, %v700
  %v702 = vrot.slane %v47, %v701
  %vm703 = vcmask 195584
  %v705 = vsel %vm703, %v683, 0
  %v708 = vsel %vm703, %v684, 0
  %v711 = vsel %vm703, %v685, 0
  %v714 = vsel %vm703, %v686, 0
  %v717 = vsel %vm703, %v687, 0
  %v720 = vsel %vm703, %v688, 0
  %v723 = vsel %vm703, %v689, 0
  %v726 = vsel %vm703, %v690, 0
  %v729 = vsel %vm703, %v691, 0
  %v732 = vsel %vm703, %v692, 0
  %v735 = vsel %vm703, %v693, 0
  %v738 = vsel %vm703, %v694, 0
  %v741 = vsel %vm703, %v695, 0
  %v744 = vsel %vm703, %v696, 0
  %v747 = vsel %vm703, %v697, 0
  %v750 = vsel %vm703, %v698, 0
  %752 = vmatprep.subr.mxu0 0.0
  %753 = vmatpush1.msra.mxu0 %v25
  %754 = vmatprep.subr.mxu0 0.0
  %755 = vmatpush1.msra.mxu0 %v26
  %756 = vmatprep.subr.mxu0 0.0
  %757 = vmatpush1.msra.mxu0 %v27
  %758 = vmatprep.subr.mxu0 0.0
  %759 = vmatpush1.msra.mxu0 0.0
  %760 = vmatprep.subr.mxu0 0.0
  %761 = vmatpush1.msra.mxu0 0.0
  %762 = vmatprep.subr.mxu0 0.0
  %763 = vmatpush1.msra.mxu0 0.0
  %764 = vmatprep.subr.mxu0 0.0
  %765 = vmatpush1.msra.mxu0 0.0
  %766 = vmatprep.subr.mxu0 0.0
  %767 = vmatpush1.msra.mxu0 0.0
  %768 = vmatprep.subr.mxu0 0.0
  %769 = vmatpush1.msra.mxu0 0.0
  %770 = vmatprep.subr.mxu0 0.0
  %771 = vmatpush1.msra.mxu0 0.0
  %772 = vmatprep.subr.mxu0 0.0
  %773 = vmatpush1.msra.mxu0 0.0
  %774 = vmatprep.subr.mxu0 0.0
  %775 = vmatpush1.msra.mxu0 0.0
  %776 = vmatprep.subr.mxu0 0.0
  %777 = vmatpush1.msra.mxu0 0.0
  %778 = vmatprep.subr.mxu0 0.0
  %779 = vmatpush1.msra.mxu0 0.0
  %780 = vmatprep.subr.mxu0 0.0
  %781 = vmatpush1.msra.mxu0 0.0
  %782 = vmatprep.subr.mxu0 0.0
  %783 = vmatpush1.msra.mxu0 0.0
  %784 = vmatprep.subr.mxu0 0.0
  %785 = vmatpush1.msra.mxu0 0.0
  %786 = vmatprep.subr.mxu0 0.0
  %787 = vmatpush1.msra.mxu0 0.0
  %788 = vmatprep.subr.mxu0 0.0
  %789 = vmatpush1.msra.mxu0 0.0
  %790 = vmatprep.subr.mxu0 0.0
  %791 = vmatpush1.msra.mxu0 0.0
  %792 = vmatprep.subr.mxu0 0.0
  %793 = vmatpush1.msra.mxu0 0.0
  %794 = vmatprep.subr.mxu0 0.0
  %795 = vmatpush1.msra.mxu0 0.0
  %796 = vmatprep.subr.mxu0 0.0
  %797 = vmatpush1.msra.mxu0 0.0
  %798 = vmatprep.subr.mxu0 0.0
  %799 = vmatpush1.msra.mxu0 0.0
  %800 = vmatprep.subr.mxu0 0.0
  %801 = vmatpush1.msra.mxu0 0.0
  %802 = vmatprep.subr.mxu0 0.0
  %803 = vmatpush1.msra.mxu0 0.0
  %804 = vmatprep.subr.mxu0 0.0
  %805 = vmatpush1.msra.mxu0 0.0
  %806 = vmatprep.subr.mxu0 0.0
  %807 = vmatpush1.msra.mxu0 0.0
  %808 = vmatprep.subr.mxu0 0.0
  %809 = vmatpush1.msra.mxu0 0.0
  %810 = vmatprep.subr.mxu0 0.0
  %811 = vmatpush1.msra.mxu0 0.0
  %812 = vmatprep.subr.mxu0 0.0
  %813 = vmatpush1.msra.mxu0 0.0
  %814 = vmatprep.subr.mxu0 0.0
  %815 = vmatpush1.msra.mxu0 0.0
  %816 = vmatprep.mubr.f32.mxu0 0.0
  %817 = vmatmul.mubr.f32.gmra.mrb[0].mxu0 %v705
  %v818 = vpop.f32.mrb[0].mxu0
  %v819 = vadd.f32 %v702, %v818
  %v820 = vpop.f32.mrb[0].mxu0
  %821 = vmatprep.mubr.f32.mxu0 0.0
  %822 = vmatmul.mubr.f32.gmra.mrb[0].mxu0 %v708
  %v823 = vpop.f32.mrb[0].mxu0
  %v824 = vadd.f32 %v702, %v823
  %v825 = vpop.f32.mrb[0].mxu0
  %826 = vmatprep.mubr.f32.mxu0 0.0
  %827 = vmatmul.mubr.f32.gmra.mrb[0].mxu0 %v711
  %v828 = vpop.f32.mrb[0].mxu0
  %v829 = vadd.f32 %v702, %v828
  %v830 = vpop.f32.mrb[0].mxu0
  %831 = vmatprep.mubr.f32.mxu0 0.0
  %832 = vmatmul.mubr.f32.gmra.mrb[0].mxu0 %v714
  %v833 = vpop.f32.mrb[0].mxu0
  %v834 = vadd.f32 %v702, %v833
  %v835 = vpop.f32.mrb[0].mxu0
  %836 = vmatprep.mubr.f32.mxu0 0.0
  %837 = vmatmul.mubr.f32.gmra.mrb[0].mxu0 %v717
  %v838 = vpop.f32.mrb[0].mxu0
  %v839 = vadd.f32 %v702, %v838
  %v840 = vpop.f32.mrb[0].mxu0
  %841 = vmatprep.mubr.f32.mxu0 0.0
  %842 = vmatmul.mubr.f32.gmra.mrb[0].mxu0 %v720
  %v843 = vpop.f32.mrb[0].mxu0
  %v844 = vadd.f32 %v702, %v843
  %v845 = vpop.f32.mrb[0].mxu0
  %846 = vmatprep.mubr.f32.mxu0 0.0
  %847 = vmatmul.mubr.f32.gmra.mrb[0].mxu0 %v723
  %v848 = vpop.f32.mrb[0].mxu0
  %v849 = vadd.f32 %v702, %v848
  %v850 = vpop.f32.mrb[0].mxu0
  %851 = vmatprep.mubr.f32.mxu0 0.0
  %852 = vmatmul.mubr.f32.gmra.mrb[0].mxu0 %v726
  %v853 = vpop.f32.mrb[0].mxu0
  %v854 = vadd.f32 %v702, %v853
  %v855 = vpop.f32.mrb[0].mxu0
  %856 = vmatprep.mubr.f32.mxu0 0.0
  %857 = vmatmul.mubr.f32.gmra.mrb[0].mxu0 %v729
  %v858 = vpop.f32.mrb[0].mxu0
  %v859 = vadd.f32 %v702, %v858
  %v860 = vpop.f32.mrb[0].mxu0
  %861 = vmatprep.mubr.f32.mxu0 0.0
  %862 = vmatmul.mubr.f32.gmra.mrb[0].mxu0 %v732
  %v863 = vpop.f32.mrb[0].mxu0
  %v864 = vadd.f32 %v702, %v863
  %v865 = vpop.f32.mrb[0].mxu0
  %866 = vmatprep.mubr.f32.mxu0 0.0
  %867 = vmatmul.mubr.f32.gmra.mrb[0].mxu0 %v735
  %v868 = vpop.f32.mrb[0].mxu0
  %v869 = vadd.f32 %v702, %v868
  %v870 = vpop.f32.mrb[0].mxu0
  %871 = vmatprep.mubr.f32.mxu0 0.0
  %872 = vmatmul.mubr.f32.gmra.mrb[0].mxu0 %v738
  %v873 = vpop.f32.mrb[0].mxu0
  %v874 = vadd.f32 %v702, %v873
  %v875 = vpop.f32.mrb[0].mxu0
  %876 = vmatprep.mubr.f32.mxu0 0.0
  %877 = vmatmul.mubr.f32.gmra.mrb[0].mxu0 %v741
  %v878 = vpop.f32.mrb[0].mxu0
  %v879 = vadd.f32 %v702, %v878
  %v880 = vpop.f32.mrb[0].mxu0
  %881 = vmatprep.mubr.f32.mxu0 0.0
  %882 = vmatmul.mubr.f32.gmra.mrb[0].mxu0 %v744
  %v883 = vpop.f32.mrb[0].mxu0
  %v884 = vadd.f32 %v702, %v883
  %v885 = vpop.f32.mrb[0].mxu0
  %886 = vmatprep.mubr.f32.mxu0 0.0
  %887 = vmatmul.mubr.f32.gmra.mrb[0].mxu0 %v747
  %v888 = vpop.f32.mrb[0].mxu0
  %v889 = vadd.f32 %v702, %v888
  %v890 = vpop.f32.mrb[0].mxu0
  %891 = vmatprep.mubr.f32.mxu0 0.0
  %892 = vmatmul.mubr.f32.gmra.mrb[0].mxu0 %v750
  %v893 = vpop.f32.mrb[0].mxu0
  %v894 = vadd.f32 %v702, %v893
  %v895 = vpop.f32.mrb[0].mxu0
  %896 = vdwg.mxu0
  %v897 = vmax.f32 %v819, 0.0
  %v898 = vmax.f32 %v824, 0.0
  %v899 = vmax.f32 %v829, 0.0
  %v900 = vmax.f32 %v834, 0.0
  %v901 = vmax.f32 %v839, 0.0
  %v902 = vmax.f32 %v844, 0.0
  %v903 = vmax.f32 %v849, 0.0
  %v904 = vmax.f32 %v854, 0.0
  %v905 = vmax.f32 %v859, 0.0
  %v906 = vmax.f32 %v864, 0.0
  %v907 = vmax.f32 %v869, 0.0
  %v908 = vmax.f32 %v874, 0.0
  %v909 = vmax.f32 %v879, 0.0
  %v910 = vmax.f32 %v884, 0.0
  %v911 = vmax.f32 %v889, 0.0
  %v912 = vmax.f32 %v894, 0.0
  %v913 = vrot.slane %v897, 6
  %v914 = vrot.slane %v898, 6
  %v915 = vrot.slane %v899, 6
  %v916 = vrot.slane %v900, 6
  %v917 = vrot.slane %v901, 6
  %v918 = vrot.slane %v902, 6
  %v919 = vrot.slane %v903, 6
  %v920 = vrot.slane %v904, 6
  %v921 = vrot.slane %v905, 6
  %v922 = vrot.slane %v906, 6
  %v923 = vrot.slane %v907, 6
  %v924 = vrot.slane %v908, 6
  %v925 = vrot.slane %v909, 6
  %v926 = vrot.slane %v910, 6
  %v927 = vrot.slane %v911, 6
  %v928 = vrot.slane %v912, 6
  %v929 = vsel %vm216, %v927, %v928
  %v930 = vsel %vm216, %v926, %v927
  %v931 = vsel %vm216, %v925, %v926
  %v932 = vsel %vm216, %v924, %v925
  %v933 = vsel %vm216, %v923, %v924
  %v934 = vsel %vm216, %v922, %v923
  %v935 = vsel %vm216, %v921, %v922
  %v936 = vsel %vm216, %v920, %v921
  %v937 = vsel %vm216, %v919, %v920
  %v938 = vsel %vm216, %v918, %v919
  %v939 = vsel %vm216, %v917, %v918
  %v940 = vsel %vm216, %v916, %v917
  %v941 = vsel %vm216, %v915, %v916
  %v942 = vsel %vm216, %v914, %v915
  %v943 = vsel %vm216, %v913, %v914
  %v944 = vsel %vm216, %v928, %v913
  %v945 = vsel %vm440, 0.0, %v944
  %v946 = vsel %vm441, 0.0, %v943
  %v947 = vsel %vm442, 0.0, %v942
  %v948 = vsel %vm443, 0.0, %v941
  %v949 = vsel %vm444, 0.0, %v940
  %v950 = vsel %vm445, 0.0, %v939
  %v951 = vsel %vm446, 0.0, %v938
  %v952 = vsel %vm447, 0.0, %v937
  %v953 = vsel %vm448, 0.0, %v936
  %v954 = vsel %vm449, 0.0, %v935
  %v955 = vsel %vm450, 0.0, %v934
  %v956 = vsel %vm451, 0.0, %v933
  %v957 = vsel %vm452, 0.0, %v932
  %v958 = vsel %vm453, 0.0, %v931
  %v959 = vsel %vm454, 0.0, %v930
  %v960 = vsel %vm455, 0.0, %v929
  %v961 = vrot.slane %v897, 7
  %v962 = vrot.slane %v898, 7
  %v963 = vrot.slane %v899, 7
  %v964 = vrot.slane %v900, 7
  %v965 = vrot.slane %v901, 7
  %v966 = vrot.slane %v902, 7
  %v967 = vrot.slane %v903, 7
  %v968 = vrot.slane %v904, 7
  %v969 = vrot.slane %v905, 7
  %v970 = vrot.slane %v906, 7
  %v971 = vrot.slane %v907, 7
  %v972 = vrot.slane %v908, 7
  %v973 = vrot.slane %v909, 7
  %v974 = vrot.slane %v910, 7
  %v975 = vrot.slane %v911, 7
  %v976 = vrot.slane %v912, 7
  %v977 = vsel %vm488, %v975, %v976
  %v978 = vsel %vm488, %v974, %v975
  %v979 = vsel %vm488, %v973, %v974
  %v980 = vsel %vm488, %v972, %v973
  %v981 = vsel %vm488, %v971, %v972
  %v982 = vsel %vm488, %v970, %v971
  %v983 = vsel %vm488, %v969, %v970
  %v984 = vsel %vm488, %v968, %v969
  %v985 = vsel %vm488, %v967, %v968
  %v986 = vsel %vm488, %v966, %v967
  %v987 = vsel %vm488, %v965, %v966
  %v988 = vsel %vm488, %v964, %v965
  %v989 = vsel %vm488, %v963, %v964
  %v990 = vsel %vm488, %v962, %v963
  %v991 = vsel %vm488, %v961, %v962
  %v992 = vsel %vm488, %v976, %v961
  %v993 = vsel %vm505, 0.0, %v992
  %v994 = vsel %vm506, 0.0, %v991
  %v995 = vsel %vm507, 0.0, %v990
  %v996 = vsel %vm508, 0.0, %v989
  %v997 = vsel %vm509, 0.0, %v988
  %v998 = vsel %vm510, 0.0, %v987
  %v999 = vsel %vm511, 0.0, %v986
  %v1000 = vsel %vm512, 0.0, %v985
  %v1001 = vsel %vm513, 0.0, %v984
  %v1002 = vsel %vm514, 0.0, %v983
  %v1003 = vsel %vm515, 0.0, %v982
  %v1004 = vsel %vm516, 0.0, %v981
  %v1005 = vsel %vm517, 0.0, %v980
  %v1006 = vsel %vm518, 0.0, %v979
  %v1007 = vsel %vm519, 0.0, %v978
  %v1008 = vsel %vm520, 0.0, %v977
  %1025 = vrot.lane.b32.xlu0 %v993, 16
  %v1026 = vpop.permute.xlu0 %1025
  %1027 = vrot.lane.b32.xlu0 %v994, 16
  %v1028 = vpop.permute.xlu0 %1027
  %1029 = vrot.lane.b32.xlu0 %v995, 16
  %v1030 = vpop.permute.xlu0 %1029
  %1031 = vrot.lane.b32.xlu0 %v996, 16
  %v1032 = vpop.permute.xlu0 %1031
  %1033 = vrot.lane.b32.xlu0 %v997, 16
  %v1034 = vpop.permute.xlu0 %1033
  %1035 = vrot.lane.b32.xlu0 %v998, 16
  %v1036 = vpop.permute.xlu0 %1035
  %1037 = vrot.lane.b32.xlu0 %v999, 16
  %v1038 = vpop.permute.xlu0 %1037
  %1039 = vrot.lane.b32.xlu0 %v1000, 16
  %v1040 = vpop.permute.xlu0 %1039
  %1041 = vrot.lane.b32.xlu0 %v1001, 16
  %v1042 = vpop.permute.xlu0 %1041
  %1043 = vrot.lane.b32.xlu0 %v1002, 16
  %v1044 = vpop.permute.xlu0 %1043
  %1045 = vrot.lane.b32.xlu0 %v1003, 16
  %v1046 = vpop.permute.xlu0 %1045
  %1047 = vrot.lane.b32.xlu0 %v1004, 16
  %v1048 = vpop.permute.xlu0 %1047
  %1049 = vrot.lane.b32.xlu0 %v1005, 16
  %v1050 = vpop.permute.xlu0 %1049
  %1051 = vrot.lane.b32.xlu0 %v1006, 16
  %v1052 = vpop.permute.xlu0 %1051
  %1053 = vrot.lane.b32.xlu0 %v1007, 16
  %v1054 = vpop.permute.xlu0 %1053
  %1055 = vrot.lane.b32.xlu0 %v1008, 16
  %v1056 = vpop.permute.xlu0 %1055
  %1089 = vrot.lane.b32.xlu0 %v897, 32
  %v1090 = vpop.permute.xlu0 %1089
  %1091 = vrot.lane.b32.xlu0 %v898, 32
  %v1092 = vpop.permute.xlu0 %1091
  %1093 = vrot.lane.b32.xlu0 %v899, 32
  %v1094 = vpop.permute.xlu0 %1093
  %1095 = vrot.lane.b32.xlu0 %v900, 32
  %v1096 = vpop.permute.xlu0 %1095
  %1097 = vrot.lane.b32.xlu0 %v901, 32
  %v1098 = vpop.permute.xlu0 %1097
  %1099 = vrot.lane.b32.xlu0 %v902, 32
  %v1100 = vpop.permute.xlu0 %1099
  %1101 = vrot.lane.b32.xlu0 %v903, 32
  %v1102 = vpop.permute.xlu0 %1101
  %1103 = vrot.lane.b32.xlu0 %v904, 32
  %v1104 = vpop.permute.xlu0 %1103
  %1105 = vrot.lane.b32.xlu0 %v905, 32
  %v1106 = vpop.permute.xlu0 %1105
  %1107 = vrot.lane.b32.xlu0 %v906, 32
  %v1108 = vpop.permute.xlu0 %1107
  %1109 = vrot.lane.b32.xlu0 %v907, 32
  %v1110 = vpop.permute.xlu0 %1109
  %1111 = vrot.lane.b32.xlu0 %v908, 32
  %v1112 = vpop.permute.xlu0 %1111
  %1113 = vrot.lane.b32.xlu0 %v909, 32
  %v1114 = vpop.permute.xlu0 %1113
  %1115 = vrot.lane.b32.xlu0 %v910, 32
  %v1116 = vpop.permute.xlu0 %1115
  %1117 = vrot.lane.b32.xlu0 %v911, 32
  %v1118 = vpop.permute.xlu0 %1117
  %1119 = vrot.lane.b32.xlu0 %v912, 32
  %v1120 = vpop.permute.xlu0 %1119
  %v1137 = vsel %vm682, %v945, %v1026
  %v1138 = vsel %vm682, %v946, %v1028
  %v1139 = vsel %vm682, %v947, %v1030
  %v1140 = vsel %vm682, %v948, %v1032
  %v1141 = vsel %vm682, %v949, %v1034
  %v1142 = vsel %vm682, %v950, %v1036
  %v1143 = vsel %vm682, %v951, %v1038
  %v1144 = vsel %vm682, %v952, %v1040
  %v1145 = vsel %vm682, %v953, %v1042
  %v1146 = vsel %vm682, %v954, %v1044
  %v1147 = vsel %vm682, %v955, %v1046
  %v1148 = vsel %vm682, %v956, %v1048
  %v1149 = vsel %vm682, %v957, %v1050
  %v1150 = vsel %vm682, %v958, %v1052
  %v1151 = vsel %vm682, %v959, %v1054
  %v1152 = vsel %vm682, %v960, %v1056
  %vm1153 = vcmask 261120
  %v1154 = vsel %vm1153, %v1137, %v1090
  %v1155 = vsel %vm1153, %v1138, %v1092
  %v1156 = vsel %vm1153, %v1139, %v1094
  %v1157 = vsel %vm1153, %v1140, %v1096
  %v1158 = vsel %vm1153, %v1141, %v1098
  %v1159 = vsel %vm1153, %v1142, %v1100
  %v1160 = vsel %vm1153, %v1143, %v1102
  %v1161 = vsel %vm1153, %v1144, %v1104
  %v1162 = vsel %vm1153, %v1145, %v1106
  %v1163 = vsel %vm1153, %v1146, %v1108
  %v1164 = vsel %vm1153, %v1147, %v1110
  %v1165 = vsel %vm1153, %v1148, %v1112
  %v1166 = vsel %vm1153, %v1149, %v1114
  %v1167 = vsel %vm1153, %v1150, %v1116
  %v1168 = vsel %vm1153, %v1151, %v1118
  %v1169 = vsel %vm1153, %v1152, %v1120
  %v1170 = vlaneseq
  %v1171 = vshrl.u32 %v1170, 7
  %v1172 = vsub.s32 1, %v1171
  %v1173 = vrot.slane %v47, %v1172
  %vm1174 = vcmask 392192
  %v1176 = vsel %vm1174, %v1154, 0
  %v1179 = vsel %vm1174, %v1155, 0
  %v1182 = vsel %vm1174, %v1156, 0
  %v1185 = vsel %vm1174, %v1157, 0
  %v1188 = vsel %vm1174, %v1158, 0
  %v1191 = vsel %vm1174, %v1159, 0
  %v1194 = vsel %vm1174, %v1160, 0
  %v1197 = vsel %vm1174, %v1161, 0
  %v1200 = vsel %vm1174, %v1162, 0
  %v1203 = vsel %vm1174, %v1163, 0
  %v1206 = vsel %vm1174, %v1164, 0
  %v1209 = vsel %vm1174, %v1165, 0
  %v1212 = vsel %vm1174, %v1166, 0
  %v1215 = vsel %vm1174, %v1167, 0
  %v1218 = vsel %vm1174, %v1168, 0
  %v1221 = vsel %vm1174, %v1169, 0
  %1223 = vmatprep.subr.mxu0 0.0
  %1224 = vmatpush1.msra.mxu0 %v28
  %1225 = vmatprep.subr.mxu0 0.0
  %1226 = vmatpush1.msra.mxu0 %v29
  %1227 = vmatprep.subr.mxu0 0.0
  %1228 = vmatpush1.msra.mxu0 %v30
  %1229 = vmatprep.subr.mxu0 0.0
  %1230 = vmatpush1.msra.mxu0 %v31
  %1231 = vmatprep.subr.mxu0 0.0
  %1232 = vmatpush1.msra.mxu0 %v32
  %1233 = vmatprep.subr.mxu0 0.0
  %1234 = vmatpush1.msra.mxu0 %v33
  %1235 = vmatprep.subr.mxu0 0.0
  %1236 = vmatpush1.msra.mxu0 0.0
  %1237 = vmatprep.subr.mxu0 0.0
  %1238 = vmatpush1.msra.mxu0 0.0
  %1239 = vmatprep.subr.mxu0 0.0
  %1240 = vmatpush1.msra.mxu0 0.0
  %1241 = vmatprep.subr.mxu0 0.0
  %1242 = vmatpush1.msra.mxu0 0.0
  %1243 = vmatprep.subr.mxu0 0.0
  %1244 = vmatpush1.msra.mxu0 0.0
  %1245 = vmatprep.subr.mxu0 0.0
  %1246 = vmatpush1.msra.mxu0 0.0
  %1247 = vmatprep.subr.mxu0 0.0
  %1248 = vmatpush1.msra.mxu0 0.0
  %1249 = vmatprep.subr.mxu0 0.0
  %1250 = vmatpush1.msra.mxu0 0.0
  %1251 = vmatprep.subr.mxu0 0.0
  %1252 = vmatpush1.msra.mxu0 0.0
  %1253 = vmatprep.subr.mxu0 0.0
  %1254 = vmatpush1.msra.mxu0 0.0
  %1255 = vmatprep.subr.mxu0 0.0
  %1256 = vmatpush1.msra.mxu0 0.0
  %1257 = vmatprep.subr.mxu0 0.0
  %1258 = vmatpush1.msra.mxu0 0.0
  %1259 = vmatprep.subr.mxu0 0.0
  %1260 = vmatpush1.msra.mxu0 0.0
  %1261 = vmatprep.subr.mxu0 0.0
  %1262 = vmatpush1.msra.mxu0 0.0
  %1263 = vmatprep.subr.mxu0 0.0
  %1264 = vmatpush1.msra.mxu0 0.0
  %1265 = vmatprep.subr.mxu0 0.0
  %1266 = vmatpush1.msra.mxu0 0.0
  %1267 = vmatprep.subr.mxu0 0.0
  %1268 = vmatpush1.msra.mxu0 0.0
  %1269 = vmatprep.subr.mxu0 0.0
  %1270 = vmatpush1.msra.mxu0 0.0
  %1271 = vmatprep.subr.mxu0 0.0
  %1272 = vmatpush1.msra.mxu0 0.0
  %1273 = vmatprep.subr.mxu0 0.0
  %1274 = vmatpush1.msra.mxu0 0.0
  %1275 = vmatprep.subr.mxu0 0.0
  %1276 = vmatpush1.msra.mxu0 0.0
  %1277 = vmatprep.subr.mxu0 0.0
  %1278 = vmatpush1.msra.mxu0 0.0
  %1279 = vmatprep.subr.mxu0 0.0
  %1280 = vmatpush1.msra.mxu0 0.0
  %1281 = vmatprep.subr.mxu0 0.0
  %1282 = vmatpush1.msra.mxu0 0.0
  %1283 = vmatprep.subr.mxu0 0.0
  %1284 = vmatpush1.msra.mxu0 0.0
  %1285 = vmatprep.subr.mxu0 0.0
  %1286 = vmatpush1.msra.mxu0 0.0
  %1287 = vmatprep.mubr.f32.mxu0 0.0
  %1288 = vmatmul.mubr.f32.gmra.mrb[0].mxu0 %v1176
  %v1289 = vpop.f32.mrb[0].mxu0
  %v1290 = vadd.f32 %v1173, %v1289
  %v1291 = vpop.f32.mrb[0].mxu0
  %1292 = vmatprep.mubr.f32.mxu0 0.0
  %1293 = vmatmul.mubr.f32.gmra.mrb[0].mxu0 %v1179
  %v1294 = vpop.f32.mrb[0].mxu0
  %v1295 = vadd.f32 %v1173, %v1294
  %v1296 = vpop.f32.mrb[0].mxu0
  %1297 = vmatprep.mubr.f32.mxu0 0.0
  %1298 = vmatmul.mubr.f32.gmra.mrb[0].mxu0 %v1182
  %v1299 = vpop.f32.mrb[0].mxu0
  %v1300 = vadd.f32 %v1173, %v1299
  %v1301 = vpop.f32.mrb[0].mxu0
  %1302 = vmatprep.mubr.f32.mxu0 0.0
  %1303 = vmatmul.mubr.f32.gmra.mrb[0].mxu0 %v1185
  %v1304 = vpop.f32.mrb[0].mxu0
  %v1305 = vadd.f32 %v1173, %v1304
  %v1306 = vpop.f32.mrb[0].mxu0
  %1307 = vmatprep.mubr.f32.mxu0 0.0
  %1308 = vmatmul.mubr.f32.gmra.mrb[0].mxu0 %v1188
  %v1309 = vpop.f32.mrb[0].mxu0
  %v1310 = vadd.f32 %v1173, %v1309
  %v1311 = vpop.f32.mrb[0].mxu0
  %1312 = vmatprep.mubr.f32.mxu0 0.0
  %1313 = vmatmul.mubr.f32.gmra.mrb[0].mxu0 %v1191
  %v1314 = vpop.f32.mrb[0].mxu0
  %v1315 = vadd.f32 %v1173, %v1314
  %v1316 = vpop.f32.mrb[0].mxu0
  %1317 = vmatprep.mubr.f32.mxu0 0.0
  %1318 = vmatmul.mubr.f32.gmra.mrb[0].mxu0 %v1194
  %v1319 = vpop.f32.mrb[0].mxu0
  %v1320 = vadd.f32 %v1173, %v1319
  %v1321 = vpop.f32.mrb[0].mxu0
  %1322 = vmatprep.mubr.f32.mxu0 0.0
  %1323 = vmatmul.mubr.f32.gmra.mrb[0].mxu0 %v1197
  %v1324 = vpop.f32.mrb[0].mxu0
  %v1325 = vadd.f32 %v1173, %v1324
  %v1326 = vpop.f32.mrb[0].mxu0
  %1327 = vmatprep.mubr.f32.mxu0 0.0
  %1328 = vmatmul.mubr.f32.gmra.mrb[0].mxu0 %v1200
  %v1329 = vpop.f32.mrb[0].mxu0
  %v1330 = vadd.f32 %v1173, %v1329
  %v1331 = vpop.f32.mrb[0].mxu0
  %1332 = vmatprep.mubr.f32.mxu0 0.0
  %1333 = vmatmul.mubr.f32.gmra.mrb[0].mxu0 %v1203
  %v1334 = vpop.f32.mrb[0].mxu0
  %v1335 = vadd.f32 %v1173, %v1334
  %v1336 = vpop.f32.mrb[0].mxu0
  %1337 = vmatprep.mubr.f32.mxu0 0.0
  %1338 = vmatmul.mubr.f32.gmra.mrb[0].mxu0 %v1206
  %v1339 = vpop.f32.mrb[0].mxu0
  %v1340 = vadd.f32 %v1173, %v1339
  %v1341 = vpop.f32.mrb[0].mxu0
  %1342 = vmatprep.mubr.f32.mxu0 0.0
  %1343 = vmatmul.mubr.f32.gmra.mrb[0].mxu0 %v1209
  %v1344 = vpop.f32.mrb[0].mxu0
  %v1345 = vadd.f32 %v1173, %v1344
  %v1346 = vpop.f32.mrb[0].mxu0
  %1347 = vmatprep.mubr.f32.mxu0 0.0
  %1348 = vmatmul.mubr.f32.gmra.mrb[0].mxu0 %v1212
  %v1349 = vpop.f32.mrb[0].mxu0
  %v1350 = vadd.f32 %v1173, %v1349
  %v1351 = vpop.f32.mrb[0].mxu0
  %1352 = vmatprep.mubr.f32.mxu0 0.0
  %1353 = vmatmul.mubr.f32.gmra.mrb[0].mxu0 %v1215
  %v1354 = vpop.f32.mrb[0].mxu0
  %v1355 = vadd.f32 %v1173, %v1354
  %v1356 = vpop.f32.mrb[0].mxu0
  %1357 = vmatprep.mubr.f32.mxu0 0.0
  %1358 = vmatmul.mubr.f32.gmra.mrb[0].mxu0 %v1218
  %v1359 = vpop.f32.mrb[0].mxu0
  %v1360 = vadd.f32 %v1173, %v1359
  %v1361 = vpop.f32.mrb[0].mxu0
  %1362 = vmatprep.mubr.f32.mxu0 0.0
  %1363 = vmatmul.mubr.f32.gmra.mrb[0].mxu0 %v1221
  %v1364 = vpop.f32.mrb[0].mxu0
  %v1365 = vadd.f32 %v1173, %v1364
  %v1366 = vpop.f32.mrb[0].mxu0
  %1367 = vdwg.mxu0
  %v1368 = vmax.f32 %v1290, 0.0
  %v1369 = vmax.f32 %v1295, 0.0
  %v1370 = vmax.f32 %v1300, 0.0
  %v1371 = vmax.f32 %v1305, 0.0
  %v1372 = vmax.f32 %v1310, 0.0
  %v1373 = vmax.f32 %v1315, 0.0
  %v1374 = vmax.f32 %v1320, 0.0
  %v1375 = vmax.f32 %v1325, 0.0
  %v1376 = vmax.f32 %v1330, 0.0
  %v1377 = vmax.f32 %v1335, 0.0
  %v1378 = vmax.f32 %v1340, 0.0
  %v1379 = vmax.f32 %v1345, 0.0
  %v1380 = vmax.f32 %v1350, 0.0
  %v1381 = vmax.f32 %v1355, 0.0
  %v1382 = vmax.f32 %v1360, 0.0
  %v1383 = vmax.f32 %v1365, 0.0
  %v1384 = vlaneseq
  %v1385 = vshrl.u32 %v1384, 7
  %v1386 = vsub.s32 4, %v1385
  %v1387 = vrot.slane %v47, %v1386
  %v1388 = vsel %vm665, %v182, 0
  %v1390 = vsel %vm665, %v183, 0
  %v1392 = vsel %vm665, %v184, 0
  %v1394 = vsel %vm665, %v185, 0
  %v1396 = vsel %vm665, %v186, 0
  %v1398 = vsel %vm665, %v187, 0
  %v1400 = vsel %vm665, %v188, 0
  %v1402 = vsel %vm665, %v189, 0
  %v1404 = vsel %vm665, %v190, 0
  %v1406 = vsel %vm665, %v191, 0
  %v1408 = vsel %vm665, %v192, 0
  %v1410 = vsel %vm665, %v193, 0
  %v1412 = vsel %vm665, %v194, 0
  %v1414 = vsel %vm665, %v195, 0
  %v1416 = vsel %vm665, %v196, 0
  %v1418 = vsel %vm665, %v197, 0
  %1420 = vmatprep.subr.mxu0 0.0
  %1421 = vmatpush1.msra.mxu0 %v46
  %1422 = vmatprep.subr.mxu0 0.0
  %1423 = vmatpush1.msra.mxu0 0.0
  %1424 = vmatprep.subr.mxu0 0.0
  %1425 = vmatpush1.msra.mxu0 0.0
  %1426 = vmatprep.subr.mxu0 0.0
  %1427 = vmatpush1.msra.mxu0 0.0
  %1428 = vmatprep.subr.mxu0 0.0
  %1429 = vmatpush1.msra.mxu0 0.0
  %1430 = vmatprep.subr.mxu0 0.0
  %1431 = vmatpush1.msra.mxu0 0.0
  %1432 = vmatprep.subr.mxu0 0.0
  %1433 = vmatpush1.msra.mxu0 0.0
  %1434 = vmatprep.subr.mxu0 0.0
  %1435 = vmatpush1.msra.mxu0 0.0
  %1436 = vmatprep.subr.mxu0 0.0
  %1437 = vmatpush1.msra.mxu0 0.0
  %1438 = vmatprep.subr.mxu0 0.0
  %1439 = vmatpush1.msra.mxu0 0.0
  %1440 = vmatprep.subr.mxu0 0.0
  %1441 = vmatpush1.msra.mxu0 0.0
  %1442 = vmatprep.subr.mxu0 0.0
  %1443 = vmatpush1.msra.mxu0 0.0
  %1444 = vmatprep.subr.mxu0 0.0
  %1445 = vmatpush1.msra.mxu0 0.0
  %1446 = vmatprep.subr.mxu0 0.0
  %1447 = vmatpush1.msra.mxu0 0.0
  %1448 = vmatprep.subr.mxu0 0.0
  %1449 = vmatpush1.msra.mxu0 0.0
  %1450 = vmatprep.subr.mxu0 0.0
  %1451 = vmatpush1.msra.mxu0 0.0
  %1452 = vmatprep.subr.mxu0 0.0
  %1453 = vmatpush1.msra.mxu0 0.0
  %1454 = vmatprep.subr.mxu0 0.0
  %1455 = vmatpush1.msra.mxu0 0.0
  %1456 = vmatprep.subr.mxu0 0.0
  %1457 = vmatpush1.msra.mxu0 0.0
  %1458 = vmatprep.subr.mxu0 0.0
  %1459 = vmatpush1.msra.mxu0 0.0
  %1460 = vmatprep.subr.mxu0 0.0
  %1461 = vmatpush1.msra.mxu0 0.0
  %1462 = vmatprep.subr.mxu0 0.0
  %1463 = vmatpush1.msra.mxu0 0.0
  %1464 = vmatprep.subr.mxu0 0.0
  %1465 = vmatpush1.msra.mxu0 0.0
  %1466 = vmatprep.subr.mxu0 0.0
  %1467 = vmatpush1.msra.mxu0 0.0
  %1468 = vmatprep.subr.mxu0 0.0
  %1469 = vmatpush1.msra.mxu0 0.0
  %1470 = vmatprep.subr.mxu0 0.0
  %1471 = vmatpush1.msra.mxu0 0.0
  %1472 = vmatprep.subr.mxu0 0.0
  %1473 = vmatpush1.msra.mxu0 0.0
  %1474 = vmatprep.subr.mxu0 0.0
  %1475 = vmatpush1.msra.mxu0 0.0
  %1476 = vmatprep.subr.mxu0 0.0
  %1477 = vmatpush1.msra.mxu0 0.0
  %1478 = vmatprep.subr.mxu0 0.0
  %1479 = vmatpush1.msra.mxu0 0.0
  %1480 = vmatprep.subr.mxu0 0.0
  %1481 = vmatpush1.msra.mxu0 0.0
  %1482 = vmatprep.subr.mxu0 0.0
  %1483 = vmatpush1.msra.mxu0 0.0
  %1484 = vmatprep.mubr.f32.mxu0 0.0
  %1485 = vmatmul.mubr.f32.gmra.mrb[0].mxu0 %v1388
  %v1486 = vpop.f32.mrb[0].mxu0
  %v1487 = vadd.f32 %v1387, %v1486
  %v1488 = vpop.f32.mrb[0].mxu0
  %1489 = vmatprep.mubr.f32.mxu0 0.0
  %1490 = vmatmul.mubr.f32.gmra.mrb[0].mxu0 %v1390
  %v1491 = vpop.f32.mrb[0].mxu0
  %v1492 = vadd.f32 %v1387, %v1491
  %v1493 = vpop.f32.mrb[0].mxu0
  %1494 = vmatprep.mubr.f32.mxu0 0.0
  %1495 = vmatmul.mubr.f32.gmra.mrb[0].mxu0 %v1392
  %v1496 = vpop.f32.mrb[0].mxu0
  %v1497 = vadd.f32 %v1387, %v1496
  %v1498 = vpop.f32.mrb[0].mxu0
  %1499 = vmatprep.mubr.f32.mxu0 0.0
  %1500 = vmatmul.mubr.f32.gmra.mrb[0].mxu0 %v1394
  %v1501 = vpop.f32.mrb[0].mxu0
  %v1502 = vadd.f32 %v1387, %v1501
  %v1503 = vpop.f32.mrb[0].mxu0
  %1504 = vmatprep.mubr.f32.mxu0 0.0
  %1505 = vmatmul.mubr.f32.gmra.mrb[0].mxu0 %v1396
  %v1506 = vpop.f32.mrb[0].mxu0
  %v1507 = vadd.f32 %v1387, %v1506
  %v1508 = vpop.f32.mrb[0].mxu0
  %1509 = vmatprep.mubr.f32.mxu0 0.0
  %1510 = vmatmul.mubr.f32.gmra.mrb[0].mxu0 %v1398
  %v1511 = vpop.f32.mrb[0].mxu0
  %v1512 = vadd.f32 %v1387, %v1511
  %v1513 = vpop.f32.mrb[0].mxu0
  %1514 = vmatprep.mubr.f32.mxu0 0.0
  %1515 = vmatmul.mubr.f32.gmra.mrb[0].mxu0 %v1400
  %v1516 = vpop.f32.mrb[0].mxu0
  %v1517 = vadd.f32 %v1387, %v1516
  %v1518 = vpop.f32.mrb[0].mxu0
  %1519 = vmatprep.mubr.f32.mxu0 0.0
  %1520 = vmatmul.mubr.f32.gmra.mrb[0].mxu0 %v1402
  %v1521 = vpop.f32.mrb[0].mxu0
  %v1522 = vadd.f32 %v1387, %v1521
  %v1523 = vpop.f32.mrb[0].mxu0
  %1524 = vmatprep.mubr.f32.mxu0 0.0
  %1525 = vmatmul.mubr.f32.gmra.mrb[0].mxu0 %v1404
  %v1526 = vpop.f32.mrb[0].mxu0
  %v1527 = vadd.f32 %v1387, %v1526
  %v1528 = vpop.f32.mrb[0].mxu0
  %1529 = vmatprep.mubr.f32.mxu0 0.0
  %1530 = vmatmul.mubr.f32.gmra.mrb[0].mxu0 %v1406
  %v1531 = vpop.f32.mrb[0].mxu0
  %v1532 = vadd.f32 %v1387, %v1531
  %v1533 = vpop.f32.mrb[0].mxu0
  %1534 = vmatprep.mubr.f32.mxu0 0.0
  %1535 = vmatmul.mubr.f32.gmra.mrb[0].mxu0 %v1408
  %v1536 = vpop.f32.mrb[0].mxu0
  %v1537 = vadd.f32 %v1387, %v1536
  %v1538 = vpop.f32.mrb[0].mxu0
  %1539 = vmatprep.mubr.f32.mxu0 0.0
  %1540 = vmatmul.mubr.f32.gmra.mrb[0].mxu0 %v1410
  %v1541 = vpop.f32.mrb[0].mxu0
  %v1542 = vadd.f32 %v1387, %v1541
  %v1543 = vpop.f32.mrb[0].mxu0
  %1544 = vmatprep.mubr.f32.mxu0 0.0
  %1545 = vmatmul.mubr.f32.gmra.mrb[0].mxu0 %v1412
  %v1546 = vpop.f32.mrb[0].mxu0
  %v1547 = vadd.f32 %v1387, %v1546
  %v1548 = vpop.f32.mrb[0].mxu0
  %1549 = vmatprep.mubr.f32.mxu0 0.0
  %1550 = vmatmul.mubr.f32.gmra.mrb[0].mxu0 %v1414
  %v1551 = vpop.f32.mrb[0].mxu0
  %v1552 = vadd.f32 %v1387, %v1551
  %v1553 = vpop.f32.mrb[0].mxu0
  %1554 = vmatprep.mubr.f32.mxu0 0.0
  %1555 = vmatmul.mubr.f32.gmra.mrb[0].mxu0 %v1416
  %v1556 = vpop.f32.mrb[0].mxu0
  %v1557 = vadd.f32 %v1387, %v1556
  %v1558 = vpop.f32.mrb[0].mxu0
  %1559 = vmatprep.mubr.f32.mxu0 0.0
  %1560 = vmatmul.mubr.f32.gmra.mrb[0].mxu0 %v1418
  %v1561 = vpop.f32.mrb[0].mxu0
  %v1562 = vadd.f32 %v1387, %v1561
  %v1563 = vpop.f32.mrb[0].mxu0
  %1564 = vdwg.mxu0
  %v1565 = vadd.f32 %v1368, %v1487
  %v1566 = vadd.f32 %v1369, %v1492
  %v1567 = vadd.f32 %v1370, %v1497
  %v1568 = vadd.f32 %v1371, %v1502
  %v1569 = vadd.f32 %v1372, %v1507
  %v1570 = vadd.f32 %v1373, %v1512
  %v1571 = vadd.f32 %v1374, %v1517
  %v1572 = vadd.f32 %v1375, %v1522
  %v1573 = vadd.f32 %v1376, %v1527
  %v1574 = vadd.f32 %v1377, %v1532
  %v1575 = vadd.f32 %v1378, %v1537
  %v1576 = vadd.f32 %v1379, %v1542
  %v1577 = vadd.f32 %v1380, %v1547
  %v1578 = vadd.f32 %v1381, %v1552
  %v1579 = vadd.f32 %v1382, %v1557
  %v1580 = vadd.f32 %v1383, %v1562
  %v1581 = vmax.f32 %v1565, 0.0
  %v1582 = vmax.f32 %v1566, 0.0
  %v1583 = vmax.f32 %v1567, 0.0
  %v1584 = vmax.f32 %v1568, 0.0
  %v1585 = vmax.f32 %v1569, 0.0
  %v1586 = vmax.f32 %v1570, 0.0
  %v1587 = vmax.f32 %v1571, 0.0
  %v1588 = vmax.f32 %v1572, 0.0
  %v1589 = vmax.f32 %v1573, 0.0
  %v1590 = vmax.f32 %v1574, 0.0
  %v1591 = vmax.f32 %v1575, 0.0
  %v1592 = vmax.f32 %v1576, 0.0
  %v1593 = vmax.f32 %v1577, 0.0
  %v1594 = vmax.f32 %v1578, 0.0
  %v1595 = vmax.f32 %v1579, 0.0
  %v1596 = vmax.f32 %v1580, 0.0
  %v1597 = vrot.slane %v1581, 4
  %v1598 = vrot.slane %v1582, 4
  %v1599 = vrot.slane %v1583, 4
  %v1600 = vrot.slane %v1584, 4
  %v1601 = vrot.slane %v1585, 4
  %v1602 = vrot.slane %v1586, 4
  %v1603 = vrot.slane %v1587, 4
  %v1604 = vrot.slane %v1588, 4
  %v1605 = vrot.slane %v1589, 4
  %v1606 = vrot.slane %v1590, 4
  %v1607 = vrot.slane %v1591, 4
  %v1608 = vrot.slane %v1592, 4
  %v1609 = vrot.slane %v1593, 4
  %v1610 = vrot.slane %v1594, 4
  %v1611 = vrot.slane %v1595, 4
  %v1612 = vrot.slane %v1596, 4
  %vm1613 = vcmp.lt.s32.totalorder %v215, 4
  %v1614 = vsel %vm1613, %v1611, %v1612
  %v1615 = vsel %vm1613, %v1610, %v1611
  %v1616 = vsel %vm1613, %v1609, %v1610
  %v1617 = vsel %vm1613, %v1608, %v1609
  %v1618 = vsel %vm1613, %v1607, %v1608
  %v1619 = vsel %vm1613, %v1606, %v1607
  %v1620 = vsel %vm1613, %v1605, %v1606
  %v1621 = vsel %vm1613, %v1604, %v1605
  %v1622 = vsel %vm1613, %v1603, %v1604
  %v1623 = vsel %vm1613, %v1602, %v1603
  %v1624 = vsel %vm1613, %v1601, %v1602
  %v1625 = vsel %vm1613, %v1600, %v1601
  %v1626 = vsel %vm1613, %v1599, %v1600
  %v1627 = vsel %vm1613, %v1598, %v1599
  %v1628 = vsel %vm1613, %v1597, %v1598
  %v1629 = vsel %vm1613, %v1612, %v1597
  %vm1630 = vcmp.lt.s32.totalorder %v424, 4
  %vm1631 = vcmp.lt.s32.totalorder %v425, 4
  %vm1632 = vcmp.lt.s32.totalorder %v426, 4
  %vm1633 = vcmp.lt.s32.totalorder %v427, 4
  %vm1634 = vcmp.lt.s32.totalorder %v428, 4
  %vm1635 = vcmp.lt.s32.totalorder %v429, 4
  %vm1636 = vcmp.lt.s32.totalorder %v430, 4
  %vm1637 = vcmp.lt.s32.totalorder %v431, 4
  %vm1638 = vcmp.lt.s32.totalorder %v432, 4
  %vm1639 = vcmp.lt.s32.totalorder %v433, 4
  %vm1640 = vcmp.lt.s32.totalorder %v434, 4
  %vm1641 = vcmp.lt.s32.totalorder %v435, 4
  %vm1642 = vcmp.lt.s32.totalorder %v436, 4
  %vm1643 = vcmp.lt.s32.totalorder %v437, 4
  %vm1644 = vcmp.lt.s32.totalorder %v438, 4
  %vm1645 = vcmp.lt.s32.totalorder %v439, 4
  %v1646 = vsel %vm1630, 0.0, %v1629
  %v1647 = vsel %vm1631, 0.0, %v1628
  %v1648 = vsel %vm1632, 0.0, %v1627
  %v1649 = vsel %vm1633, 0.0, %v1626
  %v1650 = vsel %vm1634, 0.0, %v1625
  %v1651 = vsel %vm1635, 0.0, %v1624
  %v1652 = vsel %vm1636, 0.0, %v1623
  %v1653 = vsel %vm1637, 0.0, %v1622
  %v1654 = vsel %vm1638, 0.0, %v1621
  %v1655 = vsel %vm1639, 0.0, %v1620
  %v1656 = vsel %vm1640, 0.0, %v1619
  %v1657 = vsel %vm1641, 0.0, %v1618
  %v1658 = vsel %vm1642, 0.0, %v1617
  %v1659 = vsel %vm1643, 0.0, %v1616
  %v1660 = vsel %vm1644, 0.0, %v1615
  %v1661 = vsel %vm1645, 0.0, %v1614
  %v1662 = vrot.slane %v1581, 6
  %v1663 = vrot.slane %v1582, 6
  %v1664 = vrot.slane %v1583, 6
  %v1665 = vrot.slane %v1584, 6
  %v1666 = vrot.slane %v1585, 6
  %v1667 = vrot.slane %v1586, 6
  %v1668 = vrot.slane %v1587, 6
  %v1669 = vrot.slane %v1588, 6
  %v1670 = vrot.slane %v1589, 6
  %v1671 = vrot.slane %v1590, 6
  %v1672 = vrot.slane %v1591, 6
  %v1673 = vrot.slane %v1592, 6
  %v1674 = vrot.slane %v1593, 6
  %v1675 = vrot.slane %v1594, 6
  %v1676 = vrot.slane %v1595, 6
  %v1677 = vrot.slane %v1596, 6
  %v1678 = vsel %vm216, %v1676, %v1677
  %v1679 = vsel %vm216, %v1675, %v1676
  %v1680 = vsel %vm216, %v1674, %v1675
  %v1681 = vsel %vm216, %v1673, %v1674
  %v1682 = vsel %vm216, %v1672, %v1673
  %v1683 = vsel %vm216, %v1671, %v1672
  %v1684 = vsel %vm216, %v1670, %v1671
  %v1685 = vsel %vm216, %v1669, %v1670
  %v1686 = vsel %vm216, %v1668, %v1669
  %v1687 = vsel %vm216, %v1667, %v1668
  %v1688 = vsel %vm216, %v1666, %v1667
  %v1689 = vsel %vm216, %v1665, %v1666
  %v1690 = vsel %vm216, %v1664, %v1665
  %v1691 = vsel %vm216, %v1663, %v1664
  %v1692 = vsel %vm216, %v1662, %v1663
  %v1693 = vsel %vm216, %v1677, %v1662
  %v1694 = vsel %vm440, 0.0, %v1693
  %v1695 = vsel %vm441, 0.0, %v1692
  %v1696 = vsel %vm442, 0.0, %v1691
  %v1697 = vsel %vm443, 0.0, %v1690
  %v1698 = vsel %vm444, 0.0, %v1689
  %v1699 = vsel %vm445, 0.0, %v1688
  %v1700 = vsel %vm446, 0.0, %v1687
  %v1701 = vsel %vm447, 0.0, %v1686
  %v1702 = vsel %vm448, 0.0, %v1685
  %v1703 = vsel %vm449, 0.0, %v1684
  %v1704 = vsel %vm450, 0.0, %v1683
  %v1705 = vsel %vm451, 0.0, %v1682
  %v1706 = vsel %vm452, 0.0, %v1681
  %v1707 = vsel %vm453, 0.0, %v1680
  %v1708 = vsel %vm454, 0.0, %v1679
  %v1709 = vsel %vm455, 0.0, %v1678
  %1726 = vrot.lane.b32.xlu0 %v1694, 16
  %v1727 = vpop.permute.xlu0 %1726
  %1728 = vrot.lane.b32.xlu0 %v1695, 16
  %v1729 = vpop.permute.xlu0 %1728
  %1730 = vrot.lane.b32.xlu0 %v1696, 16
  %v1731 = vpop.permute.xlu0 %1730
  %1732 = vrot.lane.b32.xlu0 %v1697, 16
  %v1733 = vpop.permute.xlu0 %1732
  %1734 = vrot.lane.b32.xlu0 %v1698, 16
  %v1735 = vpop.permute.xlu0 %1734
  %1736 = vrot.lane.b32.xlu0 %v1699, 16
  %v1737 = vpop.permute.xlu0 %1736
  %1738 = vrot.lane.b32.xlu0 %v1700, 16
  %v1739 = vpop.permute.xlu0 %1738
  %1740 = vrot.lane.b32.xlu0 %v1701, 16
  %v1741 = vpop.permute.xlu0 %1740
  %1742 = vrot.lane.b32.xlu0 %v1702, 16
  %v1743 = vpop.permute.xlu0 %1742
  %1744 = vrot.lane.b32.xlu0 %v1703, 16
  %v1745 = vpop.permute.xlu0 %1744
  %1746 = vrot.lane.b32.xlu0 %v1704, 16
  %v1747 = vpop.permute.xlu0 %1746
  %1748 = vrot.lane.b32.xlu0 %v1705, 16
  %v1749 = vpop.permute.xlu0 %1748
  %1750 = vrot.lane.b32.xlu0 %v1706, 16
  %v1751 = vpop.permute.xlu0 %1750
  %1752 = vrot.lane.b32.xlu0 %v1707, 16
  %v1753 = vpop.permute.xlu0 %1752
  %1754 = vrot.lane.b32.xlu0 %v1708, 16
  %v1755 = vpop.permute.xlu0 %1754
  %1756 = vrot.lane.b32.xlu0 %v1709, 16
  %v1757 = vpop.permute.xlu0 %1756
  %1790 = vrot.lane.b32.xlu0 %v1581, 32
  %v1791 = vpop.permute.xlu0 %1790
  %1792 = vrot.lane.b32.xlu0 %v1582, 32
  %v1793 = vpop.permute.xlu0 %1792
  %1794 = vrot.lane.b32.xlu0 %v1583, 32
  %v1795 = vpop.permute.xlu0 %1794
  %1796 = vrot.lane.b32.xlu0 %v1584, 32
  %v1797 = vpop.permute.xlu0 %1796
  %1798 = vrot.lane.b32.xlu0 %v1585, 32
  %v1799 = vpop.permute.xlu0 %1798
  %1800 = vrot.lane.b32.xlu0 %v1586, 32
  %v1801 = vpop.permute.xlu0 %1800
  %1802 = vrot.lane.b32.xlu0 %v1587, 32
  %v1803 = vpop.permute.xlu0 %1802
  %1804 = vrot.lane.b32.xlu0 %v1588, 32
  %v1805 = vpop.permute.xlu0 %1804
  %1806 = vrot.lane.b32.xlu0 %v1589, 32
  %v1807 = vpop.permute.xlu0 %1806
  %1808 = vrot.lane.b32.xlu0 %v1590, 32
  %v1809 = vpop.permute.xlu0 %1808
  %1810 = vrot.lane.b32.xlu0 %v1591, 32
  %v1811 = vpop.permute.xlu0 %1810
  %1812 = vrot.lane.b32.xlu0 %v1592, 32
  %v1813 = vpop.permute.xlu0 %1812
  %1814 = vrot.lane.b32.xlu0 %v1593, 32
  %v1815 = vpop.permute.xlu0 %1814
  %1816 = vrot.lane.b32.xlu0 %v1594, 32
  %v1817 = vpop.permute.xlu0 %1816
  %1818 = vrot.lane.b32.xlu0 %v1595, 32
  %v1819 = vpop.permute.xlu0 %1818
  %1820 = vrot.lane.b32.xlu0 %v1596, 32
  %v1821 = vpop.permute.xlu0 %1820
  %v1838 = vsel %vm682, %v1646, %v1727
  %v1839 = vsel %vm682, %v1647, %v1729
  %v1840 = vsel %vm682, %v1648, %v1731
  %v1841 = vsel %vm682, %v1649, %v1733
  %v1842 = vsel %vm682, %v1650, %v1735
  %v1843 = vsel %vm682, %v1651, %v1737
  %v1844 = vsel %vm682, %v1652, %v1739
  %v1845 = vsel %vm682, %v1653, %v1741
  %v1846 = vsel %vm682, %v1654, %v1743
  %v1847 = vsel %vm682, %v1655, %v1745
  %v1848 = vsel %vm682, %v1656, %v1747
  %v1849 = vsel %vm682, %v1657, %v1749
  %v1850 = vsel %vm682, %v1658, %v1751
  %v1851 = vsel %vm682, %v1659, %v1753
  %v1852 = vsel %vm682, %v1660, %v1755
  %v1853 = vsel %vm682, %v1661, %v1757
  %v1854 = vsel %vm1153, %v1838, %v1791
  %v1855 = vsel %vm1153, %v1839, %v1793
  %v1856 = vsel %vm1153, %v1840, %v1795
  %v1857 = vsel %vm1153, %v1841, %v1797
  %v1858 = vsel %vm1153, %v1842, %v1799
  %v1859 = vsel %vm1153, %v1843, %v1801
  %v1860 = vsel %vm1153, %v1844, %v1803
  %v1861 = vsel %vm1153, %v1845, %v1805
  %v1862 = vsel %vm1153, %v1846, %v1807
  %v1863 = vsel %vm1153, %v1847, %v1809
  %v1864 = vsel %vm1153, %v1848, %v1811
  %v1865 = vsel %vm1153, %v1849, %v1813
  %v1866 = vsel %vm1153, %v1850, %v1815
  %v1867 = vsel %vm1153, %v1851, %v1817
  %v1868 = vsel %vm1153, %v1852, %v1819
  %v1869 = vsel %vm1153, %v1853, %v1821
  %v1870 = vlaneseq
  %v1871 = vshrl.u32 %v1870, 7
  %v1872 = vsub.s32 2, %v1871
  %v1873 = vrot.slane %v47, %v1872
  %v1875 = vsel %vm1174, %v1854, 0
  %v1878 = vsel %vm1174, %v1855, 0
  %v1881 = vsel %vm1174, %v1856, 0
  %v1884 = vsel %vm1174, %v1857, 0
  %v1887 = vsel %vm1174, %v1858, 0
  %v1890 = vsel %vm1174, %v1859, 0
  %v1893 = vsel %vm1174, %v1860, 0
  %v1896 = vsel %vm1174, %v1861, 0
  %v1899 = vsel %vm1174, %v1862, 0
  %v1902 = vsel %vm1174, %v1863, 0
  %v1905 = vsel %vm1174, %v1864, 0
  %v1908 = vsel %vm1174, %v1865, 0
  %v1911 = vsel %vm1174, %v1866, 0
  %v1914 = vsel %vm1174, %v1867, 0
  %v1917 = vsel %vm1174, %v1868, 0
  %v1920 = vsel %vm1174, %v1869, 0
  %1922 = vmatprep.subr.mxu0 0.0
  %1923 = vmatpush1.msra.mxu0 %v34
  %1924 = vmatprep.subr.mxu0 0.0
  %1925 = vmatpush1.msra.mxu0 %v35
  %1926 = vmatprep.subr.mxu0 0.0
  %1927 = vmatpush1.msra.mxu0 %v36
  %1928 = vmatprep.subr.mxu0 0.0
  %1929 = vmatpush1.msra.mxu0 %v37
  %1930 = vmatprep.subr.mxu0 0.0
  %1931 = vmatpush1.msra.mxu0 %v38
  %1932 = vmatprep.subr.mxu0 0.0
  %1933 = vmatpush1.msra.mxu0 %v39
  %1934 = vmatprep.subr.mxu0 0.0
  %1935 = vmatpush1.msra.mxu0 0.0
  %1936 = vmatprep.subr.mxu0 0.0
  %1937 = vmatpush1.msra.mxu0 0.0
  %1938 = vmatprep.subr.mxu0 0.0
  %1939 = vmatpush1.msra.mxu0 0.0
  %1940 = vmatprep.subr.mxu0 0.0
  %1941 = vmatpush1.msra.mxu0 0.0
  %1942 = vmatprep.subr.mxu0 0.0
  %1943 = vmatpush1.msra.mxu0 0.0
  %1944 = vmatprep.subr.mxu0 0.0
  %1945 = vmatpush1.msra.mxu0 0.0
  %1946 = vmatprep.subr.mxu0 0.0
  %1947 = vmatpush1.msra.mxu0 0.0
  %1948 = vmatprep.subr.mxu0 0.0
  %1949 = vmatpush1.msra.mxu0 0.0
  %1950 = vmatprep.subr.mxu0 0.0
  %1951 = vmatpush1.msra.mxu0 0.0
  %1952 = vmatprep.subr.mxu0 0.0
  %1953 = vmatpush1.msra.mxu0 0.0
  %1954 = vmatprep.subr.mxu0 0.0
  %1955 = vmatpush1.msra.mxu0 0.0
  %1956 = vmatprep.subr.mxu0 0.0
  %1957 = vmatpush1.msra.mxu0 0.0
  %1958 = vmatprep.subr.mxu0 0.0
  %1959 = vmatpush1.msra.mxu0 0.0
  %1960 = vmatprep.subr.mxu0 0.0
  %1961 = vmatpush1.msra.mxu0 0.0
  %1962 = vmatprep.subr.mxu0 0.0
  %1963 = vmatpush1.msra.mxu0 0.0
  %1964 = vmatprep.subr.mxu0 0.0
  %1965 = vmatpush1.msra.mxu0 0.0
  %1966 = vmatprep.subr.mxu0 0.0
  %1967 = vmatpush1.msra.mxu0 0.0
  %1968 = vmatprep.subr.mxu0 0.0
  %1969 = vmatpush1.msra.mxu0 0.0
  %1970 = vmatprep.subr.mxu0 0.0
  %1971 = vmatpush1.msra.mxu0 0.0
  %1972 = vmatprep.subr.mxu0 0.0
  %1973 = vmatpush1.msra.mxu0 0.0
  %1974 = vmatprep.subr.mxu0 0.0
  %1975 = vmatpush1.msra.mxu0 0.0
  %1976 = vmatprep.subr.mxu0 0.0
  %1977 = vmatpush1.msra.mxu0 0.0
  %1978 = vmatprep.subr.mxu0 0.0
  %1979 = vmatpush1.msra.mxu0 0.0
  %1980 = vmatprep.subr.mxu0 0.0
  %1981 = vmatpush1.msra.mxu0 0.0
  %1982 = vmatprep.subr.mxu0 0.0
  %1983 = vmatpush1.msra.mxu0 0.0
  %1984 = vmatprep.subr.mxu0 0.0
  %1985 = vmatpush1.msra.mxu0 0.0
  %1986 = vmatprep.mubr.f32.mxu0 0.0
  %1987 = vmatmul.mubr.f32.gmra.mrb[0].mxu0 %v1875
  %v1988 = vpop.f32.mrb[0].mxu0
  %v1989 = vadd.f32 %v1873, %v1988
  %v1990 = vpop.f32.mrb[0].mxu0
  %1991 = vmatprep.mubr.f32.mxu0 0.0
  %1992 = vmatmul.mubr.f32.gmra.mrb[0].mxu0 %v1878
  %v1993 = vpop.f32.mrb[0].mxu0
  %v1994 = vadd.f32 %v1873, %v1993
  %v1995 = vpop.f32.mrb[0].mxu0
  %1996 = vmatprep.mubr.f32.mxu0 0.0
  %1997 = vmatmul.mubr.f32.gmra.mrb[0].mxu0 %v1881
  %v1998 = vpop.f32.mrb[0].mxu0
  %v1999 = vadd.f32 %v1873, %v1998
  %v2000 = vpop.f32.mrb[0].mxu0
  %2001 = vmatprep.mubr.f32.mxu0 0.0
  %2002 = vmatmul.mubr.f32.gmra.mrb[0].mxu0 %v1884
  %v2003 = vpop.f32.mrb[0].mxu0
  %v2004 = vadd.f32 %v1873, %v2003
  %v2005 = vpop.f32.mrb[0].mxu0
  %2006 = vmatprep.mubr.f32.mxu0 0.0
  %2007 = vmatmul.mubr.f32.gmra.mrb[0].mxu0 %v1887
  %v2008 = vpop.f32.mrb[0].mxu0
  %v2009 = vadd.f32 %v1873, %v2008
  %v2010 = vpop.f32.mrb[0].mxu0
  %2011 = vmatprep.mubr.f32.mxu0 0.0
  %2012 = vmatmul.mubr.f32.gmra.mrb[0].mxu0 %v1890
  %v2013 = vpop.f32.mrb[0].mxu0
  %v2014 = vadd.f32 %v1873, %v2013
  %v2015 = vpop.f32.mrb[0].mxu0
  %2016 = vmatprep.mubr.f32.mxu0 0.0
  %2017 = vmatmul.mubr.f32.gmra.mrb[0].mxu0 %v1893
  %v2018 = vpop.f32.mrb[0].mxu0
  %v2019 = vadd.f32 %v1873, %v2018
  %v2020 = vpop.f32.mrb[0].mxu0
  %2021 = vmatprep.mubr.f32.mxu0 0.0
  %2022 = vmatmul.mubr.f32.gmra.mrb[0].mxu0 %v1896
  %v2023 = vpop.f32.mrb[0].mxu0
  %v2024 = vadd.f32 %v1873, %v2023
  %v2025 = vpop.f32.mrb[0].mxu0
  %2026 = vmatprep.mubr.f32.mxu0 0.0
  %2027 = vmatmul.mubr.f32.gmra.mrb[0].mxu0 %v1899
  %v2028 = vpop.f32.mrb[0].mxu0
  %v2029 = vadd.f32 %v1873, %v2028
  %v2030 = vpop.f32.mrb[0].mxu0
  %2031 = vmatprep.mubr.f32.mxu0 0.0
  %2032 = vmatmul.mubr.f32.gmra.mrb[0].mxu0 %v1902
  %v2033 = vpop.f32.mrb[0].mxu0
  %v2034 = vadd.f32 %v1873, %v2033
  %v2035 = vpop.f32.mrb[0].mxu0
  %2036 = vmatprep.mubr.f32.mxu0 0.0
  %2037 = vmatmul.mubr.f32.gmra.mrb[0].mxu0 %v1905
  %v2038 = vpop.f32.mrb[0].mxu0
  %v2039 = vadd.f32 %v1873, %v2038
  %v2040 = vpop.f32.mrb[0].mxu0
  %2041 = vmatprep.mubr.f32.mxu0 0.0
  %2042 = vmatmul.mubr.f32.gmra.mrb[0].mxu0 %v1908
  %v2043 = vpop.f32.mrb[0].mxu0
  %v2044 = vadd.f32 %v1873, %v2043
  %v2045 = vpop.f32.mrb[0].mxu0
  %2046 = vmatprep.mubr.f32.mxu0 0.0
  %2047 = vmatmul.mubr.f32.gmra.mrb[0].mxu0 %v1911
  %v2048 = vpop.f32.mrb[0].mxu0
  %v2049 = vadd.f32 %v1873, %v2048
  %v2050 = vpop.f32.mrb[0].mxu0
  %2051 = vmatprep.mubr.f32.mxu0 0.0
  %2052 = vmatmul.mubr.f32.gmra.mrb[0].mxu0 %v1914
  %v2053 = vpop.f32.mrb[0].mxu0
  %v2054 = vadd.f32 %v1873, %v2053
  %v2055 = vpop.f32.mrb[0].mxu0
  %2056 = vmatprep.mubr.f32.mxu0 0.0
  %2057 = vmatmul.mubr.f32.gmra.mrb[0].mxu0 %v1917
  %v2058 = vpop.f32.mrb[0].mxu0
  %v2059 = vadd.f32 %v1873, %v2058
  %v2060 = vpop.f32.mrb[0].mxu0
  %2061 = vmatprep.mubr.f32.mxu0 0.0
  %2062 = vmatmul.mubr.f32.gmra.mrb[0].mxu0 %v1920
  %v2063 = vpop.f32.mrb[0].mxu0
  %v2064 = vadd.f32 %v1873, %v2063
  %v2065 = vpop.f32.mrb[0].mxu0
  %2066 = vdwg.mxu0
  %v2067 = vmax.f32 %v1989, 0.0
  %v2068 = vmax.f32 %v1994, 0.0
  %v2069 = vmax.f32 %v1999, 0.0
  %v2070 = vmax.f32 %v2004, 0.0
  %v2071 = vmax.f32 %v2009, 0.0
  %v2072 = vmax.f32 %v2014, 0.0
  %v2073 = vmax.f32 %v2019, 0.0
  %v2074 = vmax.f32 %v2024, 0.0
  %v2075 = vmax.f32 %v2029, 0.0
  %v2076 = vmax.f32 %v2034, 0.0
  %v2077 = vmax.f32 %v2039, 0.0
  %v2078 = vmax.f32 %v2044, 0.0
  %v2079 = vmax.f32 %v2049, 0.0
  %v2080 = vmax.f32 %v2054, 0.0
  %v2081 = vmax.f32 %v2059, 0.0
  %v2082 = vmax.f32 %v2064, 0.0
  %v2083 = vrot.slane %v2067, 4
  %v2084 = vrot.slane %v2068, 4
  %v2085 = vrot.slane %v2069, 4
  %v2086 = vrot.slane %v2070, 4
  %v2087 = vrot.slane %v2071, 4
  %v2088 = vrot.slane %v2072, 4
  %v2089 = vrot.slane %v2073, 4
  %v2090 = vrot.slane %v2074, 4
  %v2091 = vrot.slane %v2075, 4
  %v2092 = vrot.slane %v2076, 4
  %v2093 = vrot.slane %v2077, 4
  %v2094 = vrot.slane %v2078, 4
  %v2095 = vrot.slane %v2079, 4
  %v2096 = vrot.slane %v2080, 4
  %v2097 = vrot.slane %v2081, 4
  %v2098 = vrot.slane %v2082, 4
  %v2099 = vsel %vm1613, %v2097, %v2098
  %v2100 = vsel %vm1613, %v2096, %v2097
  %v2101 = vsel %vm1613, %v2095, %v2096
  %v2102 = vsel %vm1613, %v2094, %v2095
  %v2103 = vsel %vm1613, %v2093, %v2094
  %v2104 = vsel %vm1613, %v2092, %v2093
  %v2105 = vsel %vm1613, %v2091, %v2092
  %v2106 = vsel %vm1613, %v2090, %v2091
  %v2107 = vsel %vm1613, %v2089, %v2090
  %v2108 = vsel %vm1613, %v2088, %v2089
  %v2109 = vsel %vm1613, %v2087, %v2088
  %v2110 = vsel %vm1613, %v2086, %v2087
  %v2111 = vsel %vm1613, %v2085, %v2086
  %v2112 = vsel %vm1613, %v2084, %v2085
  %v2113 = vsel %vm1613, %v2083, %v2084
  %v2114 = vsel %vm1613, %v2098, %v2083
  %v2115 = vsel %vm1630, 0.0, %v2114
  %v2116 = vsel %vm1631, 0.0, %v2113
  %v2117 = vsel %vm1632, 0.0, %v2112
  %v2118 = vsel %vm1633, 0.0, %v2111
  %v2119 = vsel %vm1634, 0.0, %v2110
  %v2120 = vsel %vm1635, 0.0, %v2109
  %v2121 = vsel %vm1636, 0.0, %v2108
  %v2122 = vsel %vm1637, 0.0, %v2107
  %v2123 = vsel %vm1638, 0.0, %v2106
  %v2124 = vsel %vm1639, 0.0, %v2105
  %v2125 = vsel %vm1640, 0.0, %v2104
  %v2126 = vsel %vm1641, 0.0, %v2103
  %v2127 = vsel %vm1642, 0.0, %v2102
  %v2128 = vsel %vm1643, 0.0, %v2101
  %v2129 = vsel %vm1644, 0.0, %v2100
  %v2130 = vsel %vm1645, 0.0, %v2099
  %v2131 = vrot.slane %v2067, 6
  %v2132 = vrot.slane %v2068, 6
  %v2133 = vrot.slane %v2069, 6
  %v2134 = vrot.slane %v2070, 6
  %v2135 = vrot.slane %v2071, 6
  %v2136 = vrot.slane %v2072, 6
  %v2137 = vrot.slane %v2073, 6
  %v2138 = vrot.slane %v2074, 6
  %v2139 = vrot.slane %v2075, 6
  %v2140 = vrot.slane %v2076, 6
  %v2141 = vrot.slane %v2077, 6
  %v2142 = vrot.slane %v2078, 6
  %v2143 = vrot.slane %v2079, 6
  %v2144 = vrot.slane %v2080, 6
  %v2145 = vrot.slane %v2081, 6
  %v2146 = vrot.slane %v2082, 6
  %v2147 = vsel %vm216, %v2145, %v2146
  %v2148 = vsel %vm216, %v2144, %v2145
  %v2149 = vsel %vm216, %v2143, %v2144
  %v2150 = vsel %vm216, %v2142, %v2143
  %v2151 = vsel %vm216, %v2141, %v2142
  %v2152 = vsel %vm216, %v2140, %v2141
  %v2153 = vsel %vm216, %v2139, %v2140
  %v2154 = vsel %vm216, %v2138, %v2139
  %v2155 = vsel %vm216, %v2137, %v2138
  %v2156 = vsel %vm216, %v2136, %v2137
  %v2157 = vsel %vm216, %v2135, %v2136
  %v2158 = vsel %vm216, %v2134, %v2135
  %v2159 = vsel %vm216, %v2133, %v2134
  %v2160 = vsel %vm216, %v2132, %v2133
  %v2161 = vsel %vm216, %v2131, %v2132
  %v2162 = vsel %vm216, %v2146, %v2131
  %v2163 = vsel %vm440, 0.0, %v2162
  %v2164 = vsel %vm441, 0.0, %v2161
  %v2165 = vsel %vm442, 0.0, %v2160
  %v2166 = vsel %vm443, 0.0, %v2159
  %v2167 = vsel %vm444, 0.0, %v2158
  %v2168 = vsel %vm445, 0.0, %v2157
  %v2169 = vsel %vm446, 0.0, %v2156
  %v2170 = vsel %vm447, 0.0, %v2155
  %v2171 = vsel %vm448, 0.0, %v2154
  %v2172 = vsel %vm449, 0.0, %v2153
  %v2173 = vsel %vm450, 0.0, %v2152
  %v2174 = vsel %vm451, 0.0, %v2151
  %v2175 = vsel %vm452, 0.0, %v2150
  %v2176 = vsel %vm453, 0.0, %v2149
  %v2177 = vsel %vm454, 0.0, %v2148
  %v2178 = vsel %vm455, 0.0, %v2147
  %2195 = vrot.lane.b32.xlu0 %v2163, 16
  %v2196 = vpop.permute.xlu0 %2195
  %2197 = vrot.lane.b32.xlu0 %v2164, 16
  %v2198 = vpop.permute.xlu0 %2197
  %2199 = vrot.lane.b32.xlu0 %v2165, 16
  %v2200 = vpop.permute.xlu0 %2199
  %2201 = vrot.lane.b32.xlu0 %v2166, 16
  %v2202 = vpop.permute.xlu0 %2201
  %2203 = vrot.lane.b32.xlu0 %v2167, 16
  %v2204 = vpop.permute.xlu0 %2203
  %2205 = vrot.lane.b32.xlu0 %v2168, 16
  %v2206 = vpop.permute.xlu0 %2205
  %2207 = vrot.lane.b32.xlu0 %v2169, 16
  %v2208 = vpop.permute.xlu0 %2207
  %2209 = vrot.lane.b32.xlu0 %v2170, 16
  %v2210 = vpop.permute.xlu0 %2209
  %2211 = vrot.lane.b32.xlu0 %v2171, 16
  %v2212 = vpop.permute.xlu0 %2211
  %2213 = vrot.lane.b32.xlu0 %v2172, 16
  %v2214 = vpop.permute.xlu0 %2213
  %2215 = vrot.lane.b32.xlu0 %v2173, 16
  %v2216 = vpop.permute.xlu0 %2215
  %2217 = vrot.lane.b32.xlu0 %v2174, 16
  %v2218 = vpop.permute.xlu0 %2217
  %2219 = vrot.lane.b32.xlu0 %v2175, 16
  %v2220 = vpop.permute.xlu0 %2219
  %2221 = vrot.lane.b32.xlu0 %v2176, 16
  %v2222 = vpop.permute.xlu0 %2221
  %2223 = vrot.lane.b32.xlu0 %v2177, 16
  %v2224 = vpop.permute.xlu0 %2223
  %2225 = vrot.lane.b32.xlu0 %v2178, 16
  %v2226 = vpop.permute.xlu0 %2225
  %2259 = vrot.lane.b32.xlu0 %v2067, 32
  %v2260 = vpop.permute.xlu0 %2259
  %2261 = vrot.lane.b32.xlu0 %v2068, 32
  %v2262 = vpop.permute.xlu0 %2261
  %2263 = vrot.lane.b32.xlu0 %v2069, 32
  %v2264 = vpop.permute.xlu0 %2263
  %2265 = vrot.lane.b32.xlu0 %v2070, 32
  %v2266 = vpop.permute.xlu0 %2265
  %2267 = vrot.lane.b32.xlu0 %v2071, 32
  %v2268 = vpop.permute.xlu0 %2267
  %2269 = vrot.lane.b32.xlu0 %v2072, 32
  %v2270 = vpop.permute.xlu0 %2269
  %2271 = vrot.lane.b32.xlu0 %v2073, 32
  %v2272 = vpop.permute.xlu0 %2271
  %2273 = vrot.lane.b32.xlu0 %v2074, 32
  %v2274 = vpop.permute.xlu0 %2273
  %2275 = vrot.lane.b32.xlu0 %v2075, 32
  %v2276 = vpop.permute.xlu0 %2275
  %2277 = vrot.lane.b32.xlu0 %v2076, 32
  %v2278 = vpop.permute.xlu0 %2277
  %2279 = vrot.lane.b32.xlu0 %v2077, 32
  %v2280 = vpop.permute.xlu0 %2279
  %2281 = vrot.lane.b32.xlu0 %v2078, 32
  %v2282 = vpop.permute.xlu0 %2281
  %2283 = vrot.lane.b32.xlu0 %v2079, 32
  %v2284 = vpop.permute.xlu0 %2283
  %2285 = vrot.lane.b32.xlu0 %v2080, 32
  %v2286 = vpop.permute.xlu0 %2285
  %2287 = vrot.lane.b32.xlu0 %v2081, 32
  %v2288 = vpop.permute.xlu0 %2287
  %2289 = vrot.lane.b32.xlu0 %v2082, 32
  %v2290 = vpop.permute.xlu0 %2289
  %v2307 = vsel %vm682, %v2115, %v2196
  %v2308 = vsel %vm682, %v2116, %v2198
  %v2309 = vsel %vm682, %v2117, %v2200
  %v2310 = vsel %vm682, %v2118, %v2202
  %v2311 = vsel %vm682, %v2119, %v2204
  %v2312 = vsel %vm682, %v2120, %v2206
  %v2313 = vsel %vm682, %v2121, %v2208
  %v2314 = vsel %vm682, %v2122, %v2210
  %v2315 = vsel %vm682, %v2123, %v2212
  %v2316 = vsel %vm682, %v2124, %v2214
  %v2317 = vsel %vm682, %v2125, %v2216
  %v2318 = vsel %vm682, %v2126, %v2218
  %v2319 = vsel %vm682, %v2127, %v2220
  %v2320 = vsel %vm682, %v2128, %v2222
  %v2321 = vsel %vm682, %v2129, %v2224
  %v2322 = vsel %vm682, %v2130, %v2226
  %v2323 = vsel %vm1153, %v2307, %v2260
  %v2324 = vsel %vm1153, %v2308, %v2262
  %v2325 = vsel %vm1153, %v2309, %v2264
  %v2326 = vsel %vm1153, %v2310, %v2266
  %v2327 = vsel %vm1153, %v2311, %v2268
  %v2328 = vsel %vm1153, %v2312, %v2270
  %v2329 = vsel %vm1153, %v2313, %v2272
  %v2330 = vsel %vm1153, %v2314, %v2274
  %v2331 = vsel %vm1153, %v2315, %v2276
  %v2332 = vsel %vm1153, %v2316, %v2278
  %v2333 = vsel %vm1153, %v2317, %v2280
  %v2334 = vsel %vm1153, %v2318, %v2282
  %v2335 = vsel %vm1153, %v2319, %v2284
  %v2336 = vsel %vm1153, %v2320, %v2286
  %v2337 = vsel %vm1153, %v2321, %v2288
  %v2338 = vsel %vm1153, %v2322, %v2290
  %v2339 = vlaneseq
  %v2340 = vshrl.u32 %v2339, 7
  %v2341 = vsub.s32 3, %v2340
  %v2342 = vrot.slane %v47, %v2341
  %v2344 = vsel %vm1174, %v2323, 0
  %v2347 = vsel %vm1174, %v2324, 0
  %v2350 = vsel %vm1174, %v2325, 0
  %v2353 = vsel %vm1174, %v2326, 0
  %v2356 = vsel %vm1174, %v2327, 0
  %v2359 = vsel %vm1174, %v2328, 0
  %v2362 = vsel %vm1174, %v2329, 0
  %v2365 = vsel %vm1174, %v2330, 0
  %v2368 = vsel %vm1174, %v2331, 0
  %v2371 = vsel %vm1174, %v2332, 0
  %v2374 = vsel %vm1174, %v2333, 0
  %v2377 = vsel %vm1174, %v2334, 0
  %v2380 = vsel %vm1174, %v2335, 0
  %v2383 = vsel %vm1174, %v2336, 0
  %v2386 = vsel %vm1174, %v2337, 0
  %v2389 = vsel %vm1174, %v2338, 0
  %2391 = vmatprep.subr.mxu0 0.0
  %2392 = vmatpush1.msra.mxu0 %v40
  %2393 = vmatprep.subr.mxu0 0.0
  %2394 = vmatpush1.msra.mxu0 %v41
  %2395 = vmatprep.subr.mxu0 0.0
  %2396 = vmatpush1.msra.mxu0 %v42
  %2397 = vmatprep.subr.mxu0 0.0
  %2398 = vmatpush1.msra.mxu0 %v43
  %2399 = vmatprep.subr.mxu0 0.0
  %2400 = vmatpush1.msra.mxu0 %v44
  %2401 = vmatprep.subr.mxu0 0.0
  %2402 = vmatpush1.msra.mxu0 %v45
  %2403 = vmatprep.subr.mxu0 0.0
  %2404 = vmatpush1.msra.mxu0 0.0
  %2405 = vmatprep.subr.mxu0 0.0
  %2406 = vmatpush1.msra.mxu0 0.0
  %2407 = vmatprep.subr.mxu0 0.0
  %2408 = vmatpush1.msra.mxu0 0.0
  %2409 = vmatprep.subr.mxu0 0.0
  %2410 = vmatpush1.msra.mxu0 0.0
  %2411 = vmatprep.subr.mxu0 0.0
  %2412 = vmatpush1.msra.mxu0 0.0
  %2413 = vmatprep.subr.mxu0 0.0
  %2414 = vmatpush1.msra.mxu0 0.0
  %2415 = vmatprep.subr.mxu0 0.0
  %2416 = vmatpush1.msra.mxu0 0.0
  %2417 = vmatprep.subr.mxu0 0.0
  %2418 = vmatpush1.msra.mxu0 0.0
  %2419 = vmatprep.subr.mxu0 0.0
  %2420 = vmatpush1.msra.mxu0 0.0
  %2421 = vmatprep.subr.mxu0 0.0
  %2422 = vmatpush1.msra.mxu0 0.0
  %2423 = vmatprep.subr.mxu0 0.0
  %2424 = vmatpush1.msra.mxu0 0.0
  %2425 = vmatprep.subr.mxu0 0.0
  %2426 = vmatpush1.msra.mxu0 0.0
  %2427 = vmatprep.subr.mxu0 0.0
  %2428 = vmatpush1.msra.mxu0 0.0
  %2429 = vmatprep.subr.mxu0 0.0
  %2430 = vmatpush1.msra.mxu0 0.0
  %2431 = vmatprep.subr.mxu0 0.0
  %2432 = vmatpush1.msra.mxu0 0.0
  %2433 = vmatprep.subr.mxu0 0.0
  %2434 = vmatpush1.msra.mxu0 0.0
  %2435 = vmatprep.subr.mxu0 0.0
  %2436 = vmatpush1.msra.mxu0 0.0
  %2437 = vmatprep.subr.mxu0 0.0
  %2438 = vmatpush1.msra.mxu0 0.0
  %2439 = vmatprep.subr.mxu0 0.0
  %2440 = vmatpush1.msra.mxu0 0.0
  %2441 = vmatprep.subr.mxu0 0.0
  %2442 = vmatpush1.msra.mxu0 0.0
  %2443 = vmatprep.subr.mxu0 0.0
  %2444 = vmatpush1.msra.mxu0 0.0
  %2445 = vmatprep.subr.mxu0 0.0
  %2446 = vmatpush1.msra.mxu0 0.0
  %2447 = vmatprep.subr.mxu0 0.0
  %2448 = vmatpush1.msra.mxu0 0.0
  %2449 = vmatprep.subr.mxu0 0.0
  %2450 = vmatpush1.msra.mxu0 0.0
  %2451 = vmatprep.subr.mxu0 0.0
  %2452 = vmatpush1.msra.mxu0 0.0
  %2453 = vmatprep.subr.mxu0 0.0
  %2454 = vmatpush1.msra.mxu0 0.0
  %2455 = vmatprep.mubr.f32.mxu0 0.0
  %2456 = vmatmul.mubr.f32.gmra.mrb[0].mxu0 %v2344
  %v2457 = vpop.f32.mrb[0].mxu0
  %v2458 = vadd.f32 %v2342, %v2457
  %v2459 = vpop.f32.mrb[0].mxu0
  %2460 = vmatprep.mubr.f32.mxu0 0.0
  %2461 = vmatmul.mubr.f32.gmra.mrb[0].mxu0 %v2347
  %v2462 = vpop.f32.mrb[0].mxu0
  %v2463 = vadd.f32 %v2342, %v2462
  %v2464 = vpop.f32.mrb[0].mxu0
  %2465 = vmatprep.mubr.f32.mxu0 0.0
  %2466 = vmatmul.mubr.f32.gmra.mrb[0].mxu0 %v2350
  %v2467 = vpop.f32.mrb[0].mxu0
  %v2468 = vadd.f32 %v2342, %v2467
  %v2469 = vpop.f32.mrb[0].mxu0
  %2470 = vmatprep.mubr.f32.mxu0 0.0
  %2471 = vmatmul.mubr.f32.gmra.mrb[0].mxu0 %v2353
  %v2472 = vpop.f32.mrb[0].mxu0
  %v2473 = vadd.f32 %v2342, %v2472
  %v2474 = vpop.f32.mrb[0].mxu0
  %2475 = vmatprep.mubr.f32.mxu0 0.0
  %2476 = vmatmul.mubr.f32.gmra.mrb[0].mxu0 %v2356
  %v2477 = vpop.f32.mrb[0].mxu0
  %v2478 = vadd.f32 %v2342, %v2477
  %v2479 = vpop.f32.mrb[0].mxu0
  %2480 = vmatprep.mubr.f32.mxu0 0.0
  %2481 = vmatmul.mubr.f32.gmra.mrb[0].mxu0 %v2359
  %v2482 = vpop.f32.mrb[0].mxu0
  %v2483 = vadd.f32 %v2342, %v2482
  %v2484 = vpop.f32.mrb[0].mxu0
  %2485 = vmatprep.mubr.f32.mxu0 0.0
  %2486 = vmatmul.mubr.f32.gmra.mrb[0].mxu0 %v2362
  %v2487 = vpop.f32.mrb[0].mxu0
  %v2488 = vadd.f32 %v2342, %v2487
  %v2489 = vpop.f32.mrb[0].mxu0
  %2490 = vmatprep.mubr.f32.mxu0 0.0
  %2491 = vmatmul.mubr.f32.gmra.mrb[0].mxu0 %v2365
  %v2492 = vpop.f32.mrb[0].mxu0
  %v2493 = vadd.f32 %v2342, %v2492
  %v2494 = vpop.f32.mrb[0].mxu0
  %2495 = vmatprep.mubr.f32.mxu0 0.0
  %2496 = vmatmul.mubr.f32.gmra.mrb[0].mxu0 %v2368
  %v2497 = vpop.f32.mrb[0].mxu0
  %v2498 = vadd.f32 %v2342, %v2497
  %v2499 = vpop.f32.mrb[0].mxu0
  %2500 = vmatprep.mubr.f32.mxu0 0.0
  %2501 = vmatmul.mubr.f32.gmra.mrb[0].mxu0 %v2371
  %v2502 = vpop.f32.mrb[0].mxu0
  %v2503 = vadd.f32 %v2342, %v2502
  %v2504 = vpop.f32.mrb[0].mxu0
  %2505 = vmatprep.mubr.f32.mxu0 0.0
  %2506 = vmatmul.mubr.f32.gmra.mrb[0].mxu0 %v2374
  %v2507 = vpop.f32.mrb[0].mxu0
  %v2508 = vadd.f32 %v2342, %v2507
  %v2509 = vpop.f32.mrb[0].mxu0
  %2510 = vmatprep.mubr.f32.mxu0 0.0
  %2511 = vmatmul.mubr.f32.gmra.mrb[0].mxu0 %v2377
  %v2512 = vpop.f32.mrb[0].mxu0
  %v2513 = vadd.f32 %v2342, %v2512
  %v2514 = vpop.f32.mrb[0].mxu0
  %2515 = vmatprep.mubr.f32.mxu0 0.0
  %2516 = vmatmul.mubr.f32.gmra.mrb[0].mxu0 %v2380
  %v2517 = vpop.f32.mrb[0].mxu0
  %v2518 = vadd.f32 %v2342, %v2517
  %v2519 = vpop.f32.mrb[0].mxu0
  %2520 = vmatprep.mubr.f32.mxu0 0.0
  %2521 = vmatmul.mubr.f32.gmra.mrb[0].mxu0 %v2383
  %v2522 = vpop.f32.mrb[0].mxu0
  %v2523 = vadd.f32 %v2342, %v2522
  %v2524 = vpop.f32.mrb[0].mxu0
  %2525 = vmatprep.mubr.f32.mxu0 0.0
  %2526 = vmatmul.mubr.f32.gmra.mrb[0].mxu0 %v2386
  %v2527 = vpop.f32.mrb[0].mxu0
  %v2528 = vadd.f32 %v2342, %v2527
  %v2529 = vpop.f32.mrb[0].mxu0
  %2530 = vmatprep.mubr.f32.mxu0 0.0
  %2531 = vmatmul.mubr.f32.gmra.mrb[0].mxu0 %v2389
  %v2532 = vpop.f32.mrb[0].mxu0
  %v2533 = vadd.f32 %v2342, %v2532
  %v2534 = vpop.f32.mrb[0].mxu0
  %2535 = vdwg.mxu0
  %v2536 = vmax.f32 %v2458, 0.0
  %v2537 = vmax.f32 %v2463, 0.0
  %v2538 = vmax.f32 %v2468, 0.0
  %v2539 = vmax.f32 %v2473, 0.0
  %v2540 = vmax.f32 %v2478, 0.0
  %v2541 = vmax.f32 %v2483, 0.0
  %v2542 = vmax.f32 %v2488, 0.0
  %v2543 = vmax.f32 %v2493, 0.0
  %v2544 = vmax.f32 %v2498, 0.0
  %v2545 = vmax.f32 %v2503, 0.0
  %v2546 = vmax.f32 %v2508, 0.0
  %v2547 = vmax.f32 %v2513, 0.0
  %v2548 = vmax.f32 %v2518, 0.0
  %v2549 = vmax.f32 %v2523, 0.0
  %v2550 = vmax.f32 %v2528, 0.0
  %v2551 = vmax.f32 %v2533, 0.0
  %v2552 = vadd.f32 %v2536, %v1581
  %v2553 = vadd.f32 %v2537, %v1582
  %v2554 = vadd.f32 %v2538, %v1583
  %v2555 = vadd.f32 %v2539, %v1584
  %v2556 = vadd.f32 %v2540, %v1585
  %v2557 = vadd.f32 %v2541, %v1586
  %v2558 = vadd.f32 %v2542, %v1587
  %v2559 = vadd.f32 %v2543, %v1588
  %v2560 = vadd.f32 %v2544, %v1589
  %v2561 = vadd.f32 %v2545, %v1590
  %v2562 = vadd.f32 %v2546, %v1591
  %v2563 = vadd.f32 %v2547, %v1592
  %v2564 = vadd.f32 %v2548, %v1593
  %v2565 = vadd.f32 %v2549, %v1594
  %v2566 = vadd.f32 %v2550, %v1595
  %v2567 = vadd.f32 %v2551, %v1596
  %v2568 = vmax.f32 %v2552, 0.0
  %v2569 = vmax.f32 %v2553, 0.0
  %v2570 = vmax.f32 %v2554, 0.0
  %v2571 = vmax.f32 %v2555, 0.0
  %v2572 = vmax.f32 %v2556, 0.0
  %v2573 = vmax.f32 %v2557, 0.0
  %v2574 = vmax.f32 %v2558, 0.0
  %v2575 = vmax.f32 %v2559, 0.0
  %v2576 = vmax.f32 %v2560, 0.0
  %v2577 = vmax.f32 %v2561, 0.0
  %v2578 = vmax.f32 %v2562, 0.0
  %v2579 = vmax.f32 %v2563, 0.0
  %v2580 = vmax.f32 %v2564, 0.0
  %v2581 = vmax.f32 %v2565, 0.0
  %v2582 = vmax.f32 %v2566, 0.0
  %v2583 = vmax.f32 %v2567, 0.0
  %v2584 = vsel %vm682, %v2568, 0.0
  %2585 = vadd.xlane.f32.xlu0 %v2584
  %v2586 = vpop.xlane.xlu0 %2585
  %v2587 = vsel %vm682, %v2569, 0.0
  %2588 = vadd.xlane.f32.xlu0 %v2587
  %v2589 = vpop.xlane.xlu0 %2588
  %v2590 = vsel %vm682, %v2570, 0.0
  %2591 = vadd.xlane.f32.xlu0 %v2590
  %v2592 = vpop.xlane.xlu0 %2591
  %v2593 = vsel %vm682, %v2571, 0.0
  %2594 = vadd.xlane.f32.xlu0 %v2593
  %v2595 = vpop.xlane.xlu0 %2594
  %v2596 = vsel %vm682, %v2572, 0.0
  %2597 = vadd.xlane.f32.xlu0 %v2596
  %v2598 = vpop.xlane.xlu0 %2597
  %v2599 = vsel %vm682, %v2573, 0.0
  %2600 = vadd.xlane.f32.xlu0 %v2599
  %v2601 = vpop.xlane.xlu0 %2600
  %v2602 = vsel %vm682, %v2574, 0.0
  %2603 = vadd.xlane.f32.xlu0 %v2602
  %v2604 = vpop.xlane.xlu0 %2603
  %v2605 = vsel %vm682, %v2575, 0.0
  %2606 = vadd.xlane.f32.xlu0 %v2605
  %v2607 = vpop.xlane.xlu0 %2606
  %v2608 = vsel %vm682, %v2576, 0.0
  %2609 = vadd.xlane.f32.xlu0 %v2608
  %v2610 = vpop.xlane.xlu0 %2609
  %v2611 = vsel %vm682, %v2577, 0.0
  %2612 = vadd.xlane.f32.xlu0 %v2611
  %v2613 = vpop.xlane.xlu0 %2612
  %v2614 = vsel %vm682, %v2578, 0.0
  %2615 = vadd.xlane.f32.xlu0 %v2614
  %v2616 = vpop.xlane.xlu0 %2615
  %v2617 = vsel %vm682, %v2579, 0.0
  %2618 = vadd.xlane.f32.xlu0 %v2617
  %v2619 = vpop.xlane.xlu0 %2618
  %v2620 = vsel %vm682, %v2580, 0.0
  %2621 = vadd.xlane.f32.xlu0 %v2620
  %v2622 = vpop.xlane.xlu0 %2621
  %v2623 = vsel %vm682, %v2581, 0.0
  %2624 = vadd.xlane.f32.xlu0 %v2623
  %v2625 = vpop.xlane.xlu0 %2624
  %v2626 = vsel %vm682, %v2582, 0.0
  %2627 = vadd.xlane.f32.xlu0 %v2626
  %v2628 = vpop.xlane.xlu0 %2627
  %v2629 = vsel %vm682, %v2583, 0.0
  %2630 = vadd.xlane.f32.xlu0 %v2629
  %v2631 = vpop.xlane.xlu0 %2630
  %v2632 = vrcp.pop 16.0
  %v2633 = vmul.f32 %v2586, %v2632
  %v2634 = vmul.f32 %v2589, %v2632
  %v2635 = vmul.f32 %v2592, %v2632
  %v2636 = vmul.f32 %v2595, %v2632
  %v2637 = vmul.f32 %v2598, %v2632
  %v2638 = vmul.f32 %v2601, %v2632
  %v2639 = vmul.f32 %v2604, %v2632
  %v2640 = vmul.f32 %v2607, %v2632
  %v2641 = vmul.f32 %v2610, %v2632
  %v2642 = vmul.f32 %v2613, %v2632
  %v2643 = vmul.f32 %v2616, %v2632
  %v2644 = vmul.f32 %v2619, %v2632
  %v2645 = vmul.f32 %v2622, %v2632
  %v2646 = vmul.f32 %v2625, %v2632
  %v2647 = vmul.f32 %v2628, %v2632
  %v2648 = vmul.f32 %v2631, %v2632
  %v2649 = vsub.f32 %v2568, %v2633
  %v2650 = vsub.f32 %v2569, %v2634
  %v2651 = vsub.f32 %v2570, %v2635
  %v2652 = vsub.f32 %v2571, %v2636
  %v2653 = vsub.f32 %v2572, %v2637
  %v2654 = vsub.f32 %v2573, %v2638
  %v2655 = vsub.f32 %v2574, %v2639
  %v2656 = vsub.f32 %v2575, %v2640
  %v2657 = vsub.f32 %v2576, %v2641
  %v2658 = vsub.f32 %v2577, %v2642
  %v2659 = vsub.f32 %v2578, %v2643
  %v2660 = vsub.f32 %v2579, %v2644
  %v2661 = vsub.f32 %v2580, %v2645
  %v2662 = vsub.f32 %v2581, %v2646
  %v2663 = vsub.f32 %v2582, %v2647
  %v2664 = vsub.f32 %v2583, %v2648
  %v2665 = vmul.f32 %v2649, %v2649
  %v2666 = vmul.f32 %v2650, %v2650
  %v2667 = vmul.f32 %v2651, %v2651
  %v2668 = vmul.f32 %v2652, %v2652
  %v2669 = vmul.f32 %v2653, %v2653
  %v2670 = vmul.f32 %v2654, %v2654
  %v2671 = vmul.f32 %v2655, %v2655
  %v2672 = vmul.f32 %v2656, %v2656
  %v2673 = vmul.f32 %v2657, %v2657
  %v2674 = vmul.f32 %v2658, %v2658
  %v2675 = vmul.f32 %v2659, %v2659
  %v2676 = vmul.f32 %v2660, %v2660
  %v2677 = vmul.f32 %v2661, %v2661
  %v2678 = vmul.f32 %v2662, %v2662
  %v2679 = vmul.f32 %v2663, %v2663
  %v2680 = vmul.f32 %v2664, %v2664
  %v2681 = vsel %vm682, %v2665, 0.0
  %2682 = vadd.xlane.f32.xlu0 %v2681
  %v2683 = vpop.xlane.xlu0 %2682
  %v2684 = vsel %vm682, %v2666, 0.0
  %2685 = vadd.xlane.f32.xlu0 %v2684
  %v2686 = vpop.xlane.xlu0 %2685
  %v2687 = vsel %vm682, %v2667, 0.0
  %2688 = vadd.xlane.f32.xlu0 %v2687
  %v2689 = vpop.xlane.xlu0 %2688
  %v2690 = vsel %vm682, %v2668, 0.0
  %2691 = vadd.xlane.f32.xlu0 %v2690
  %v2692 = vpop.xlane.xlu0 %2691
  %v2693 = vsel %vm682, %v2669, 0.0
  %2694 = vadd.xlane.f32.xlu0 %v2693
  %v2695 = vpop.xlane.xlu0 %2694
  %v2696 = vsel %vm682, %v2670, 0.0
  %2697 = vadd.xlane.f32.xlu0 %v2696
  %v2698 = vpop.xlane.xlu0 %2697
  %v2699 = vsel %vm682, %v2671, 0.0
  %2700 = vadd.xlane.f32.xlu0 %v2699
  %v2701 = vpop.xlane.xlu0 %2700
  %v2702 = vsel %vm682, %v2672, 0.0
  %2703 = vadd.xlane.f32.xlu0 %v2702
  %v2704 = vpop.xlane.xlu0 %2703
  %v2705 = vsel %vm682, %v2673, 0.0
  %2706 = vadd.xlane.f32.xlu0 %v2705
  %v2707 = vpop.xlane.xlu0 %2706
  %v2708 = vsel %vm682, %v2674, 0.0
  %2709 = vadd.xlane.f32.xlu0 %v2708
  %v2710 = vpop.xlane.xlu0 %2709
  %v2711 = vsel %vm682, %v2675, 0.0
  %2712 = vadd.xlane.f32.xlu0 %v2711
  %v2713 = vpop.xlane.xlu0 %2712
  %v2714 = vsel %vm682, %v2676, 0.0
  %2715 = vadd.xlane.f32.xlu0 %v2714
  %v2716 = vpop.xlane.xlu0 %2715
  %v2717 = vsel %vm682, %v2677, 0.0
  %2718 = vadd.xlane.f32.xlu0 %v2717
  %v2719 = vpop.xlane.xlu0 %2718
  %v2720 = vsel %vm682, %v2678, 0.0
  %2721 = vadd.xlane.f32.xlu0 %v2720
  %v2722 = vpop.xlane.xlu0 %2721
  %v2723 = vsel %vm682, %v2679, 0.0
  %2724 = vadd.xlane.f32.xlu0 %v2723
  %v2725 = vpop.xlane.xlu0 %2724
  %v2726 = vsel %vm682, %v2680, 0.0
  %2727 = vadd.xlane.f32.xlu0 %v2726
  %v2728 = vpop.xlane.xlu0 %2727
  %v2729 = vmul.f32 %v2683, %v2632
  %v2730 = vmul.f32 %v2686, %v2632
  %v2731 = vmul.f32 %v2689, %v2632
  %v2732 = vmul.f32 %v2692, %v2632
  %v2733 = vmul.f32 %v2695, %v2632
  %v2734 = vmul.f32 %v2698, %v2632
  %v2735 = vmul.f32 %v2701, %v2632
  %v2736 = vmul.f32 %v2704, %v2632
  %v2737 = vmul.f32 %v2707, %v2632
  %v2738 = vmul.f32 %v2710, %v2632
  %v2739 = vmul.f32 %v2713, %v2632
  %v2740 = vmul.f32 %v2716, %v2632
  %v2741 = vmul.f32 %v2719, %v2632
  %v2742 = vmul.f32 %v2722, %v2632
  %v2743 = vmul.f32 %v2725, %v2632
  %v2744 = vmul.f32 %v2728, %v2632
  %v2745 = vadd.f32 %v2729, 1e-05
  %v2746 = vadd.f32 %v2730, 1e-05
  %v2747 = vadd.f32 %v2731, 1e-05
  %v2748 = vadd.f32 %v2732, 1e-05
  %v2749 = vadd.f32 %v2733, 1e-05
  %v2750 = vadd.f32 %v2734, 1e-05
  %v2751 = vadd.f32 %v2735, 1e-05
  %v2752 = vadd.f32 %v2736, 1e-05
  %v2753 = vadd.f32 %v2737, 1e-05
  %v2754 = vadd.f32 %v2738, 1e-05
  %v2755 = vadd.f32 %v2739, 1e-05
  %v2756 = vadd.f32 %v2740, 1e-05
  %v2757 = vadd.f32 %v2741, 1e-05
  %v2758 = vadd.f32 %v2742, 1e-05
  %v2759 = vadd.f32 %v2743, 1e-05
  %v2760 = vadd.f32 %v2744, 1e-05
  %v2761 = vrsqrt.pop %v2745
  %v2762 = vrsqrt.pop %v2746
  %v2763 = vrsqrt.pop %v2747
  %v2764 = vrsqrt.pop %v2748
  %v2765 = vrsqrt.pop %v2749
  %v2766 = vrsqrt.pop %v2750
  %v2767 = vrsqrt.pop %v2751
  %v2768 = vrsqrt.pop %v2752
  %v2769 = vrsqrt.pop %v2753
  %v2770 = vrsqrt.pop %v2754
  %v2771 = vrsqrt.pop %v2755
  %v2772 = vrsqrt.pop %v2756
  %v2773 = vrsqrt.pop %v2757
  %v2774 = vrsqrt.pop %v2758
  %v2775 = vrsqrt.pop %v2759
  %v2776 = vrsqrt.pop %v2760
  %v2777 = vmul.f32 %v2649, %v2761
  %v2778 = vmul.f32 %v2650, %v2762
  %v2779 = vmul.f32 %v2651, %v2763
  %v2780 = vmul.f32 %v2652, %v2764
  %v2781 = vmul.f32 %v2653, %v2765
  %v2782 = vmul.f32 %v2654, %v2766
  %v2783 = vmul.f32 %v2655, %v2767
  %v2784 = vmul.f32 %v2656, %v2768
  %v2785 = vmul.f32 %v2657, %v2769
  %v2786 = vmul.f32 %v2658, %v2770
  %v2787 = vmul.f32 %v2659, %v2771
  %v2788 = vmul.f32 %v2660, %v2772
  %v2789 = vmul.f32 %v2661, %v2773
  %v2790 = vmul.f32 %v2662, %v2774
  %v2791 = vmul.f32 %v2663, %v2775
  %v2792 = vmul.f32 %v2664, %v2776
  %v2793 = vlaneseq
  %v2794 = vshrl.u32 %v2793, 7
  %v2795 = vsub.s32 5, %v2794
  %v2796 = vrot.slane %v47, %v2795
  %v2797 = vmul.f32 %v2777, %v2796
  %v2798 = vmul.f32 %v2778, %v2796
  %v2799 = vmul.f32 %v2779, %v2796
  %v2800 = vmul.f32 %v2780, %v2796
  %v2801 = vmul.f32 %v2781, %v2796
  %v2802 = vmul.f32 %v2782, %v2796
  %v2803 = vmul.f32 %v2783, %v2796
  %v2804 = vmul.f32 %v2784, %v2796
  %v2805 = vmul.f32 %v2785, %v2796
  %v2806 = vmul.f32 %v2786, %v2796
  %v2807 = vmul.f32 %v2787, %v2796
  %v2808 = vmul.f32 %v2788, %v2796
  %v2809 = vmul.f32 %v2789, %v2796
  %v2810 = vmul.f32 %v2790, %v2796
  %v2811 = vmul.f32 %v2791, %v2796
  %v2812 = vmul.f32 %v2792, %v2796
  %v2813 = vlaneseq
  %v2814 = vshrl.u32 %v2813, 7
  %v2815 = vsub.s32 6, %v2814
  %v2816 = vrot.slane %v47, %v2815
  %v2817 = vadd.f32 %v2797, %v2816
  %v2818 = vadd.f32 %v2798, %v2816
  %v2819 = vadd.f32 %v2799, %v2816
  %v2820 = vadd.f32 %v2800, %v2816
  %v2821 = vadd.f32 %v2801, %v2816
  %v2822 = vadd.f32 %v2802, %v2816
  %v2823 = vadd.f32 %v2803, %v2816
  %v2824 = vadd.f32 %v2804, %v2816
  %v2825 = vadd.f32 %v2805, %v2816
  %v2826 = vadd.f32 %v2806, %v2816
  %v2827 = vadd.f32 %v2807, %v2816
  %v2828 = vadd.f32 %v2808, %v2816
  %v2829 = vadd.f32 %v2809, %v2816
  %v2830 = vadd.f32 %v2810, %v2816
  %v2831 = vadd.f32 %v2811, %v2816
  %v2832 = vadd.f32 %v2812, %v2816
  %2833 = vmatprep.subr.mxu0 0.0
  %2834 = vmatpush1.msra.mxu0 %v2817
  %2835 = vmatprep.subr.mxu0 0.0
  %2836 = vmatpush1.msra.mxu0 %v2818
  %2837 = vmatprep.subr.mxu0 0.0
  %2838 = vmatpush1.msra.mxu0 %v2819
  %2839 = vmatprep.subr.mxu0 0.0
  %2840 = vmatpush1.msra.mxu0 %v2820
  %2841 = vmatprep.subr.mxu0 0.0
  %2842 = vmatpush1.msra.mxu0 %v2821
  %2843 = vmatprep.subr.mxu0 0.0
  %2844 = vmatpush1.msra.mxu0 %v2822
  %2845 = vmatprep.subr.mxu0 0.0
  %2846 = vmatpush1.msra.mxu0 %v2823
  %2847 = vmatprep.subr.mxu0 0.0
  %2848 = vmatpush1.msra.mxu0 %v2824
  %2849 = vmatprep.subr.mxu0 0.0
  %2850 = vmatpush1.msra.mxu0 %v2825
  %2851 = vmatprep.subr.mxu0 0.0
  %2852 = vmatpush1.msra.mxu0 %v2826
  %2853 = vmatprep.subr.mxu0 0.0
  %2854 = vmatpush1.msra.mxu0 %v2827
  %2855 = vmatprep.subr.mxu0 0.0
  %2856 = vmatpush1.msra.mxu0 %v2828
  %2857 = vmatprep.subr.mxu0 0.0
  %2858 = vmatpush1.msra.mxu0 %v2829
  %2859 = vmatprep.subr.mxu0 0.0
  %2860 = vmatpush1.msra.mxu0 %v2830
  %2861 = vmatprep.subr.mxu0 0.0
  %2862 = vmatpush1.msra.mxu0 %v2831
  %2863 = vmatprep.subr.mxu0 0.0
  %2864 = vmatpush1.msra.mxu0 %v2832
  %2865 = vmatprep.subr.mxu0 0.0
  %2866 = vmatpush1.msra.mxu0 0.0
  %2867 = vmatprep.subr.mxu0 0.0
  %2868 = vmatpush1.msra.mxu0 0.0
  %2869 = vmatprep.subr.mxu0 0.0
  %2870 = vmatpush1.msra.mxu0 0.0
  %2871 = vmatprep.subr.mxu0 0.0
  %2872 = vmatpush1.msra.mxu0 0.0
  %2873 = vmatprep.subr.mxu0 0.0
  %2874 = vmatpush1.msra.mxu0 0.0
  %2875 = vmatprep.subr.mxu0 0.0
  %2876 = vmatpush1.msra.mxu0 0.0
  %2877 = vmatprep.subr.mxu0 0.0
  %2878 = vmatpush1.msra.mxu0 0.0
  %2879 = vmatprep.subr.mxu0 0.0
  %2880 = vmatpush1.msra.mxu0 0.0
  %2881 = vmatprep.subr.mxu0 0.0
  %2882 = vmatpush1.msra.mxu0 0.0
  %2883 = vmatprep.subr.mxu0 0.0
  %2884 = vmatpush1.msra.mxu0 0.0
  %2885 = vmatprep.subr.mxu0 0.0
  %2886 = vmatpush1.msra.mxu0 0.0
  %2887 = vmatprep.subr.mxu0 0.0
  %2888 = vmatpush1.msra.mxu0 0.0
  %2889 = vmatprep.subr.mxu0 0.0
  %2890 = vmatpush1.msra.mxu0 0.0
  %2891 = vmatprep.subr.mxu0 0.0
  %2892 = vmatpush1.msra.mxu0 0.0
  %2893 = vmatprep.subr.mxu0 0.0
  %2894 = vmatpush1.msra.mxu0 0.0
  %2895 = vmatprep.subr.mxu0 0.0
  %2896 = vmatpush1.msra.mxu0 0.0
  %2897 = vmatprep.mubr.f32.mxu0 0.0
  %2898 = vmatmul.mubr.f32.gmra.mrb[0].mxu0 %v64
  %v2899 = vpop.f32.mrb[0].mxu0
  %v2900 = vadd.f32 0.0, %v2899
  %v2901 = vpop.f32.mrb[0].mxu0
  %2902 = vmatprep.mubr.f32.mxu0 0.0
  %2903 = vmatmul.mubr.f32.gmra.mrb[0].mxu0 %v65
  %v2904 = vpop.f32.mrb[0].mxu0
  %v2905 = vadd.f32 0.0, %v2904
  %v2906 = vpop.f32.mrb[0].mxu0
  %2907 = vdwg.mxu0
  %2909 = vset.pattern.permute.xlu0 0
  %2910 = vperm.xlu0 %2909, %v24
  %v2911 = vpop.permute.xlu0 %2910
  %v2913 = vmul.f32 %v2900, %v2911
  %v2914 = vmul.f32 %v2905, %v2911
  %v2915 = vld [vmem:[%s4 + $0x150] sm:$0xff]
  %v2916 = vld [vmem:[%s4 + $0x158] sm:$0xff]
  %v2917 = vld [vmem:[%s4 + $0x160] sm:$0xff]
  %v2919 = vsel %vm682, %v2913, 0
  %2921 = vmatprep.subr.mxu0 0.0
  %2922 = vmatpush1.msra.mxu0 %v2915
  %2923 = vmatprep.subr.mxu0 0.0
  %2924 = vmatpush1.msra.mxu0 %v2916
  %2925 = vmatprep.subr.mxu0 0.0
  %2926 = vmatpush1.msra.mxu0 0.0
  %2927 = vmatprep.subr.mxu0 0.0
  %2928 = vmatpush1.msra.mxu0 0.0
  %2929 = vmatprep.subr.mxu0 0.0
  %2930 = vmatpush1.msra.mxu0 0.0
  %2931 = vmatprep.subr.mxu0 0.0
  %2932 = vmatpush1.msra.mxu0 0.0
  %2933 = vmatprep.subr.mxu0 0.0
  %2934 = vmatpush1.msra.mxu0 0.0
  %2935 = vmatprep.subr.mxu0 0.0
  %2936 = vmatpush1.msra.mxu0 0.0
  %2937 = vmatprep.subr.mxu0 0.0
  %2938 = vmatpush1.msra.mxu0 0.0
  %2939 = vmatprep.subr.mxu0 0.0
  %2940 = vmatpush1.msra.mxu0 0.0
  %2941 = vmatprep.subr.mxu0 0.0
  %2942 = vmatpush1.msra.mxu0 0.0
  %2943 = vmatprep.subr.mxu0 0.0
  %2944 = vmatpush1.msra.mxu0 0.0
  %2945 = vmatprep.subr.mxu0 0.0
  %2946 = vmatpush1.msra.mxu0 0.0
  %2947 = vmatprep.subr.mxu0 0.0
  %2948 = vmatpush1.msra.mxu0 0.0
  %2949 = vmatprep.subr.mxu0 0.0
  %2950 = vmatpush1.msra.mxu0 0.0
  %2951 = vmatprep.subr.mxu0 0.0
  %2952 = vmatpush1.msra.mxu0 0.0
  %2953 = vmatprep.subr.mxu0 0.0
  %2954 = vmatpush1.msra.mxu0 0.0
  %2955 = vmatprep.subr.mxu0 0.0
  %2956 = vmatpush1.msra.mxu0 0.0
  %2957 = vmatprep.subr.mxu0 0.0
  %2958 = vmatpush1.msra.mxu0 0.0
  %2959 = vmatprep.subr.mxu0 0.0
  %2960 = vmatpush1.msra.mxu0 0.0
  %2961 = vmatprep.subr.mxu0 0.0
  %2962 = vmatpush1.msra.mxu0 0.0
  %2963 = vmatprep.subr.mxu0 0.0
  %2964 = vmatpush1.msra.mxu0 0.0
  %2965 = vmatprep.subr.mxu0 0.0
  %2966 = vmatpush1.msra.mxu0 0.0
  %2967 = vmatprep.subr.mxu0 0.0
  %2968 = vmatpush1.msra.mxu0 0.0
  %2969 = vmatprep.subr.mxu0 0.0
  %2970 = vmatpush1.msra.mxu0 0.0
  %2971 = vmatprep.subr.mxu0 0.0
  %2972 = vmatpush1.msra.mxu0 0.0
  %2973 = vmatprep.subr.mxu0 0.0
  %2974 = vmatpush1.msra.mxu0 0.0
  %2975 = vmatprep.subr.mxu0 0.0
  %2976 = vmatpush1.msra.mxu0 0.0
  %2977 = vmatprep.subr.mxu0 0.0
  %2978 = vmatpush1.msra.mxu0 0.0
  %2979 = vmatprep.subr.mxu0 0.0
  %2980 = vmatpush1.msra.mxu0 0.0
  %2981 = vmatprep.subr.mxu0 0.0
  %2982 = vmatpush1.msra.mxu0 0.0
  %2983 = vmatprep.subr.mxu0 0.0
  %2984 = vmatpush1.msra.mxu0 0.0
  %2985 = vmatprep.mubr.f32.mxu0 0.0
  %2986 = vmatmul.mubr.f32.gmra.mrb[0].mxu0 %v2919
  %v2987 = vpop.f32.mrb[0].mxu0
  %v2988 = vadd.f32 %v2917, %v2987
  %v2989 = vpop.f32.mrb[0].mxu0
  %2990 = vdwg.mxu0
  %v2991 = vld [vmem:[%s4] sm:$0xff]
  %v2992 = vld [vmem:[%s4 + $0x8] sm:$0xff]
  %v2993 = vld [vmem:[%s4 + $0x10] sm:$0xff]
  %v2994 = vld [vmem:[%s4 + $0x18] sm:$0xff]
  %v2995 = vld [vmem:[%s4 + $0x20] sm:$0xff]
  %v2996 = vld [vmem:[%s4 + $0x28] sm:$0xff]
  %v2997 = vld [vmem:[%s4 + $0x30] sm:$0xff]
  %v2998 = vld [vmem:[%s4 + $0x38] sm:$0xff]
  %v2999 = vld [vmem:[%s4 + $0x40] sm:$0xff]
  %v3000 = vld [vmem:[%s4 + $0x48] sm:$0xff]
  %v3001 = vld [vmem:[%s4 + $0x50] sm:$0xff]
  %v3002 = vld [vmem:[%s4 + $0x58] sm:$0xff]
  %v3003 = vld [vmem:[%s4 + $0x60] sm:$0xff]
  %v3004 = vld [vmem:[%s4 + $0x68] sm:$0xff]
  %v3005 = vld [vmem:[%s4 + $0x70] sm:$0xff]
  %v3006 = vld [vmem:[%s4 + $0x78] sm:$0xff]
  %v3007 = vld [vmem:[%s4 + $0x80] sm:$0xff]
  %v3008 = vld [vmem:[%s4 + $0x88] sm:$0xff]
  %v3009 = vld [vmem:[%s4 + $0x90] sm:$0xff]
  %v3010 = vld [vmem:[%s4 + $0x98] sm:$0xff]
  %v3011 = vld [vmem:[%s4 + $0xa0] sm:$0xff]
  %v3012 = vsel %vm1153, %v2988, 0.0
  %3013 = vadd.xlane.f32.xlu0 %v3012
  %v3014 = vpop.xlane.xlu0 %3013
  %v3015 = vrcp.pop 32.0
  %v3016 = vmul.f32 %v3014, %v3015
  %v3017 = vsub.f32 %v2988, %v3016
  %v3018 = vmul.f32 %v3017, %v3017
  %v3019 = vsel %vm1153, %v3018, 0.0
  %3020 = vadd.xlane.f32.xlu0 %v3019
  %v3021 = vpop.xlane.xlu0 %3020
  %v3022 = vmul.f32 %v3021, %v3015
  %v3023 = vadd.f32 %v3022, 1e-05
  %v3024 = vrsqrt.pop %v3023
  %v3025 = vmul.f32 %v3017, %v3024
  %v3026 = vlaneseq
  %v3027 = vshrl.u32 %v3026, 7
  %v3028 = vsub.s32 4, %v3027
  %v3029 = vrot.slane %v3011, %v3028
  %v3030 = vmul.f32 %v3025, %v3029
  %v3031 = vlaneseq
  %v3032 = vshrl.u32 %v3031, 7
  %v3033 = vsub.s32 5, %v3032
  %v3034 = vrot.slane %v3011, %v3033
  %v3035 = vadd.f32 %v3030, %v3034
  %v3036 = vlaneseq
  %v3037 = vshrl.u32 %v3036, 7
  %v3038 = vsub.s32 0, %v3037
  %v3039 = vrot.slane %v3011, %v3038
  %v3041 = vsel %vm1153, %v3035, 0
  %3043 = vmatprep.subr.mxu0 0.0
  %3044 = vmatpush1.msra.mxu0 %v2991
  %3045 = vmatprep.subr.mxu0 0.0
  %3046 = vmatpush1.msra.mxu0 %v2992
  %3047 = vmatprep.subr.mxu0 0.0
  %3048 = vmatpush1.msra.mxu0 %v2993
  %3049 = vmatprep.subr.mxu0 0.0
  %3050 = vmatpush1.msra.mxu0 %v2994
  %3051 = vmatprep.subr.mxu0 0.0
  %3052 = vmatpush1.msra.mxu0 0.0
  %3053 = vmatprep.subr.mxu0 0.0
  %3054 = vmatpush1.msra.mxu0 0.0
  %3055 = vmatprep.subr.mxu0 0.0
  %3056 = vmatpush1.msra.mxu0 0.0
  %3057 = vmatprep.subr.mxu0 0.0
  %3058 = vmatpush1.msra.mxu0 0.0
  %3059 = vmatprep.subr.mxu0 0.0
  %3060 = vmatpush1.msra.mxu0 0.0
  %3061 = vmatprep.subr.mxu0 0.0
  %3062 = vmatpush1.msra.mxu0 0.0
  %3063 = vmatprep.subr.mxu0 0.0
  %3064 = vmatpush1.msra.mxu0 0.0
  %3065 = vmatprep.subr.mxu0 0.0
  %3066 = vmatpush1.msra.mxu0 0.0
  %3067 = vmatprep.subr.mxu0 0.0
  %3068 = vmatpush1.msra.mxu0 0.0
  %3069 = vmatprep.subr.mxu0 0.0
  %3070 = vmatpush1.msra.mxu0 0.0
  %3071 = vmatprep.subr.mxu0 0.0
  %3072 = vmatpush1.msra.mxu0 0.0
  %3073 = vmatprep.subr.mxu0 0.0
  %3074 = vmatpush1.msra.mxu0 0.0
  %3075 = vmatprep.subr.mxu0 0.0
  %3076 = vmatpush1.msra.mxu0 0.0
  %3077 = vmatprep.subr.mxu0 0.0
  %3078 = vmatpush1.msra.mxu0 0.0
  %3079 = vmatprep.subr.mxu0 0.0
  %3080 = vmatpush1.msra.mxu0 0.0
  %3081 = vmatprep.subr.mxu0 0.0
  %3082 = vmatpush1.msra.mxu0 0.0
  %3083 = vmatprep.subr.mxu0 0.0
  %3084 = vmatpush1.msra.mxu0 0.0
  %3085 = vmatprep.subr.mxu0 0.0
  %3086 = vmatpush1.msra.mxu0 0.0
  %3087 = vmatprep.subr.mxu0 0.0
  %3088 = vmatpush1.msra.mxu0 0.0
  %3089 = vmatprep.subr.mxu0 0.0
  %3090 = vmatpush1.msra.mxu0 0.0
  %3091 = vmatprep.subr.mxu0 0.0
  %3092 = vmatpush1.msra.mxu0 0.0
  %3093 = vmatprep.subr.mxu0 0.0
  %3094 = vmatpush1.msra.mxu0 0.0
  %3095 = vmatprep.subr.mxu0 0.0
  %3096 = vmatpush1.msra.mxu0 0.0
  %3097 = vmatprep.subr.mxu0 0.0
  %3098 = vmatpush1.msra.mxu0 0.0
  %3099 = vmatprep.subr.mxu0 0.0
  %3100 = vmatpush1.msra.mxu0 0.0
  %3101 = vmatprep.subr.mxu0 0.0
  %3102 = vmatpush1.msra.mxu0 0.0
  %3103 = vmatprep.subr.mxu0 0.0
  %3104 = vmatpush1.msra.mxu0 0.0
  %3105 = vmatprep.subr.mxu0 0.0
  %3106 = vmatpush1.msra.mxu0 0.0
  %3107 = vmatprep.mubr.f32.mxu0 0.0
  %3108 = vmatmul.mubr.f32.gmra.mrb[0].mxu0 %v3041
  %v3109 = vpop.f32.mrb[0].mxu0
  %v3110 = vadd.f32 %v3039, %v3109
  %v3111 = vpop.f32.mrb[0].mxu0
  %3112 = vdwg.mxu0
  %3114 = vrot.lane.b32.xlu0 %v3110, 120
  %v3115 = vpop.permute.xlu0 %3114
  %3116 = vrot.lane.b32.xlu0 %v3110, 112
  %v3117 = vpop.permute.xlu0 %3116
  %3118 = vrot.lane.b32.xlu0 %v3110, 104
  %v3119 = vpop.permute.xlu0 %3118
  %3120 = vrot.lane.b32.xlu0 %v3110, 96
  %v3121 = vpop.permute.xlu0 %3120
  %3122 = vrot.lane.b32.xlu0 %v3115, 96
  %v3123 = vpop.permute.xlu0 %3122
  %3124 = vrot.lane.b32.xlu0 %v3117, 96
  %v3125 = vpop.permute.xlu0 %3124
  %3126 = vrot.lane.b32.xlu0 %v3119, 96
  %v3127 = vpop.permute.xlu0 %3126
  %v3128 = vsel %vm665, %v3110, 0
  %v3130 = vsel %vm665, %v3115, 0
  %v3132 = vsel %vm665, %v3117, 0
  %v3134 = vsel %vm665, %v3119, 0
  %v3136 = vsel %vm665, %v3121, 0
  %v3138 = vsel %vm665, %v3123, 0
  %v3140 = vsel %vm665, %v3125, 0
  %v3142 = vsel %vm665, %v3127, 0
  %3144 = vmatprep.subr.mxu0 0.0
  %3145 = vmatpush1.xpose.msra.mxu0 %v3136
  %3146 = vmatprep.subr.mxu0 0.0
  %3147 = vmatpush1.xpose.msra.mxu0 %v3138
  %3148 = vmatprep.subr.mxu0 0.0
  %3149 = vmatpush1.xpose.msra.mxu0 %v3140
  %3150 = vmatprep.subr.mxu0 0.0
  %3151 = vmatpush1.xpose.msra.mxu0 %v3142
  %3152 = vmatprep.subr.mxu0 0.0
  %3153 = vmatpush1.xpose.msra.mxu0 0.0
  %3154 = vmatprep.subr.mxu0 0.0
  %3155 = vmatpush1.xpose.msra.mxu0 0.0
  %3156 = vmatprep.subr.mxu0 0.0
  %3157 = vmatpush1.xpose.msra.mxu0 0.0
  %3158 = vmatprep.subr.mxu0 0.0
  %3159 = vmatpush1.xpose.msra.mxu0 0.0
  %3160 = vmatprep.subr.mxu0 0.0
  %3161 = vmatpush1.xpose.msra.mxu0 0.0
  %3162 = vmatprep.subr.mxu0 0.0
  %3163 = vmatpush1.xpose.msra.mxu0 0.0
  %3164 = vmatprep.subr.mxu0 0.0
  %3165 = vmatpush1.xpose.msra.mxu0 0.0
  %3166 = vmatprep.subr.mxu0 0.0
  %3167 = vmatpush1.xpose.msra.mxu0 0.0
  %3168 = vmatprep.subr.mxu0 0.0
  %3169 = vmatpush1.xpose.msra.mxu0 0.0
  %3170 = vmatprep.subr.mxu0 0.0
  %3171 = vmatpush1.xpose.msra.mxu0 0.0
  %3172 = vmatprep.subr.mxu0 0.0
  %3173 = vmatpush1.xpose.msra.mxu0 0.0
  %3174 = vmatprep.subr.mxu0 0.0
  %3175 = vmatpush1.xpose.msra.mxu0 0.0
  %3176 = vmatprep.subr.mxu0 0.0
  %3177 = vmatpush1.xpose.msra.mxu0 0.0
  %3178 = vmatprep.subr.mxu0 0.0
  %3179 = vmatpush1.xpose.msra.mxu0 0.0
  %3180 = vmatprep.subr.mxu0 0.0
  %3181 = vmatpush1.xpose.msra.mxu0 0.0
  %3182 = vmatprep.subr.mxu0 0.0
  %3183 = vmatpush1.xpose.msra.mxu0 0.0
  %3184 = vmatprep.subr.mxu0 0.0
  %3185 = vmatpush1.xpose.msra.mxu0 0.0
  %3186 = vmatprep.subr.mxu0 0.0
  %3187 = vmatpush1.xpose.msra.mxu0 0.0
  %3188 = vmatprep.subr.mxu0 0.0
  %3189 = vmatpush1.xpose.msra.mxu0 0.0
  %3190 = vmatprep.subr.mxu0 0.0
  %3191 = vmatpush1.xpose.msra.mxu0 0.0
  %3192 = vmatprep.subr.mxu0 0.0
  %3193 = vmatpush1.xpose.msra.mxu0 0.0
  %3194 = vmatprep.subr.mxu0 0.0
  %3195 = vmatpush1.xpose.msra.mxu0 0.0
  %3196 = vmatprep.subr.mxu0 0.0
  %3197 = vmatpush1.xpose.msra.mxu0 0.0
  %3198 = vmatprep.subr.mxu0 0.0
  %3199 = vmatpush1.xpose.msra.mxu0 0.0
  %3200 = vmatprep.subr.mxu0 0.0
  %3201 = vmatpush1.xpose.msra.mxu0 0.0
  %3202 = vmatprep.subr.mxu0 0.0
  %3203 = vmatpush1.xpose.msra.mxu0 0.0
  %3204 = vmatprep.subr.mxu0 0.0
  %3205 = vmatpush1.xpose.msra.mxu0 0.0
  %3206 = vmatprep.subr.mxu0 0.0
  %3207 = vmatpush1.xpose.msra.mxu0 0.0
  %3208 = vmatprep.mubr.f32.mxu0 0.0
  %3209 = vmatmul.mubr.f32.gmra.mrb[0].mxu0 %v3128
  %v3210 = vpop.f32.mrb[0].mxu0
  %v3211 = vadd.f32 %v20, %v3210
  %v3212 = vpop.f32.mrb[0].mxu0
  %3213 = vmatprep.mubr.f32.mxu0 0.0
  %3214 = vmatmul.mubr.f32.gmra.mrb[0].mxu0 %v3130
  %v3215 = vpop.f32.mrb[0].mxu0
  %v3216 = vadd.f32 %v21, %v3215
  %v3217 = vpop.f32.mrb[0].mxu0
  %3218 = vmatprep.mubr.f32.mxu0 0.0
  %3219 = vmatmul.mubr.f32.gmra.mrb[0].mxu0 %v3132
  %v3220 = vpop.f32.mrb[0].mxu0
  %v3221 = vadd.f32 %v22, %v3220
  %v3222 = vpop.f32.mrb[0].mxu0
  %3223 = vmatprep.mubr.f32.mxu0 0.0
  %3224 = vmatmul.mubr.f32.gmra.mrb[0].mxu0 %v3134
  %v3225 = vpop.f32.mrb[0].mxu0
  %v3226 = vadd.f32 %v23, %v3225
  %v3227 = vpop.f32.mrb[0].mxu0
  %3228 = vdwg.mxu0
  %v3229 = vsel %vm1153, %v3211, -inf
  %3230 = vmax.xlane.f32.xlu0 %v3229
  %v3231 = vpop.xlane.xlu0 %3230
  %v3232 = vsel %vm1153, %v3216, -inf
  %3233 = vmax.xlane.f32.xlu0 %v3232
  %v3234 = vpop.xlane.xlu0 %3233
  %v3235 = vsel %vm1153, %v3221, -inf
  %3236 = vmax.xlane.f32.xlu0 %v3235
  %v3237 = vpop.xlane.xlu0 %3236
  %v3238 = vsel %vm1153, %v3226, -inf
  %3239 = vmax.xlane.f32.xlu0 %v3238
  %v3240 = vpop.xlane.xlu0 %3239
  %v3241 = vsub.f32 %v3211, %v3231
  %v3242 = vsub.f32 %v3216, %v3234
  %v3243 = vsub.f32 %v3221, %v3237
  %v3244 = vsub.f32 %v3226, %v3240
  %v3245 = vmul.f32 %v3241, 1.442695
  %v3246 = vpow.pop %v3245
  %v3247 = vmul.f32 %v3242, 1.442695
  %v3248 = vpow.pop %v3247
  %v3249 = vmul.f32 %v3243, 1.442695
  %v3250 = vpow.pop %v3249
  %v3251 = vmul.f32 %v3244, 1.442695
  %v3252 = vpow.pop %v3251
  %v3253 = vsel %vm1153, %v3246, 0.0
  %3254 = vadd.xlane.f32.xlu0 %v3253
  %v3255 = vpop.xlane.xlu0 %3254
  %v3256 = vsel %vm1153, %v3248, 0.0
  %3257 = vadd.xlane.f32.xlu0 %v3256
  %v3258 = vpop.xlane.xlu0 %3257
  %v3259 = vsel %vm1153, %v3250, 0.0
  %3260 = vadd.xlane.f32.xlu0 %v3259
  %v3261 = vpop.xlane.xlu0 %3260
  %v3262 = vsel %vm1153, %v3252, 0.0
  %3263 = vadd.xlane.f32.xlu0 %v3262
  %v3264 = vpop.xlane.xlu0 %3263
  %v3265 = vrcp.pop %v3255
  %v3266 = vrcp.pop %v3258
  %v3267 = vrcp.pop %v3261
  %v3268 = vrcp.pop %v3264
  %v3269 = vmul.f32 %v3246, %v3265
  %v3270 = vmul.f32 %v3248, %v3266
  %v3271 = vmul.f32 %v3250, %v3267
  %v3272 = vmul.f32 %v3252, %v3268
  %3273 = vrot.lane.b32.xlu0 %v3110, 64
  %v3274 = vpop.permute.xlu0 %3273
  %3275 = vrot.lane.b32.xlu0 %v3115, 64
  %v3276 = vpop.permute.xlu0 %3275
  %3277 = vrot.lane.b32.xlu0 %v3117, 64
  %v3278 = vpop.permute.xlu0 %3277
  %3279 = vrot.lane.b32.xlu0 %v3119, 64
  %v3280 = vpop.permute.xlu0 %3279
  %v3286 = vsel %vm1153, %v3269, 0
  %v3289 = vsel %vm1153, %v3270, 0
  %v3292 = vsel %vm1153, %v3271, 0
  %v3295 = vsel %vm1153, %v3272, 0
  %3297 = vmatprep.subr.mxu0 0.0
  %3298 = vmatpush1.msra.mxu0 %v3274
  %3299 = vmatprep.subr.mxu0 0.0
  %3300 = vmatpush1.msra.mxu0 %v3276
  %3301 = vmatprep.subr.mxu0 0.0
  %3302 = vmatpush1.msra.mxu0 %v3278
  %3303 = vmatprep.subr.mxu0 0.0
  %3304 = vmatpush1.msra.mxu0 %v3280
  %3305 = vmatprep.subr.mxu0 0.0
  %3306 = vmatpush1.msra.mxu0 0.0
  %3307 = vmatprep.subr.mxu0 0.0
  %3308 = vmatpush1.msra.mxu0 0.0
  %3309 = vmatprep.subr.mxu0 0.0
  %3310 = vmatpush1.msra.mxu0 0.0
  %3311 = vmatprep.subr.mxu0 0.0
  %3312 = vmatpush1.msra.mxu0 0.0
  %3313 = vmatprep.subr.mxu0 0.0
  %3314 = vmatpush1.msra.mxu0 0.0
  %3315 = vmatprep.subr.mxu0 0.0
  %3316 = vmatpush1.msra.mxu0 0.0
  %3317 = vmatprep.subr.mxu0 0.0
  %3318 = vmatpush1.msra.mxu0 0.0
  %3319 = vmatprep.subr.mxu0 0.0
  %3320 = vmatpush1.msra.mxu0 0.0
  %3321 = vmatprep.subr.mxu0 0.0
  %3322 = vmatpush1.msra.mxu0 0.0
  %3323 = vmatprep.subr.mxu0 0.0
  %3324 = vmatpush1.msra.mxu0 0.0
  %3325 = vmatprep.subr.mxu0 0.0
  %3326 = vmatpush1.msra.mxu0 0.0
  %3327 = vmatprep.subr.mxu0 0.0
  %3328 = vmatpush1.msra.mxu0 0.0
  %3329 = vmatprep.subr.mxu0 0.0
  %3330 = vmatpush1.msra.mxu0 0.0
  %3331 = vmatprep.subr.mxu0 0.0
  %3332 = vmatpush1.msra.mxu0 0.0
  %3333 = vmatprep.subr.mxu0 0.0
  %3334 = vmatpush1.msra.mxu0 0.0
  %3335 = vmatprep.subr.mxu0 0.0
  %3336 = vmatpush1.msra.mxu0 0.0
  %3337 = vmatprep.subr.mxu0 0.0
  %3338 = vmatpush1.msra.mxu0 0.0
  %3339 = vmatprep.subr.mxu0 0.0
  %3340 = vmatpush1.msra.mxu0 0.0
  %3341 = vmatprep.subr.mxu0 0.0
  %3342 = vmatpush1.msra.mxu0 0.0
  %3343 = vmatprep.subr.mxu0 0.0
  %3344 = vmatpush1.msra.mxu0 0.0
  %3345 = vmatprep.subr.mxu0 0.0
  %3346 = vmatpush1.msra.mxu0 0.0
  %3347 = vmatprep.subr.mxu0 0.0
  %3348 = vmatpush1.msra.mxu0 0.0
  %3349 = vmatprep.subr.mxu0 0.0
  %3350 = vmatpush1.msra.mxu0 0.0
  %3351 = vmatprep.subr.mxu0 0.0
  %3352 = vmatpush1.msra.mxu0 0.0
  %3353 = vmatprep.subr.mxu0 0.0
  %3354 = vmatpush1.msra.mxu0 0.0
  %3355 = vmatprep.subr.mxu0 0.0
  %3356 = vmatpush1.msra.mxu0 0.0
  %3357 = vmatprep.subr.mxu0 0.0
  %3358 = vmatpush1.msra.mxu0 0.0
  %3359 = vmatprep.subr.mxu0 0.0
  %3360 = vmatpush1.msra.mxu0 0.0
  %3361 = vmatprep.mubr.f32.mxu0 0.0
  %3362 = vmatmul.mubr.f32.gmra.mrb[0].mxu0 %v3286
  %v3363 = vpop.f32.mrb[0].mxu0
  %v3364 = vadd.f32 0.0, %v3363
  %v3365 = vpop.f32.mrb[0].mxu0
  %3366 = vmatprep.mubr.f32.mxu0 0.0
  %3367 = vmatmul.mubr.f32.gmra.mrb[0].mxu0 %v3289
  %v3368 = vpop.f32.mrb[0].mxu0
  %v3369 = vadd.f32 0.0, %v3368
  %v3370 = vpop.f32.mrb[0].mxu0
  %3371 = vmatprep.mubr.f32.mxu0 0.0
  %3372 = vmatmul.mubr.f32.gmra.mrb[0].mxu0 %v3292
  %v3373 = vpop.f32.mrb[0].mxu0
  %v3374 = vadd.f32 0.0, %v3373
  %v3375 = vpop.f32.mrb[0].mxu0
  %3376 = vmatprep.mubr.f32.mxu0 0.0
  %3377 = vmatmul.mubr.f32.gmra.mrb[0].mxu0 %v3295
  %v3378 = vpop.f32.mrb[0].mxu0
  %v3379 = vadd.f32 0.0, %v3378
  %v3380 = vpop.f32.mrb[0].mxu0
  %3381 = vdwg.mxu0
  %3383 = vrot.lane.b32.xlu0 %v3369, 8
  %v3384 = vpop.permute.xlu0 %3383
  %3387 = vrot.lane.b32.xlu0 %v3374, 16
  %v3388 = vpop.permute.xlu0 %3387
  %3391 = vrot.lane.b32.xlu0 %v3379, 24
  %v3392 = vpop.permute.xlu0 %3391
  %v3394 = vsel %vm665, %v3364, %v3384
  %v3395 = vsel %vm682, %v3394, %v3388
  %v3396 = vsel %vm703, %v3395, %v3392
  %v3398 = vsel %vm1153, %v3396, 0
  %3400 = vmatprep.subr.mxu0 0.0
  %3401 = vmatpush1.msra.mxu0 %v2995
  %3402 = vmatprep.subr.mxu0 0.0
  %3403 = vmatpush1.msra.mxu0 %v2996
  %3404 = vmatprep.subr.mxu0 0.0
  %3405 = vmatpush1.msra.mxu0 %v2997
  %3406 = vmatprep.subr.mxu0 0.0
  %3407 = vmatpush1.msra.mxu0 %v2998
  %3408 = vmatprep.subr.mxu0 0.0
  %3409 = vmatpush1.msra.mxu0 0.0
  %3410 = vmatprep.subr.mxu0 0.0
  %3411 = vmatpush1.msra.mxu0 0.0
  %3412 = vmatprep.subr.mxu0 0.0
  %3413 = vmatpush1.msra.mxu0 0.0
  %3414 = vmatprep.subr.mxu0 0.0
  %3415 = vmatpush1.msra.mxu0 0.0
  %3416 = vmatprep.subr.mxu0 0.0
  %3417 = vmatpush1.msra.mxu0 0.0
  %3418 = vmatprep.subr.mxu0 0.0
  %3419 = vmatpush1.msra.mxu0 0.0
  %3420 = vmatprep.subr.mxu0 0.0
  %3421 = vmatpush1.msra.mxu0 0.0
  %3422 = vmatprep.subr.mxu0 0.0
  %3423 = vmatpush1.msra.mxu0 0.0
  %3424 = vmatprep.subr.mxu0 0.0
  %3425 = vmatpush1.msra.mxu0 0.0
  %3426 = vmatprep.subr.mxu0 0.0
  %3427 = vmatpush1.msra.mxu0 0.0
  %3428 = vmatprep.subr.mxu0 0.0
  %3429 = vmatpush1.msra.mxu0 0.0
  %3430 = vmatprep.subr.mxu0 0.0
  %3431 = vmatpush1.msra.mxu0 0.0
  %3432 = vmatprep.subr.mxu0 0.0
  %3433 = vmatpush1.msra.mxu0 0.0
  %3434 = vmatprep.subr.mxu0 0.0
  %3435 = vmatpush1.msra.mxu0 0.0
  %3436 = vmatprep.subr.mxu0 0.0
  %3437 = vmatpush1.msra.mxu0 0.0
  %3438 = vmatprep.subr.mxu0 0.0
  %3439 = vmatpush1.msra.mxu0 0.0
  %3440 = vmatprep.subr.mxu0 0.0
  %3441 = vmatpush1.msra.mxu0 0.0
  %3442 = vmatprep.subr.mxu0 0.0
  %3443 = vmatpush1.msra.mxu0 0.0
  %3444 = vmatprep.subr.mxu0 0.0
  %3445 = vmatpush1.msra.mxu0 0.0
  %3446 = vmatprep.subr.mxu0 0.0
  %3447 = vmatpush1.msra.mxu0 0.0
  %3448 = vmatprep.subr.mxu0 0.0
  %3449 = vmatpush1.msra.mxu0 0.0
  %3450 = vmatprep.subr.mxu0 0.0
  %3451 = vmatpush1.msra.mxu0 0.0
  %3452 = vmatprep.subr.mxu0 0.0
  %3453 = vmatpush1.msra.mxu0 0.0
  %3454 = vmatprep.subr.mxu0 0.0
  %3455 = vmatpush1.msra.mxu0 0.0
  %3456 = vmatprep.subr.mxu0 0.0
  %3457 = vmatpush1.msra.mxu0 0.0
  %3458 = vmatprep.subr.mxu0 0.0
  %3459 = vmatpush1.msra.mxu0 0.0
  %3460 = vmatprep.subr.mxu0 0.0
  %3461 = vmatpush1.msra.mxu0 0.0
  %3462 = vmatprep.subr.mxu0 0.0
  %3463 = vmatpush1.msra.mxu0 0.0
  %3464 = vmatprep.mubr.f32.mxu0 0.0
  %3465 = vmatmul.mubr.f32.gmra.mrb[0].mxu0 %v3398
  %v3466 = vpop.f32.mrb[0].mxu0
  %v3467 = vadd.f32 0.0, %v3466
  %v3468 = vpop.f32.mrb[0].mxu0
  %3469 = vdwg.mxu0
  %v3470 = vadd.f32 %v2988, %v3467
  %v3471 = vlaneseq
  %v3472 = vshrl.u32 %v3471, 7
  %v3473 = vsub.s32 1, %v3472
  %v3474 = vrot.slane %v3011, %v3473
  %v3475 = vadd.f32 %v3470, %v3474
  %v3476 = vsel %vm1153, %v3475, 0.0
  %3477 = vadd.xlane.f32.xlu0 %v3476
  %v3478 = vpop.xlane.xlu0 %3477
  %v3479 = vmul.f32 %v3478, %v3015
  %v3480 = vsub.f32 %v3475, %v3479
  %v3481 = vmul.f32 %v3480, %v3480
  %v3482 = vsel %vm1153, %v3481, 0.0
  %3483 = vadd.xlane.f32.xlu0 %v3482
  %v3484 = vpop.xlane.xlu0 %3483
  %v3485 = vmul.f32 %v3484, %v3015
  %v3486 = vadd.f32 %v3485, 1e-05
  %v3487 = vrsqrt.pop %v3486
  %v3488 = vmul.f32 %v3480, %v3487
  %v3489 = vlaneseq
  %v3490 = vshrl.u32 %v3489, 7
  %v3491 = vsub.s32 6, %v3490
  %v3492 = vrot.slane %v3011, %v3491
  %v3493 = vmul.f32 %v3488, %v3492
  %v3494 = vlaneseq
  %v3495 = vshrl.u32 %v3494, 7
  %v3496 = vsub.s32 7, %v3495
  %v3497 = vrot.slane %v3011, %v3496
  %v3498 = vadd.f32 %v3493, %v3497
  %v3499 = vlaneseq
  %v3500 = vshrl.u32 %v3499, 7
  %v3501 = vsub.s32 2, %v3500
  %v3502 = vrot.slane %v3011, %v3501
  %v3504 = vsel %vm1153, %v3498, 0
  %3506 = vmatprep.subr.mxu0 0.0
  %3507 = vmatpush1.msra.mxu0 %v2999
  %3508 = vmatprep.subr.mxu0 0.0
  %3509 = vmatpush1.msra.mxu0 %v3000
  %3510 = vmatprep.subr.mxu0 0.0
  %3511 = vmatpush1.msra.mxu0 %v3001
  %3512 = vmatprep.subr.mxu0 0.0
  %3513 = vmatpush1.msra.mxu0 %v3002
  %3514 = vmatprep.subr.mxu0 0.0
  %3515 = vmatpush1.msra.mxu0 0.0
  %3516 = vmatprep.subr.mxu0 0.0
  %3517 = vmatpush1.msra.mxu0 0.0
  %3518 = vmatprep.subr.mxu0 0.0
  %3519 = vmatpush1.msra.mxu0 0.0
  %3520 = vmatprep.subr.mxu0 0.0
  %3521 = vmatpush1.msra.mxu0 0.0
  %3522 = vmatprep.subr.mxu0 0.0
  %3523 = vmatpush1.msra.mxu0 0.0
  %3524 = vmatprep.subr.mxu0 0.0
  %3525 = vmatpush1.msra.mxu0 0.0
  %3526 = vmatprep.subr.mxu0 0.0
  %3527 = vmatpush1.msra.mxu0 0.0
  %3528 = vmatprep.subr.mxu0 0.0
  %3529 = vmatpush1.msra.mxu0 0.0
  %3530 = vmatprep.subr.mxu0 0.0
  %3531 = vmatpush1.msra.mxu0 0.0
  %3532 = vmatprep.subr.mxu0 0.0
  %3533 = vmatpush1.msra.mxu0 0.0
  %3534 = vmatprep.subr.mxu0 0.0
  %3535 = vmatpush1.msra.mxu0 0.0
  %3536 = vmatprep.subr.mxu0 0.0
  %3537 = vmatpush1.msra.mxu0 0.0
  %3538 = vmatprep.subr.mxu0 0.0
  %3539 = vmatpush1.msra.mxu0 0.0
  %3540 = vmatprep.subr.mxu0 0.0
  %3541 = vmatpush1.msra.mxu0 0.0
  %3542 = vmatprep.subr.mxu0 0.0
  %3543 = vmatpush1.msra.mxu0 0.0
  %3544 = vmatprep.subr.mxu0 0.0
  %3545 = vmatpush1.msra.mxu0 0.0
  %3546 = vmatprep.subr.mxu0 0.0
  %3547 = vmatpush1.msra.mxu0 0.0
  %3548 = vmatprep.subr.mxu0 0.0
  %3549 = vmatpush1.msra.mxu0 0.0
  %3550 = vmatprep.subr.mxu0 0.0
  %3551 = vmatpush1.msra.mxu0 0.0
  %3552 = vmatprep.subr.mxu0 0.0
  %3553 = vmatpush1.msra.mxu0 0.0
  %3554 = vmatprep.subr.mxu0 0.0
  %3555 = vmatpush1.msra.mxu0 0.0
  %3556 = vmatprep.subr.mxu0 0.0
  %3557 = vmatpush1.msra.mxu0 0.0
  %3558 = vmatprep.subr.mxu0 0.0
  %3559 = vmatpush1.msra.mxu0 0.0
  %3560 = vmatprep.subr.mxu0 0.0
  %3561 = vmatpush1.msra.mxu0 0.0
  %3562 = vmatprep.subr.mxu0 0.0
  %3563 = vmatpush1.msra.mxu0 0.0
  %3564 = vmatprep.subr.mxu0 0.0
  %3565 = vmatpush1.msra.mxu0 0.0
  %3566 = vmatprep.subr.mxu0 0.0
  %3567 = vmatpush1.msra.mxu0 0.0
  %3568 = vmatprep.subr.mxu0 0.0
  %3569 = vmatpush1.msra.mxu0 0.0
  %3570 = vmatprep.mubr.f32.mxu0 0.0
  %3571 = vmatmul.mubr.f32.gmra.mrb[0].mxu0 %v3504
  %v3572 = vpop.f32.mrb[0].mxu0
  %v3573 = vadd.f32 %v3502, %v3572
  %v3574 = vpop.f32.mrb[0].mxu0
  %3575 = vdwg.mxu0
  %v3576 = vmax.f32 %v3573, 0.0
  %vm3577 = vcmask 523264
  %v3579 = vsel %vm3577, %v3576, 0
  %3581 = vmatprep.subr.mxu0 0.0
  %3582 = vmatpush1.msra.mxu0 %v3003
  %3583 = vmatprep.subr.mxu0 0.0
  %3584 = vmatpush1.msra.mxu0 %v3004
  %3585 = vmatprep.subr.mxu0 0.0
  %3586 = vmatpush1.msra.mxu0 %v3005
  %3587 = vmatprep.subr.mxu0 0.0
  %3588 = vmatpush1.msra.mxu0 %v3006
  %3589 = vmatprep.subr.mxu0 0.0
  %3590 = vmatpush1.msra.mxu0 %v3007
  %3591 = vmatprep.subr.mxu0 0.0
  %3592 = vmatpush1.msra.mxu0 %v3008
  %3593 = vmatprep.subr.mxu0 0.0
  %3594 = vmatpush1.msra.mxu0 %v3009
  %3595 = vmatprep.subr.mxu0 0.0
  %3596 = vmatpush1.msra.mxu0 %v3010
  %3597 = vmatprep.subr.mxu0 0.0
  %3598 = vmatpush1.msra.mxu0 0.0
  %3599 = vmatprep.subr.mxu0 0.0
  %3600 = vmatpush1.msra.mxu0 0.0
  %3601 = vmatprep.subr.mxu0 0.0
  %3602 = vmatpush1.msra.mxu0 0.0
  %3603 = vmatprep.subr.mxu0 0.0
  %3604 = vmatpush1.msra.mxu0 0.0
  %3605 = vmatprep.subr.mxu0 0.0
  %3606 = vmatpush1.msra.mxu0 0.0
  %3607 = vmatprep.subr.mxu0 0.0
  %3608 = vmatpush1.msra.mxu0 0.0
  %3609 = vmatprep.subr.mxu0 0.0
  %3610 = vmatpush1.msra.mxu0 0.0
  %3611 = vmatprep.subr.mxu0 0.0
  %3612 = vmatpush1.msra.mxu0 0.0
  %3613 = vmatprep.subr.mxu0 0.0
  %3614 = vmatpush1.msra.mxu0 0.0
  %3615 = vmatprep.subr.mxu0 0.0
  %3616 = vmatpush1.msra.mxu0 0.0
  %3617 = vmatprep.subr.mxu0 0.0
  %3618 = vmatpush1.msra.mxu0 0.0
  %3619 = vmatprep.subr.mxu0 0.0
  %3620 = vmatpush1.msra.mxu0 0.0
  %3621 = vmatprep.subr.mxu0 0.0
  %3622 = vmatpush1.msra.mxu0 0.0
  %3623 = vmatprep.subr.mxu0 0.0
  %3624 = vmatpush1.msra.mxu0 0.0
  %3625 = vmatprep.subr.mxu0 0.0
  %3626 = vmatpush1.msra.mxu0 0.0
  %3627 = vmatprep.subr.mxu0 0.0
  %3628 = vmatpush1.msra.mxu0 0.0
  %3629 = vmatprep.subr.mxu0 0.0
  %3630 = vmatpush1.msra.mxu0 0.0
  %3631 = vmatprep.subr.mxu0 0.0
  %3632 = vmatpush1.msra.mxu0 0.0
  %3633 = vmatprep.subr.mxu0 0.0
  %3634 = vmatpush1.msra.mxu0 0.0
  %3635 = vmatprep.subr.mxu0 0.0
  %3636 = vmatpush1.msra.mxu0 0.0
  %3637 = vmatprep.subr.mxu0 0.0
  %3638 = vmatpush1.msra.mxu0 0.0
  %3639 = vmatprep.subr.mxu0 0.0
  %3640 = vmatpush1.msra.mxu0 0.0
  %3641 = vmatprep.subr.mxu0 0.0
  %3642 = vmatpush1.msra.mxu0 0.0
  %3643 = vmatprep.subr.mxu0 0.0
  %3644 = vmatpush1.msra.mxu0 0.0
  %3645 = vmatprep.mubr.f32.mxu0 0.0
  %3646 = vmatmul.mubr.f32.gmra.mrb[0].mxu0 %v3579
  %v3647 = vpop.f32.mrb[0].mxu0
  %v3648 = vadd.f32 0.0, %v3647
  %v3649 = vpop.f32.mrb[0].mxu0
  %3650 = vdwg.mxu0
  %v3651 = vadd.f32 %v3475, %v3648
  %v3652 = vlaneseq
  %v3653 = vshrl.u32 %v3652, 7
  %v3654 = vsub.s32 3, %v3653
  %v3655 = vrot.slane %v3011, %v3654
  %v3656 = vadd.f32 %v3651, %v3655
  %v3657 = vld [vmem:[%s4 + $0xa8] sm:$0xff]
  %v3658 = vld [vmem:[%s4 + $0xb0] sm:$0xff]
  %v3659 = vld [vmem:[%s4 + $0xb8] sm:$0xff]
  %v3660 = vld [vmem:[%s4 + $0xc0] sm:$0xff]
  %v3661 = vld [vmem:[%s4 + $0xc8] sm:$0xff]
  %v3662 = vld [vmem:[%s4 + $0xd0] sm:$0xff]
  %v3663 = vld [vmem:[%s4 + $0xd8] sm:$0xff]
  %v3664 = vld [vmem:[%s4 + $0xe0] sm:$0xff]
  %v3665 = vld [vmem:[%s4 + $0xe8] sm:$0xff]
  %v3666 = vld [vmem:[%s4 + $0xf0] sm:$0xff]
  %v3667 = vld [vmem:[%s4 + $0xf8] sm:$0xff]
  %v3668 = vld [vmem:[%s4 + $0x100] sm:$0xff]
  %v3669 = vld [vmem:[%s4 + $0x108] sm:$0xff]
  %v3670 = vld [vmem:[%s4 + $0x110] sm:$0xff]
  %v3671 = vld [vmem:[%s4 + $0x118] sm:$0xff]
  %v3672 = vld [vmem:[%s4 + $0x120] sm:$0xff]
  %v3673 = vld [vmem:[%s4 + $0x128] sm:$0xff]
  %v3674 = vld [vmem:[%s4 + $0x130] sm:$0xff]
  %v3675 = vld [vmem:[%s4 + $0x138] sm:$0xff]
  %v3676 = vld [vmem:[%s4 + $0x140] sm:$0xff]
  %v3677 = vld [vmem:[%s4 + $0x148] sm:$0xff]
  %v3678 = vsel %vm1153, %v3656, 0.0
  %3679 = vadd.xlane.f32.xlu0 %v3678
  %v3680 = vpop.xlane.xlu0 %3679
  %v3681 = vmul.f32 %v3680, %v3015
  %v3682 = vsub.f32 %v3656, %v3681
  %v3683 = vmul.f32 %v3682, %v3682
  %v3684 = vsel %vm1153, %v3683, 0.0
  %3685 = vadd.xlane.f32.xlu0 %v3684
  %v3686 = vpop.xlane.xlu0 %3685
  %v3687 = vmul.f32 %v3686, %v3015
  %v3688 = vadd.f32 %v3687, 1e-05
  %v3689 = vrsqrt.pop %v3688
  %v3690 = vmul.f32 %v3682, %v3689
  %v3691 = vlaneseq
  %v3692 = vshrl.u32 %v3691, 7
  %v3693 = vsub.s32 4, %v3692
  %v3694 = vrot.slane %v3677, %v3693
  %v3695 = vmul.f32 %v3690, %v3694
  %v3696 = vlaneseq
  %v3697 = vshrl.u32 %v3696, 7
  %v3698 = vsub.s32 5, %v3697
  %v3699 = vrot.slane %v3677, %v3698
  %v3700 = vadd.f32 %v3695, %v3699
  %v3701 = vlaneseq
  %v3702 = vshrl.u32 %v3701, 7
  %v3703 = vsub.s32 0, %v3702
  %v3704 = vrot.slane %v3677, %v3703
  %v3706 = vsel %vm1153, %v3700, 0
  %3708 = vmatprep.subr.mxu0 0.0
  %3709 = vmatpush1.msra.mxu0 %v3657
  %3710 = vmatprep.subr.mxu0 0.0
  %3711 = vmatpush1.msra.mxu0 %v3658
  %3712 = vmatprep.subr.mxu0 0.0
  %3713 = vmatpush1.msra.mxu0 %v3659
  %3714 = vmatprep.subr.mxu0 0.0
  %3715 = vmatpush1.msra.mxu0 %v3660
  %3716 = vmatprep.subr.mxu0 0.0
  %3717 = vmatpush1.msra.mxu0 0.0
  %3718 = vmatprep.subr.mxu0 0.0
  %3719 = vmatpush1.msra.mxu0 0.0
  %3720 = vmatprep.subr.mxu0 0.0
  %3721 = vmatpush1.msra.mxu0 0.0
  %3722 = vmatprep.subr.mxu0 0.0
  %3723 = vmatpush1.msra.mxu0 0.0
  %3724 = vmatprep.subr.mxu0 0.0
  %3725 = vmatpush1.msra.mxu0 0.0
  %3726 = vmatprep.subr.mxu0 0.0
  %3727 = vmatpush1.msra.mxu0 0.0
  %3728 = vmatprep.subr.mxu0 0.0
  %3729 = vmatpush1.msra.mxu0 0.0
  %3730 = vmatprep.subr.mxu0 0.0
  %3731 = vmatpush1.msra.mxu0 0.0
  %3732 = vmatprep.subr.mxu0 0.0
  %3733 = vmatpush1.msra.mxu0 0.0
  %3734 = vmatprep.subr.mxu0 0.0
  %3735 = vmatpush1.msra.mxu0 0.0
  %3736 = vmatprep.subr.mxu0 0.0
  %3737 = vmatpush1.msra.mxu0 0.0
  %3738 = vmatprep.subr.mxu0 0.0
  %3739 = vmatpush1.msra.mxu0 0.0
  %3740 = vmatprep.subr.mxu0 0.0
  %3741 = vmatpush1.msra.mxu0 0.0
  %3742 = vmatprep.subr.mxu0 0.0
  %3743 = vmatpush1.msra.mxu0 0.0
  %3744 = vmatprep.subr.mxu0 0.0
  %3745 = vmatpush1.msra.mxu0 0.0
  %3746 = vmatprep.subr.mxu0 0.0
  %3747 = vmatpush1.msra.mxu0 0.0
  %3748 = vmatprep.subr.mxu0 0.0
  %3749 = vmatpush1.msra.mxu0 0.0
  %3750 = vmatprep.subr.mxu0 0.0
  %3751 = vmatpush1.msra.mxu0 0.0
  %3752 = vmatprep.subr.mxu0 0.0
  %3753 = vmatpush1.msra.mxu0 0.0
  %3754 = vmatprep.subr.mxu0 0.0
  %3755 = vmatpush1.msra.mxu0 0.0
  %3756 = vmatprep.subr.mxu0 0.0
  %3757 = vmatpush1.msra.mxu0 0.0
  %3758 = vmatprep.subr.mxu0 0.0
  %3759 = vmatpush1.msra.mxu0 0.0
  %3760 = vmatprep.subr.mxu0 0.0
  %3761 = vmatpush1.msra.mxu0 0.0
  %3762 = vmatprep.subr.mxu0 0.0
  %3763 = vmatpush1.msra.mxu0 0.0
  %3764 = vmatprep.subr.mxu0 0.0
  %3765 = vmatpush1.msra.mxu0 0.0
  %3766 = vmatprep.subr.mxu0 0.0
  %3767 = vmatpush1.msra.mxu0 0.0
  %3768 = vmatprep.subr.mxu0 0.0
  %3769 = vmatpush1.msra.mxu0 0.0
  %3770 = vmatprep.subr.mxu0 0.0
  %3771 = vmatpush1.msra.mxu0 0.0
  %3772 = vmatprep.mubr.f32.mxu0 0.0
  %3773 = vmatmul.mubr.f32.gmra.mrb[0].mxu0 %v3706
  %v3774 = vpop.f32.mrb[0].mxu0
  %v3775 = vadd.f32 %v3704, %v3774
  %v3776 = vpop.f32.mrb[0].mxu0
  %3777 = vdwg.mxu0
  %3779 = vrot.lane.b32.xlu0 %v3775, 120
  %v3780 = vpop.permute.xlu0 %3779
  %3781 = vrot.lane.b32.xlu0 %v3775, 112
  %v3782 = vpop.permute.xlu0 %3781
  %3783 = vrot.lane.b32.xlu0 %v3775, 104
  %v3784 = vpop.permute.xlu0 %3783
  %3785 = vrot.lane.b32.xlu0 %v3775, 96
  %v3786 = vpop.permute.xlu0 %3785
  %3787 = vrot.lane.b32.xlu0 %v3780, 96
  %v3788 = vpop.permute.xlu0 %3787
  %3789 = vrot.lane.b32.xlu0 %v3782, 96
  %v3790 = vpop.permute.xlu0 %3789
  %3791 = vrot.lane.b32.xlu0 %v3784, 96
  %v3792 = vpop.permute.xlu0 %3791
  %v3793 = vsel %vm665, %v3775, 0
  %v3795 = vsel %vm665, %v3780, 0
  %v3797 = vsel %vm665, %v3782, 0
  %v3799 = vsel %vm665, %v3784, 0
  %v3801 = vsel %vm665, %v3786, 0
  %v3803 = vsel %vm665, %v3788, 0
  %v3805 = vsel %vm665, %v3790, 0
  %v3807 = vsel %vm665, %v3792, 0
  %3809 = vmatprep.subr.mxu0 0.0
  %3810 = vmatpush1.xpose.msra.mxu0 %v3801
  %3811 = vmatprep.subr.mxu0 0.0
  %3812 = vmatpush1.xpose.msra.mxu0 %v3803
  %3813 = vmatprep.subr.mxu0 0.0
  %3814 = vmatpush1.xpose.msra.mxu0 %v3805
  %3815 = vmatprep.subr.mxu0 0.0
  %3816 = vmatpush1.xpose.msra.mxu0 %v3807
  %3817 = vmatprep.subr.mxu0 0.0
  %3818 = vmatpush1.xpose.msra.mxu0 0.0
  %3819 = vmatprep.subr.mxu0 0.0
  %3820 = vmatpush1.xpose.msra.mxu0 0.0
  %3821 = vmatprep.subr.mxu0 0.0
  %3822 = vmatpush1.xpose.msra.mxu0 0.0
  %3823 = vmatprep.subr.mxu0 0.0
  %3824 = vmatpush1.xpose.msra.mxu0 0.0
  %3825 = vmatprep.subr.mxu0 0.0
  %3826 = vmatpush1.xpose.msra.mxu0 0.0
  %3827 = vmatprep.subr.mxu0 0.0
  %3828 = vmatpush1.xpose.msra.mxu0 0.0
  %3829 = vmatprep.subr.mxu0 0.0
  %3830 = vmatpush1.xpose.msra.mxu0 0.0
  %3831 = vmatprep.subr.mxu0 0.0
  %3832 = vmatpush1.xpose.msra.mxu0 0.0
  %3833 = vmatprep.subr.mxu0 0.0
  %3834 = vmatpush1.xpose.msra.mxu0 0.0
  %3835 = vmatprep.subr.mxu0 0.0
  %3836 = vmatpush1.xpose.msra.mxu0 0.0
  %3837 = vmatprep.subr.mxu0 0.0
  %3838 = vmatpush1.xpose.msra.mxu0 0.0
  %3839 = vmatprep.subr.mxu0 0.0
  %3840 = vmatpush1.xpose.msra.mxu0 0.0
  %3841 = vmatprep.subr.mxu0 0.0
  %3842 = vmatpush1.xpose.msra.mxu0 0.0
  %3843 = vmatprep.subr.mxu0 0.0
  %3844 = vmatpush1.xpose.msra.mxu0 0.0
  %3845 = vmatprep.subr.mxu0 0.0
  %3846 = vmatpush1.xpose.msra.mxu0 0.0
  %3847 = vmatprep.subr.mxu0 0.0
  %3848 = vmatpush1.xpose.msra.mxu0 0.0
  %3849 = vmatprep.subr.mxu0 0.0
  %3850 = vmatpush1.xpose.msra.mxu0 0.0
  %3851 = vmatprep.subr.mxu0 0.0
  %3852 = vmatpush1.xpose.msra.mxu0 0.0
  %3853 = vmatprep.subr.mxu0 0.0
  %3854 = vmatpush1.xpose.msra.mxu0 0.0
  %3855 = vmatprep.subr.mxu0 0.0
  %3856 = vmatpush1.xpose.msra.mxu0 0.0
  %3857 = vmatprep.subr.mxu0 0.0
  %3858 = vmatpush1.xpose.msra.mxu0 0.0
  %3859 = vmatprep.subr.mxu0 0.0
  %3860 = vmatpush1.xpose.msra.mxu0 0.0
  %3861 = vmatprep.subr.mxu0 0.0
  %3862 = vmatpush1.xpose.msra.mxu0 0.0
  %3863 = vmatprep.subr.mxu0 0.0
  %3864 = vmatpush1.xpose.msra.mxu0 0.0
  %3865 = vmatprep.subr.mxu0 0.0
  %3866 = vmatpush1.xpose.msra.mxu0 0.0
  %3867 = vmatprep.subr.mxu0 0.0
  %3868 = vmatpush1.xpose.msra.mxu0 0.0
  %3869 = vmatprep.subr.mxu0 0.0
  %3870 = vmatpush1.xpose.msra.mxu0 0.0
  %3871 = vmatprep.subr.mxu0 0.0
  %3872 = vmatpush1.xpose.msra.mxu0 0.0
  %3873 = vmatprep.mubr.f32.mxu0 0.0
  %3874 = vmatmul.mubr.f32.gmra.mrb[0].mxu0 %v3793
  %v3875 = vpop.f32.mrb[0].mxu0
  %v3876 = vadd.f32 %v20, %v3875
  %v3877 = vpop.f32.mrb[0].mxu0
  %3878 = vmatprep.mubr.f32.mxu0 0.0
  %3879 = vmatmul.mubr.f32.gmra.mrb[0].mxu0 %v3795
  %v3880 = vpop.f32.mrb[0].mxu0
  %v3881 = vadd.f32 %v21, %v3880
  %v3882 = vpop.f32.mrb[0].mxu0
  %3883 = vmatprep.mubr.f32.mxu0 0.0
  %3884 = vmatmul.mubr.f32.gmra.mrb[0].mxu0 %v3797
  %v3885 = vpop.f32.mrb[0].mxu0
  %v3886 = vadd.f32 %v22, %v3885
  %v3887 = vpop.f32.mrb[0].mxu0
  %3888 = vmatprep.mubr.f32.mxu0 0.0
  %3889 = vmatmul.mubr.f32.gmra.mrb[0].mxu0 %v3799
  %v3890 = vpop.f32.mrb[0].mxu0
  %v3891 = vadd.f32 %v23, %v3890
  %v3892 = vpop.f32.mrb[0].mxu0
  %3893 = vdwg.mxu0
  %v3894 = vsel %vm1153, %v3876, -inf
  %3895 = vmax.xlane.f32.xlu0 %v3894
  %v3896 = vpop.xlane.xlu0 %3895
  %v3897 = vsel %vm1153, %v3881, -inf
  %3898 = vmax.xlane.f32.xlu0 %v3897
  %v3899 = vpop.xlane.xlu0 %3898
  %v3900 = vsel %vm1153, %v3886, -inf
  %3901 = vmax.xlane.f32.xlu0 %v3900
  %v3902 = vpop.xlane.xlu0 %3901
  %v3903 = vsel %vm1153, %v3891, -inf
  %3904 = vmax.xlane.f32.xlu0 %v3903
  %v3905 = vpop.xlane.xlu0 %3904
  %v3906 = vsub.f32 %v3876, %v3896
  %v3907 = vsub.f32 %v3881, %v3899
  %v3908 = vsub.f32 %v3886, %v3902
  %v3909 = vsub.f32 %v3891, %v3905
  %v3910 = vmul.f32 %v3906, 1.442695
  %v3911 = vpow.pop %v3910
  %v3912 = vmul.f32 %v3907, 1.442695
  %v3913 = vpow.pop %v3912
  %v3914 = vmul.f32 %v3908, 1.442695
  %v3915 = vpow.pop %v3914
  %v3916 = vmul.f32 %v3909, 1.442695
  %v3917 = vpow.pop %v3916
  %v3918 = vsel %vm1153, %v3911, 0.0
  %3919 = vadd.xlane.f32.xlu0 %v3918
  %v3920 = vpop.xlane.xlu0 %3919
  %v3921 = vsel %vm1153, %v3913, 0.0
  %3922 = vadd.xlane.f32.xlu0 %v3921
  %v3923 = vpop.xlane.xlu0 %3922
  %v3924 = vsel %vm1153, %v3915, 0.0
  %3925 = vadd.xlane.f32.xlu0 %v3924
  %v3926 = vpop.xlane.xlu0 %3925
  %v3927 = vsel %vm1153, %v3917, 0.0
  %3928 = vadd.xlane.f32.xlu0 %v3927
  %v3929 = vpop.xlane.xlu0 %3928
  %v3930 = vrcp.pop %v3920
  %v3931 = vrcp.pop %v3923
  %v3932 = vrcp.pop %v3926
  %v3933 = vrcp.pop %v3929
  %v3934 = vmul.f32 %v3911, %v3930
  %v3935 = vmul.f32 %v3913, %v3931
  %v3936 = vmul.f32 %v3915, %v3932
  %v3937 = vmul.f32 %v3917, %v3933
  %3938 = vrot.lane.b32.xlu0 %v3775, 64
  %v3939 = vpop.permute.xlu0 %3938
  %3940 = vrot.lane.b32.xlu0 %v3780, 64
  %v3941 = vpop.permute.xlu0 %3940
  %3942 = vrot.lane.b32.xlu0 %v3782, 64
  %v3943 = vpop.permute.xlu0 %3942
  %3944 = vrot.lane.b32.xlu0 %v3784, 64
  %v3945 = vpop.permute.xlu0 %3944
  %v3951 = vsel %vm1153, %v3934, 0
  %v3954 = vsel %vm1153, %v3935, 0
  %v3957 = vsel %vm1153, %v3936, 0
  %v3960 = vsel %vm1153, %v3937, 0
  %3962 = vmatprep.subr.mxu0 0.0
  %3963 = vmatpush1.msra.mxu0 %v3939
  %3964 = vmatprep.subr.mxu0 0.0
  %3965 = vmatpush1.msra.mxu0 %v3941
  %3966 = vmatprep.subr.mxu0 0.0
  %3967 = vmatpush1.msra.mxu0 %v3943
  %3968 = vmatprep.subr.mxu0 0.0
  %3969 = vmatpush1.msra.mxu0 %v3945
  %3970 = vmatprep.subr.mxu0 0.0
  %3971 = vmatpush1.msra.mxu0 0.0
  %3972 = vmatprep.subr.mxu0 0.0
  %3973 = vmatpush1.msra.mxu0 0.0
  %3974 = vmatprep.subr.mxu0 0.0
  %3975 = vmatpush1.msra.mxu0 0.0
  %3976 = vmatprep.subr.mxu0 0.0
  %3977 = vmatpush1.msra.mxu0 0.0
  %3978 = vmatprep.subr.mxu0 0.0
  %3979 = vmatpush1.msra.mxu0 0.0
  %3980 = vmatprep.subr.mxu0 0.0
  %3981 = vmatpush1.msra.mxu0 0.0
  %3982 = vmatprep.subr.mxu0 0.0
  %3983 = vmatpush1.msra.mxu0 0.0
  %3984 = vmatprep.subr.mxu0 0.0
  %3985 = vmatpush1.msra.mxu0 0.0
  %3986 = vmatprep.subr.mxu0 0.0
  %3987 = vmatpush1.msra.mxu0 0.0
  %3988 = vmatprep.subr.mxu0 0.0
  %3989 = vmatpush1.msra.mxu0 0.0
  %3990 = vmatprep.subr.mxu0 0.0
  %3991 = vmatpush1.msra.mxu0 0.0
  %3992 = vmatprep.subr.mxu0 0.0
  %3993 = vmatpush1.msra.mxu0 0.0
  %3994 = vmatprep.subr.mxu0 0.0
  %3995 = vmatpush1.msra.mxu0 0.0
  %3996 = vmatprep.subr.mxu0 0.0
  %3997 = vmatpush1.msra.mxu0 0.0
  %3998 = vmatprep.subr.mxu0 0.0
  %3999 = vmatpush1.msra.mxu0 0.0
  %4000 = vmatprep.subr.mxu0 0.0
  %4001 = vmatpush1.msra.mxu0 0.0
  %4002 = vmatprep.subr.mxu0 0.0
  %4003 = vmatpush1.msra.mxu0 0.0
  %4004 = vmatprep.subr.mxu0 0.0
  %4005 = vmatpush1.msra.mxu0 0.0
  %4006 = vmatprep.subr.mxu0 0.0
  %4007 = vmatpush1.msra.mxu0 0.0
  %4008 = vmatprep.subr.mxu0 0.0
  %4009 = vmatpush1.msra.mxu0 0.0
  %4010 = vmatprep.subr.mxu0 0.0
  %4011 = vmatpush1.msra.mxu0 0.0
  %4012 = vmatprep.subr.mxu0 0.0
  %4013 = vmatpush1.msra.mxu0 0.0
  %4014 = vmatprep.subr.mxu0 0.0
  %4015 = vmatpush1.msra.mxu0 0.0
  %4016 = vmatprep.subr.mxu0 0.0
  %4017 = vmatpush1.msra.mxu0 0.0
  %4018 = vmatprep.subr.mxu0 0.0
  %4019 = vmatpush1.msra.mxu0 0.0
  %4020 = vmatprep.subr.mxu0 0.0
  %4021 = vmatpush1.msra.mxu0 0.0
  %4022 = vmatprep.subr.mxu0 0.0
  %4023 = vmatpush1.msra.mxu0 0.0
  %4024 = vmatprep.subr.mxu0 0.0
  %4025 = vmatpush1.msra.mxu0 0.0
  %4026 = vmatprep.mubr.f32.mxu0 0.0
  %4027 = vmatmul.mubr.f32.gmra.mrb[0].mxu0 %v3951
  %v4028 = vpop.f32.mrb[0].mxu0
  %v4029 = vadd.f32 0.0, %v4028
  %v4030 = vpop.f32.mrb[0].mxu0
  %4031 = vmatprep.mubr.f32.mxu0 0.0
  %4032 = vmatmul.mubr.f32.gmra.mrb[0].mxu0 %v3954
  %v4033 = vpop.f32.mrb[0].mxu0
  %v4034 = vadd.f32 0.0, %v4033
  %v4035 = vpop.f32.mrb[0].mxu0
  %4036 = vmatprep.mubr.f32.mxu0 0.0
  %4037 = vmatmul.mubr.f32.gmra.mrb[0].mxu0 %v3957
  %v4038 = vpop.f32.mrb[0].mxu0
  %v4039 = vadd.f32 0.0, %v4038
  %v4040 = vpop.f32.mrb[0].mxu0
  %4041 = vmatprep.mubr.f32.mxu0 0.0
  %4042 = vmatmul.mubr.f32.gmra.mrb[0].mxu0 %v3960
  %v4043 = vpop.f32.mrb[0].mxu0
  %v4044 = vadd.f32 0.0, %v4043
  %v4045 = vpop.f32.mrb[0].mxu0
  %4046 = vdwg.mxu0
  %4048 = vrot.lane.b32.xlu0 %v4034, 8
  %v4049 = vpop.permute.xlu0 %4048
  %4052 = vrot.lane.b32.xlu0 %v4039, 16
  %v4053 = vpop.permute.xlu0 %4052
  %4056 = vrot.lane.b32.xlu0 %v4044, 24
  %v4057 = vpop.permute.xlu0 %4056
  %v4059 = vsel %vm665, %v4029, %v4049
  %v4060 = vsel %vm682, %v4059, %v4053
  %v4061 = vsel %vm703, %v4060, %v4057
  %v4063 = vsel %vm1153, %v4061, 0
  %4065 = vmatprep.subr.mxu0 0.0
  %4066 = vmatpush1.msra.mxu0 %v3661
  %4067 = vmatprep.subr.mxu0 0.0
  %4068 = vmatpush1.msra.mxu0 %v3662
  %4069 = vmatprep.subr.mxu0 0.0
  %4070 = vmatpush1.msra.mxu0 %v3663
  %4071 = vmatprep.subr.mxu0 0.0
  %4072 = vmatpush1.msra.mxu0 %v3664
  %4073 = vmatprep.subr.mxu0 0.0
  %4074 = vmatpush1.msra.mxu0 0.0
  %4075 = vmatprep.subr.mxu0 0.0
  %4076 = vmatpush1.msra.mxu0 0.0
  %4077 = vmatprep.subr.mxu0 0.0
  %4078 = vmatpush1.msra.mxu0 0.0
  %4079 = vmatprep.subr.mxu0 0.0
  %4080 = vmatpush1.msra.mxu0 0.0
  %4081 = vmatprep.subr.mxu0 0.0
  %4082 = vmatpush1.msra.mxu0 0.0
  %4083 = vmatprep.subr.mxu0 0.0
  %4084 = vmatpush1.msra.mxu0 0.0
  %4085 = vmatprep.subr.mxu0 0.0
  %4086 = vmatpush1.msra.mxu0 0.0
  %4087 = vmatprep.subr.mxu0 0.0
  %4088 = vmatpush1.msra.mxu0 0.0
  %4089 = vmatprep.subr.mxu0 0.0
  %4090 = vmatpush1.msra.mxu0 0.0
  %4091 = vmatprep.subr.mxu0 0.0
  %4092 = vmatpush1.msra.mxu0 0.0
  %4093 = vmatprep.subr.mxu0 0.0
  %4094 = vmatpush1.msra.mxu0 0.0
  %4095 = vmatprep.subr.mxu0 0.0
  %4096 = vmatpush1.msra.mxu0 0.0
  %4097 = vmatprep.subr.mxu0 0.0
  %4098 = vmatpush1.msra.mxu0 0.0
  %4099 = vmatprep.subr.mxu0 0.0
  %4100 = vmatpush1.msra.mxu0 0.0
  %4101 = vmatprep.subr.mxu0 0.0
  %4102 = vmatpush1.msra.mxu0 0.0
  %4103 = vmatprep.subr.mxu0 0.0
  %4104 = vmatpush1.msra.mxu0 0.0
  %4105 = vmatprep.subr.mxu0 0.0
  %4106 = vmatpush1.msra.mxu0 0.0
  %4107 = vmatprep.subr.mxu0 0.0
  %4108 = vmatpush1.msra.mxu0 0.0
  %4109 = vmatprep.subr.mxu0 0.0
  %4110 = vmatpush1.msra.mxu0 0.0
  %4111 = vmatprep.subr.mxu0 0.0
  %4112 = vmatpush1.msra.mxu0 0.0
  %4113 = vmatprep.subr.mxu0 0.0
  %4114 = vmatpush1.msra.mxu0 0.0
  %4115 = vmatprep.subr.mxu0 0.0
  %4116 = vmatpush1.msra.mxu0 0.0
  %4117 = vmatprep.subr.mxu0 0.0
  %4118 = vmatpush1.msra.mxu0 0.0
  %4119 = vmatprep.subr.mxu0 0.0
  %4120 = vmatpush1.msra.mxu0 0.0
  %4121 = vmatprep.subr.mxu0 0.0
  %4122 = vmatpush1.msra.mxu0 0.0
  %4123 = vmatprep.subr.mxu0 0.0
  %4124 = vmatpush1.msra.mxu0 0.0
  %4125 = vmatprep.subr.mxu0 0.0
  %4126 = vmatpush1.msra.mxu0 0.0
  %4127 = vmatprep.subr.mxu0 0.0
  %4128 = vmatpush1.msra.mxu0 0.0
  %4129 = vmatprep.mubr.f32.mxu0 0.0
  %4130 = vmatmul.mubr.f32.gmra.mrb[0].mxu0 %v4063
  %v4131 = vpop.f32.mrb[0].mxu0
  %v4132 = vadd.f32 0.0, %v4131
  %v4133 = vpop.f32.mrb[0].mxu0
  %4134 = vdwg.mxu0
  %v4135 = vadd.f32 %v3656, %v4132
  %v4136 = vlaneseq
  %v4137 = vshrl.u32 %v4136, 7
  %v4138 = vsub.s32 1, %v4137
  %v4139 = vrot.slane %v3677, %v4138
  %v4140 = vadd.f32 %v4135, %v4139
  %v4141 = vsel %vm1153, %v4140, 0.0
  %4142 = vadd.xlane.f32.xlu0 %v4141
  %v4143 = vpop.xlane.xlu0 %4142
  %v4144 = vmul.f32 %v4143, %v3015
  %v4145 = vsub.f32 %v4140, %v4144
  %v4146 = vmul.f32 %v4145, %v4145
  %v4147 = vsel %vm1153, %v4146, 0.0
  %4148 = vadd.xlane.f32.xlu0 %v4147
  %v4149 = vpop.xlane.xlu0 %4148
  %v4150 = vmul.f32 %v4149, %v3015
  %v4151 = vadd.f32 %v4150, 1e-05
  %v4152 = vrsqrt.pop %v4151
  %v4153 = vmul.f32 %v4145, %v4152
  %v4154 = vlaneseq
  %v4155 = vshrl.u32 %v4154, 7
  %v4156 = vsub.s32 6, %v4155
  %v4157 = vrot.slane %v3677, %v4156
  %v4158 = vmul.f32 %v4153, %v4157
  %v4159 = vlaneseq
  %v4160 = vshrl.u32 %v4159, 7
  %v4161 = vsub.s32 7, %v4160
  %v4162 = vrot.slane %v3677, %v4161
  %v4163 = vadd.f32 %v4158, %v4162
  %v4164 = vlaneseq
  %v4165 = vshrl.u32 %v4164, 7
  %v4166 = vsub.s32 2, %v4165
  %v4167 = vrot.slane %v3677, %v4166
  %v4169 = vsel %vm1153, %v4163, 0
  %4171 = vmatprep.subr.mxu0 0.0
  %4172 = vmatpush1.msra.mxu0 %v3665
  %4173 = vmatprep.subr.mxu0 0.0
  %4174 = vmatpush1.msra.mxu0 %v3666
  %4175 = vmatprep.subr.mxu0 0.0
  %4176 = vmatpush1.msra.mxu0 %v3667
  %4177 = vmatprep.subr.mxu0 0.0
  %4178 = vmatpush1.msra.mxu0 %v3668
  %4179 = vmatprep.subr.mxu0 0.0
  %4180 = vmatpush1.msra.mxu0 0.0
  %4181 = vmatprep.subr.mxu0 0.0
  %4182 = vmatpush1.msra.mxu0 0.0
  %4183 = vmatprep.subr.mxu0 0.0
  %4184 = vmatpush1.msra.mxu0 0.0
  %4185 = vmatprep.subr.mxu0 0.0
  %4186 = vmatpush1.msra.mxu0 0.0
  %4187 = vmatprep.subr.mxu0 0.0
  %4188 = vmatpush1.msra.mxu0 0.0
  %4189 = vmatprep.subr.mxu0 0.0
  %4190 = vmatpush1.msra.mxu0 0.0
  %4191 = vmatprep.subr.mxu0 0.0
  %4192 = vmatpush1.msra.mxu0 0.0
  %4193 = vmatprep.subr.mxu0 0.0
  %4194 = vmatpush1.msra.mxu0 0.0
  %4195 = vmatprep.subr.mxu0 0.0
  %4196 = vmatpush1.msra.mxu0 0.0
  %4197 = vmatprep.subr.mxu0 0.0
  %4198 = vmatpush1.msra.mxu0 0.0
  %4199 = vmatprep.subr.mxu0 0.0
  %4200 = vmatpush1.msra.mxu0 0.0
  %4201 = vmatprep.subr.mxu0 0.0
  %4202 = vmatpush1.msra.mxu0 0.0
  %4203 = vmatprep.subr.mxu0 0.0
  %4204 = vmatpush1.msra.mxu0 0.0
  %4205 = vmatprep.subr.mxu0 0.0
  %4206 = vmatpush1.msra.mxu0 0.0
  %4207 = vmatprep.subr.mxu0 0.0
  %4208 = vmatpush1.msra.mxu0 0.0
  %4209 = vmatprep.subr.mxu0 0.0
  %4210 = vmatpush1.msra.mxu0 0.0
  %4211 = vmatprep.subr.mxu0 0.0
  %4212 = vmatpush1.msra.mxu0 0.0
  %4213 = vmatprep.subr.mxu0 0.0
  %4214 = vmatpush1.msra.mxu0 0.0
  %4215 = vmatprep.subr.mxu0 0.0
  %4216 = vmatpush1.msra.mxu0 0.0
  %4217 = vmatprep.subr.mxu0 0.0
  %4218 = vmatpush1.msra.mxu0 0.0
  %4219 = vmatprep.subr.mxu0 0.0
  %4220 = vmatpush1.msra.mxu0 0.0
  %4221 = vmatprep.subr.mxu0 0.0
  %4222 = vmatpush1.msra.mxu0 0.0
  %4223 = vmatprep.subr.mxu0 0.0
  %4224 = vmatpush1.msra.mxu0 0.0
  %4225 = vmatprep.subr.mxu0 0.0
  %4226 = vmatpush1.msra.mxu0 0.0
  %4227 = vmatprep.subr.mxu0 0.0
  %4228 = vmatpush1.msra.mxu0 0.0
  %4229 = vmatprep.subr.mxu0 0.0
  %4230 = vmatpush1.msra.mxu0 0.0
  %4231 = vmatprep.subr.mxu0 0.0
  %4232 = vmatpush1.msra.mxu0 0.0
  %4233 = vmatprep.subr.mxu0 0.0
  %4234 = vmatpush1.msra.mxu0 0.0
  %4235 = vmatprep.mubr.f32.mxu0 0.0
  %4236 = vmatmul.mubr.f32.gmra.mrb[0].mxu0 %v4169
  %v4237 = vpop.f32.mrb[0].mxu0
  %v4238 = vadd.f32 %v4167, %v4237
  %v4239 = vpop.f32.mrb[0].mxu0
  %4240 = vdwg.mxu0
  %v4241 = vmax.f32 %v4238, 0.0
  %v4243 = vsel %vm3577, %v4241, 0
  %4245 = vmatprep.subr.mxu0 0.0
  %4246 = vmatpush1.msra.mxu0 %v3669
  %4247 = vmatprep.subr.mxu0 0.0
  %4248 = vmatpush1.msra.mxu0 %v3670
  %4249 = vmatprep.subr.mxu0 0.0
  %4250 = vmatpush1.msra.mxu0 %v3671
  %4251 = vmatprep.subr.mxu0 0.0
  %4252 = vmatpush1.msra.mxu0 %v3672
  %4253 = vmatprep.subr.mxu0 0.0
  %4254 = vmatpush1.msra.mxu0 %v3673
  %4255 = vmatprep.subr.mxu0 0.0
  %4256 = vmatpush1.msra.mxu0 %v3674
  %4257 = vmatprep.subr.mxu0 0.0
  %4258 = vmatpush1.msra.mxu0 %v3675
  %4259 = vmatprep.subr.mxu0 0.0
  %4260 = vmatpush1.msra.mxu0 %v3676
  %4261 = vmatprep.subr.mxu0 0.0
  %4262 = vmatpush1.msra.mxu0 0.0
  %4263 = vmatprep.subr.mxu0 0.0
  %4264 = vmatpush1.msra.mxu0 0.0
  %4265 = vmatprep.subr.mxu0 0.0
  %4266 = vmatpush1.msra.mxu0 0.0
  %4267 = vmatprep.subr.mxu0 0.0
  %4268 = vmatpush1.msra.mxu0 0.0
  %4269 = vmatprep.subr.mxu0 0.0
  %4270 = vmatpush1.msra.mxu0 0.0
  %4271 = vmatprep.subr.mxu0 0.0
  %4272 = vmatpush1.msra.mxu0 0.0
  %4273 = vmatprep.subr.mxu0 0.0
  %4274 = vmatpush1.msra.mxu0 0.0
  %4275 = vmatprep.subr.mxu0 0.0
  %4276 = vmatpush1.msra.mxu0 0.0
  %4277 = vmatprep.subr.mxu0 0.0
  %4278 = vmatpush1.msra.mxu0 0.0
  %4279 = vmatprep.subr.mxu0 0.0
  %4280 = vmatpush1.msra.mxu0 0.0
  %4281 = vmatprep.subr.mxu0 0.0
  %4282 = vmatpush1.msra.mxu0 0.0
  %4283 = vmatprep.subr.mxu0 0.0
  %4284 = vmatpush1.msra.mxu0 0.0
  %4285 = vmatprep.subr.mxu0 0.0
  %4286 = vmatpush1.msra.mxu0 0.0
  %4287 = vmatprep.subr.mxu0 0.0
  %4288 = vmatpush1.msra.mxu0 0.0
  %4289 = vmatprep.subr.mxu0 0.0
  %4290 = vmatpush1.msra.mxu0 0.0
  %4291 = vmatprep.subr.mxu0 0.0
  %4292 = vmatpush1.msra.mxu0 0.0
  %4293 = vmatprep.subr.mxu0 0.0
  %4294 = vmatpush1.msra.mxu0 0.0
  %4295 = vmatprep.subr.mxu0 0.0
  %4296 = vmatpush1.msra.mxu0 0.0
  %4297 = vmatprep.subr.mxu0 0.0
  %4298 = vmatpush1.msra.mxu0 0.0
  %4299 = vmatprep.subr.mxu0 0.0
  %4300 = vmatpush1.msra.mxu0 0.0
  %4301 = vmatprep.subr.mxu0 0.0
  %4302 = vmatpush1.msra.mxu0 0.0
  %4303 = vmatprep.subr.mxu0 0.0
  %4304 = vmatpush1.msra.mxu0 0.0
  %4305 = vmatprep.subr.mxu0 0.0
  %4306 = vmatpush1.msra.mxu0 0.0
  %4307 = vmatprep.subr.mxu0 0.0
  %4308 = vmatpush1.msra.mxu0 0.0
  %4309 = vmatprep.mubr.f32.mxu0 0.0
  %4310 = vmatmul.mubr.f32.gmra.mrb[0].mxu0 %v4243
  %v4311 = vpop.f32.mrb[0].mxu0
  %v4312 = vadd.f32 0.0, %v4311
  %v4313 = vpop.f32.mrb[0].mxu0
  %4314 = vdwg.mxu0
  %v4315 = vadd.f32 %v4140, %v4312
  %v4316 = vlaneseq
  %v4317 = vshrl.u32 %v4316, 7
  %v4318 = vsub.s32 3, %v4317
  %v4319 = vrot.slane %v3677, %v4318
  %v4320 = vadd.f32 %v4315, %v4319
  %v4321 = vld [vmem:[%s4 + $0x168] sm:$0xff]
  %v4322 = vsel %vm1153, %v4320, 0.0
  %4323 = vadd.xlane.f32.xlu0 %v4322
  %v4324 = vpop.xlane.xlu0 %4323
  %v4325 = vmul.f32 %v4324, %v3015
  %v4326 = vsub.f32 %v4320, %v4325
  %v4327 = vmul.f32 %v4326, %v4326
  %v4328 = vsel %vm1153, %v4327, 0.0
  %4329 = vadd.xlane.f32.xlu0 %v4328
  %v4330 = vpop.xlane.xlu0 %4329
  %v4331 = vmul.f32 %v4330, %v3015
  %v4332 = vadd.f32 %v4331, 1e-05
  %v4333 = vrsqrt.pop %v4332
  %v4334 = vmul.f32 %v4326, %v4333
  %v4335 = vlaneseq
  %v4336 = vshrl.u32 %v4335, 7
  %v4337 = vsub.s32 0, %v4336
  %v4338 = vrot.slane %v4321, %v4337
  %v4339 = vmul.f32 %v4334, %v4338
  %v4340 = vlaneseq
  %v4341 = vshrl.u32 %v4340, 7
  %v4342 = vsub.s32 1, %v4341
  %v4343 = vrot.slane %v4321, %v4342
  %v4344 = vadd.f32 %v4339, %v4343
  %v4345 = vmul.f32 %v4344, %v2911
  %v4346 = vlaneseq
  %v4347 = vshrl.u32 %v4346, 7
  %v4348 = vsub.s32 3, %v4347
  %v4349 = vrot.slane %v4321, %v4348
  %v4350 = vmul.f32 %v2914, %v4349
  %v4351 = vsel %vm682, %v4350, 0.0
  %4352 = vadd.xlane.f32.xlu0 %v4351
  %v4353 = vpop.xlane.xlu0 %4352
  %v4354 = vlaneseq
  %v4355 = vshrl.u32 %v4354, 7
  %v4356 = vsub.s32 2, %v4355
  %v4357 = vrot.slane %v4321, %v4356
  %v4358 = vmul.f32 %v4345, %v4357
  %v4359 = vsel %vm1153, %v4358, 0.0
  %4360 = vadd.xlane.f32.xlu0 %v4359
  %v4361 = vpop.xlane.xlu0 %4360
  %v4362 = vadd.f32 %v4353, %v4361
  %v4363 = vlaneseq
  %v4364 = vshrl.u32 %v4363, 7
  %v4365 = vsub.s32 4, %v4364
  %v4366 = vrot.slane %v4321, %v4365
  %v4367 = vadd.f32 %v4362, %v4366
  %4369 = vrot.lane.b32.xlu0 %v4367, 1
  %v4370 = vpop.permute.xlu0 %4369
  %v4372 = vadd.f32 %v24, %v4370
  %4373 = vrot.lane.b32.xlu0 %v24, 1
  %v4374 = vpop.permute.xlu0 %4373
  %v4376 = vmul.f32 %v4372, %v4374
  %4378 = vset.pattern.permute.xlu0 1
  %4379 = vperm.xlu0 %4378, %v4376
  %v4380 = vpop.permute.xlu0 %4379
  %4382 = vst [vmem:[%s5] sm:$0xff] %v4380
  // Predicated region
  $region22: #{forward.1} parent=0 // pred_check
    _
  $region23: #{forward.1} parent=0 // pred_check_branch
    %4384 = sbr.rel (0) target = $region25
  $region24: #{forward.1} parent=0 // pred_region
    _
  $region25: #{forward.1} parent=0 // pred_fallthru
    _
  // Predicated region
  $region26: #{forward.1} parent=0 // pred_check
    _
  $region27: #{forward.1} parent=0 // pred_check_branch
    %4386 = sbr.rel (0) target = $region29
  $region28: #{forward.1} parent=0 // pred_region
    _
  $region29: #{forward.1} parent=0 // pred_fallthru
    _

</llo_original>
